<compile_context>
chip_gen: v5e
topology: v5e:2x2
jax: 0.10.0
libtpu: 0.0.40
codegen_flags: <defaults>
</compile_context>

<pallas_src>
import jax
import jax.numpy as jnp
from jax.experimental import pallas as pl
from jax.experimental.pallas import tpu as pltpu


def _alexnet_attn_kernel(x_ref, w1_ref, b1_ref, w2_ref, b2_ref,
                         wa1_ref, ba1_ref, wa2_ref, ba2_ref,
                         wt_ref, bt_ref,
                         logits_ref, a_ref, araw_ref,
                         acc_ref):
    k = pl.program_id(0)

    @pl.when(k == 0)
    def _init():
        acc_ref[...] = jnp.zeros_like(acc_ref)

    # classifier: Dropout(eval no-op) -> Linear(F,1024) -> ReLU
    #             -> Dropout(eval no-op) -> Linear(1024,1024) -> ReLU
    # Step k computes a column block of h1 and immediately accumulates its
    # contribution (row block of w2) into the h2 accumulator, so both big weight
    # matrices are streamed block-by-block and overlapped with compute.
    x_bf = x_ref[...].astype(jnp.bfloat16)                          # (N, F)
    h1_blk = jnp.dot(x_bf, w1_ref[...],
                     preferred_element_type=jnp.float32) + b1_ref[...]
    h1_blk = jnp.maximum(h1_blk, 0.0)                               # (N, BH) f32
    acc_ref[...] += jnp.dot(h1_blk.astype(jnp.bfloat16), w2_ref[...],
                            preferred_element_type=jnp.float32)     # (N, 1024)

    @pl.when(k == pl.num_programs(0) - 1)
    def _finalize():
        h2 = jnp.maximum(acc_ref[...] + b2_ref[...], 0.0)           # (N, 1024) f32

        # attention: Linear(L=1024, D=512) -> Tanh -> Linear(D=512, K=1)
        t = jnp.tanh(jnp.dot(h2.astype(jnp.bfloat16), wa1_ref[...],
                             preferred_element_type=jnp.float32)
                     + ba1_ref[...])                                # (N, 512) f32

        # scores as a lane-dense row: (K=1, D) x (N, D) -> (K=1, N)
        scores = jnp.einsum('kd,nd->kn', wa2_ref[...], t,
                            preferred_element_type=jnp.float32) + ba2_ref[...]

        # PyTorch: A_ = transpose(scores) -> (1, N); A = softmax(A_, dim=1),
        # i.e. softmax over the instance axis (lane axis here).
        m = jnp.max(scores, axis=1, keepdims=True)
        e = jnp.exp(scores - m)
        a = e / jnp.sum(e, axis=1, keepdims=True)                   # (1, N)

        # attention pooling over the classifier output h2 (NOT the raw input x):
        # A (1, N) @ h2 (N, 1024) -> (1, 1024), on the MXU.
        pooled = jnp.dot(a, h2, preferred_element_type=jnp.float32)

        # top_layer: Linear(1024, num_classes)
        logits_ref[...] = (jnp.dot(pooled, wt_ref[...],
                                   preferred_element_type=jnp.float32)
                           + bt_ref[...])
        a_ref[...] = a
        araw_ref[...] = scores


def alexnet_cifar10_attention_forward(x, params, num_classes=10, block_h=256):
    """Forward pass. x: (N, C, H, W) or (N, F). Returns (logits, 0, A, A_)."""
    n = x.shape[0]
    hidden = params["w1"].shape[0]          # 1024
    feat_dim = params["w1"].shape[1]
    d_attn = params["wa1"].shape[0]         # 512
    x2d = x.reshape(n, feat_dim).astype(jnp.float32)

    if hidden % block_h != 0:
        block_h = hidden
    n_blk = hidden // block_h

    # Large weights streamed as bf16 (halves HBM traffic); everything else f32.
    w1_t = params["w1"].T.astype(jnp.bfloat16)           # (F, 1024)
    w2_t = params["w2"].T.astype(jnp.bfloat16)           # (1024, 1024)
    wa1_t = params["wa1"].T.astype(jnp.bfloat16)         # (1024, 512)
    wa2_row = params["wa2"].astype(jnp.float32)          # (1, 512) PyTorch layout
    wt_t = params["wt"].T.astype(jnp.float32)            # (1024, C)

    in_arrs = (
        x2d,
        w1_t, params["b1"].reshape(1, -1).astype(jnp.float32),
        w2_t, params["b2"].reshape(1, -1).astype(jnp.float32),
        wa1_t, params["ba1"].reshape(1, -1).astype(jnp.float32),
        wa2_row, params["ba2"].reshape(1, -1).astype(jnp.float32),
        wt_t, params["bt"].reshape(1, -1).astype(jnp.float32),
    )

    in_specs = [
        pl.BlockSpec((n, feat_dim), lambda k: (0, 0)),             # x (resident)
        pl.BlockSpec((feat_dim, block_h), lambda k: (0, k)),       # w1 column block
        pl.BlockSpec((1, block_h), lambda k: (0, k)),              # b1 block
        pl.BlockSpec((block_h, hidden), lambda k: (k, 0)),         # w2 row block
        pl.BlockSpec((1, hidden), lambda k: (0, 0)),               # b2
        pl.BlockSpec((hidden, d_attn), lambda k: (0, 0)),          # wa1 (resident)
        pl.BlockSpec((1, d_attn), lambda k: (0, 0)),               # ba1
        pl.BlockSpec((1, d_attn), lambda k: (0, 0)),               # wa2 (row)
        pl.BlockSpec((1, 1), lambda k: (0, 0)),                    # ba2
        pl.BlockSpec((hidden, num_classes), lambda k: (0, 0)),     # wt
        pl.BlockSpec((1, num_classes), lambda k: (0, 0)),          # bt
    ]
    out_specs = (
        pl.BlockSpec((1, num_classes), lambda k: (0, 0)),          # logits
        pl.BlockSpec((1, n), lambda k: (0, 0)),                    # A
        pl.BlockSpec((1, n), lambda k: (0, 0)),                    # A_
    )
    out_shape = (
        jax.ShapeDtypeStruct((1, num_classes), jnp.float32),
        jax.ShapeDtypeStruct((1, n), jnp.float32),
        jax.ShapeDtypeStruct((1, n), jnp.float32),
    )

    logits, a_row, araw_row = pl.pallas_call(
        _alexnet_attn_kernel,
        out_shape=out_shape,
        grid_spec=pltpu.PrefetchScalarGridSpec(
            num_scalar_prefetch=0,
            grid=(n_blk,),
            in_specs=in_specs,
            out_specs=out_specs,
            scratch_shapes=[pltpu.VMEM((n, hidden), jnp.float32)],  # h2 accumulator
        ),
        compiler_params=pltpu.CompilerParams(
            dimension_semantics=("arbitrary",),     # grid axis is a reduction
            vmem_limit_bytes=24 * 1024 * 1024,      # safe on v7x's 64 MiB VMEM
        ),
    )(*in_arrs)

    # Already lane-dense (1, N); no host-side transposes needed.
    return logits, 0, a_row, araw_row


def init_params(key, feat_dim, num_classes=10, hidden=1024, d_attn=512):
    """Deterministic init matching _initialize_weights: W ~ N(0, 0.01), b = 0."""
    ks = jax.random.split(key, 5)
    std = 0.01
    return {
        "w1": std * jax.random.normal(ks[0], (hidden, feat_dim), jnp.float32),
        "b1": jnp.zeros((hidden,), jnp.float32),
        "w2": std * jax.random.normal(ks[1], (hidden, hidden), jnp.float32),
        "b2": jnp.zeros((hidden,), jnp.float32),
        "wa1": std * jax.random.normal(ks[2], (d_attn, hidden), jnp.float32),
        "ba1": jnp.zeros((d_attn,), jnp.float32),
        "wa2": std * jax.random.normal(ks[3], (1, d_attn), jnp.float32),
        "ba2": jnp.zeros((1,), jnp.float32),
        "wt": std * jax.random.normal(ks[4], (num_classes, hidden), jnp.float32),
        "bt": jnp.zeros((num_classes,), jnp.float32),
    }


def _reference_forward(x, p):
    """Pure-JAX f32 reference mirroring the PyTorch module (eval mode)."""
    n = x.shape[0]
    xf = x.reshape(n, -1).astype(jnp.float32)
    h = jnp.maximum(xf @ p["w1"].T + p["b1"], 0.0)
    h = jnp.maximum(h @ p["w2"].T + p["b2"], 0.0)
    a_ = (jnp.tanh(h @ p["wa1"].T + p["ba1"]) @ p["wa2"].T + p["ba2"]).T  # (1, N)
    a = jax.nn.softmax(a_, axis=1)
    pooled = a @ h
    logits = pooled @ p["wt"].T + p["bt"]
    return logits, a, a_


if __name__ == "__main__":
    key = jax.random.PRNGKey(0)
    k_x, k_p = jax.random.split(key)

    N, C, H, W = 8, 4, 16, 16                 # bag of 8 instances, feat_dim = 1024
    feat_dim = C * H * W
    num_classes = 10

    x = jax.random.normal(k_x, (N, C, H, W), jnp.float32)
    params = init_params(k_p, feat_dim, num_classes=num_classes)

    logits, zero, A, A_raw = alexnet_cifar10_attention_forward(x, params, num_classes)
    jax.block_until_ready((logits, A, A_raw))

    ref_logits, ref_A, ref_Araw = _reference_forward(x, params)
    assert logits.shape == (1, num_classes) and A.shape == (1, N) and A_raw.shape == (1, N)
    # bf16 weight streaming -> slightly looser tolerance than pure-f32.
    assert jnp.allclose(logits, ref_logits, atol=5e-3, rtol=5e-3)
    assert jnp.allclose(A, ref_A, atol=5e-3, rtol=5e-3)
    assert jnp.allclose(A_raw, ref_Araw, atol=5e-3, rtol=5e-3)

    print("KERNEL_OK")
</pallas_src>

<mosaic_0001>
module attributes {stable_mosaic.version = 11 : i64} {
  func.func @_alexnet_attn_kernel(%arg0: i32, %arg1: memref<8x1024xf32, #tpu.memory_space<vmem>>, %arg2: memref<1024x256xbf16, #tpu.memory_space<vmem>>, %arg3: memref<1x256xf32, #tpu.memory_space<vmem>>, %arg4: memref<256x1024xbf16, #tpu.memory_space<vmem>>, %arg5: memref<1x1024xf32, #tpu.memory_space<vmem>>, %arg6: memref<1024x512xbf16, #tpu.memory_space<vmem>>, %arg7: memref<1x512xf32, #tpu.memory_space<vmem>>, %arg8: memref<1x512xf32, #tpu.memory_space<vmem>>, %arg9: memref<1x1xf32, #tpu.memory_space<vmem>>, %arg10: memref<1024x10xf32, #tpu.memory_space<vmem>>, %arg11: memref<1x10xf32, #tpu.memory_space<vmem>>, %arg12: memref<1x10xf32, #tpu.memory_space<vmem>>, %arg13: memref<1x8xf32, #tpu.memory_space<vmem>>, %arg14: memref<1x8xf32, #tpu.memory_space<vmem>>, %arg15: memref<8x1024xf32, #tpu.memory_space<vmem>>) attributes {dimension_semantics = [#tpu.dimension_semantics<arbitrary>], iteration_bounds = array<i64: 4>, scalar_prefetch = 0 : i64, scratch_operands = 1 : i64, tpu.core_type = #tpu.core_type<tc>, window_params = [{pipeline_mode = #tpu.pipeline_mode<synchronous>, transform_indices = @transform_0, window_bounds = array<i64: 8, 1024>}, {transform_indices = @transform_1, window_bounds = array<i64: 1024, 256>}, {transform_indices = @transform_2, window_bounds = array<i64: 1, 256>}, {transform_indices = @transform_3, window_bounds = array<i64: 256, 1024>}, {pipeline_mode = #tpu.pipeline_mode<synchronous>, transform_indices = @transform_4, window_bounds = array<i64: 1, 1024>}, {pipeline_mode = #tpu.pipeline_mode<synchronous>, transform_indices = @transform_5, window_bounds = array<i64: 1024, 512>}, {pipeline_mode = #tpu.pipeline_mode<synchronous>, transform_indices = @transform_6, window_bounds = array<i64: 1, 512>}, {pipeline_mode = #tpu.pipeline_mode<synchronous>, transform_indices = @transform_7, window_bounds = array<i64: 1, 512>}, {pipeline_mode = #tpu.pipeline_mode<synchronous>, transform_indices = @transform_8, window_bounds = array<i64: 1, 1>}, {pipeline_mode = #tpu.pipeline_mode<synchronous>, transform_indices = @transform_9, window_bounds = array<i64: 1024, 10>}, {pipeline_mode = #tpu.pipeline_mode<synchronous>, transform_indices = @transform_10, window_bounds = array<i64: 1, 10>}, {pipeline_mode = #tpu.pipeline_mode<synchronous>, transform_indices = @transform_11, window_bounds = array<i64: 1, 10>}, {pipeline_mode = #tpu.pipeline_mode<synchronous>, transform_indices = @transform_12, window_bounds = array<i64: 1, 8>}, {pipeline_mode = #tpu.pipeline_mode<synchronous>, transform_indices = @transform_13, window_bounds = array<i64: 1, 8>}]} {
    %c0_i32 = arith.constant 0 : i32
    %0 = arith.cmpi eq, %arg0, %c0_i32 : i32
    %1 = arith.extui %0 : i1 to i32
    %c0_i32_0 = arith.constant 0 : i32
    %2 = arith.cmpi ne, %1, %c0_i32_0 : i32
    scf.if %2 {
      %cst_15 = arith.constant 0.000000e+00 : f32
      %21 = vector.broadcast %cst_15 : f32 to vector<8x1024xf32>
      %c0_16 = arith.constant 0 : index
      %c0_17 = arith.constant 0 : index
      %22 = vector.load %arg15[%c0_16, %c0_17] : memref<8x1024xf32, #tpu.memory_space<vmem>>, vector<8x1024xf32>
      tpu.vector_store %arg15[%c0_16, %c0_17], %21 {strides = array<i32>} : memref<8x1024xf32, #tpu.memory_space<vmem>>, vector<8x1024xf32>,
    } else {
    }
    %c0 = arith.constant 0 : index
    %c0_1 = arith.constant 0 : index
    %3 = vector.load %arg1[%c0, %c0_1] : memref<8x1024xf32, #tpu.memory_space<vmem>>, vector<8x1024xf32>
    %4 = arith.truncf %3 : vector<8x1024xf32> to vector<8x1024xbf16>
    %c0_2 = arith.constant 0 : index
    %c0_3 = arith.constant 0 : index
    %5 = vector.load %arg2[%c0_2, %c0_3] : memref<1024x256xbf16, #tpu.memory_space<vmem>>, vector<1024x256xbf16>
    %cst = arith.constant dense<0.000000e+00> : vector<8x256xf32>
    %6 = tpu.matmul %4, %5, %cst {dimension_numbers = #tpu.dot_dimension_numbers<[1], [0], [0], [1], [0, 0, 1, 1], [], []>} : vector<8x1024xbf16>, vector<1024x256xbf16>, vector<8x256xf32> -> vector<8x256xf32>
    %c0_4 = arith.constant 0 : index
    %c0_5 = arith.constant 0 : index
    %7 = vector.load %arg3[%c0_4, %c0_5] : memref<1x256xf32, #tpu.memory_space<vmem>>, vector<1x256xf32>
    %8 = vector.broadcast %7 : vector<1x256xf32> to vector<8x256xf32>
    %9 = arith.addf %6, %8 : vector<8x256xf32>
    %cst_6 = arith.constant 0.000000e+00 : f32
    %10 = vector.broadcast %cst_6 : f32 to vector<8x256xf32>
    %11 = arith.maximumf %9, %10 : vector<8x256xf32>
    %c0_7 = arith.constant 0 : index
    %c0_8 = arith.constant 0 : index
    %12 = vector.load %arg15[%c0_7, %c0_8] : memref<8x1024xf32, #tpu.memory_space<vmem>>, vector<8x1024xf32>
    %13 = arith.truncf %11 : vector<8x256xf32> to vector<8x256xbf16>
    %c0_9 = arith.constant 0 : index
    %c0_10 = arith.constant 0 : index
    %14 = vector.load %arg4[%c0_9, %c0_10] : memref<256x1024xbf16, #tpu.memory_space<vmem>>, vector<256x1024xbf16>
    %cst_11 = arith.constant dense<0.000000e+00> : vector<8x1024xf32>
    %15 = tpu.matmul %13, %14, %cst_11 {dimension_numbers = #tpu.dot_dimension_numbers<[1], [0], [0], [1], [0, 0, 1, 1], [], []>} : vector<8x256xbf16>, vector<256x1024xbf16>, vector<8x1024xf32> -> vector<8x1024xf32>
    %16 = arith.addf %12, %15 : vector<8x1024xf32>
    %c0_12 = arith.constant 0 : index
    %c0_13 = arith.constant 0 : index
    %17 = vector.load %arg15[%c0_12, %c0_13] : memref<8x1024xf32, #tpu.memory_space<vmem>>, vector<8x1024xf32>
    tpu.vector_store %arg15[%c0_12, %c0_13], %16 {strides = array<i32>} : memref<8x1024xf32, #tpu.memory_space<vmem>>, vector<8x1024xf32>,
    %c3_i32 = arith.constant 3 : i32
    %18 = arith.cmpi eq, %arg0, %c3_i32 : i32
    %19 = arith.extui %18 : i1 to i32
    %c0_i32_14 = arith.constant 0 : i32
    %20 = arith.cmpi ne, %19, %c0_i32_14 : i32
    scf.if %20 {
      %c0_15 = arith.constant 0 : index
      %c0_16 = arith.constant 0 : index
      %21 = vector.load %arg15[%c0_15, %c0_16] : memref<8x1024xf32, #tpu.memory_space<vmem>>, vector<8x1024xf32>
      %c0_17 = arith.constant 0 : index
      %c0_18 = arith.constant 0 : index
      %22 = vector.load %arg5[%c0_17, %c0_18] : memref<1x1024xf32, #tpu.memory_space<vmem>>, vector<1x1024xf32>
      %23 = vector.broadcast %22 : vector<1x1024xf32> to vector<8x1024xf32>
      %24 = arith.addf %21, %23 : vector<8x1024xf32>
      %cst_19 = arith.constant 0.000000e+00 : f32
      %25 = vector.broadcast %cst_19 : f32 to vector<8x1024xf32>
      %26 = arith.maximumf %24, %25 : vector<8x1024xf32>
      %27 = arith.truncf %26 : vector<8x1024xf32> to vector<8x1024xbf16>
      %c0_20 = arith.constant 0 : index
      %c0_21 = arith.constant 0 : index
      %28 = vector.load %arg6[%c0_20, %c0_21] : memref<1024x512xbf16, #tpu.memory_space<vmem>>, vector<1024x512xbf16>
      %cst_22 = arith.constant dense<0.000000e+00> : vector<8x512xf32>
      %29 = tpu.matmul %27, %28, %cst_22 {dimension_numbers = #tpu.dot_dimension_numbers<[1], [0], [0], [1], [0, 0, 1, 1], [], []>} : vector<8x1024xbf16>, vector<1024x512xbf16>, vector<8x512xf32> -> vector<8x512xf32>
      %c0_23 = arith.constant 0 : index
      %c0_24 = arith.constant 0 : index
      %30 = vector.load %arg7[%c0_23, %c0_24] : memref<1x512xf32, #tpu.memory_space<vmem>>, vector<1x512xf32>
      %31 = vector.broadcast %30 : vector<1x512xf32> to vector<8x512xf32>
      %32 = arith.addf %29, %31 : vector<8x512xf32>
      %33 = math.tanh %32 : vector<8x512xf32>
      %c0_25 = arith.constant 0 : index
      %c0_26 = arith.constant 0 : index
      %34 = vector.load %arg8[%c0_25, %c0_26] : memref<1x512xf32, #tpu.memory_space<vmem>>, vector<1x512xf32>
      "tpu.trace_start"() <{level = 10 : i32, message = "kd,nd->kn"}> : () -> ()
      %cst_27 = arith.constant dense<0.000000e+00> : vector<1x8xf32>
      %35 = tpu.matmul %34, %33, %cst_27 {dimension_numbers = #tpu.dot_dimension_numbers<[1], [1], [0], [0], [0, 0, 1, 0], [], []>} : vector<1x512xf32>, vector<8x512xf32>, vector<1x8xf32> -> vector<1x8xf32>
      "tpu.trace_stop"() : () -> ()
      %c0_28 = arith.constant 0 : index
      %c0_29 = arith.constant 0 : index
      %36 = vector.load %arg9[%c0_28, %c0_29] : memref<1x1xf32, #tpu.memory_space<vmem>>, vector<1x1xf32>
      %37 = vector.broadcast %36 : vector<1x1xf32> to vector<1x8xf32>
      %38 = arith.addf %35, %37 : vector<1x8xf32>
      %cst_30 = arith.constant dense<0xFF800000> : vector<1xf32>
      %39 = vector.multi_reduction <maximumf>, %38, %cst_30 [1] : vector<1x8xf32> to vector<1xf32>
      %40 = vector.shape_cast %39 : vector<1xf32> to vector<1x1xf32>
      %41 = vector.broadcast %40 : vector<1x1xf32> to vector<1x8xf32>
      %42 = arith.subf %38, %41 : vector<1x8xf32>
      %43 = math.exp %42 : vector<1x8xf32>
      %cst_31 = arith.constant dense<0.000000e+00> : vector<1xf32>
      %44 = vector.multi_reduction <add>, %43, %cst_31 [1] : vector<1x8xf32> to vector<1xf32>
      %45 = vector.shape_cast %44 : vector<1xf32> to vector<1x1xf32>
      %46 = vector.broadcast %45 : vector<1x1xf32> to vector<1x8xf32>
      %47 = arith.divf %43, %46 : vector<1x8xf32>
      %cst_32 = arith.constant dense<0.000000e+00> : vector<1x1024xf32>
      %48 = tpu.matmul %47, %26, %cst_32 {dimension_numbers = #tpu.dot_dimension_numbers<[1], [0], [0], [1], [0, 0, 1, 1], [], []>} : vector<1x8xf32>, vector<8x1024xf32>, vector<1x1024xf32> -> vector<1x1024xf32>
      %c0_33 = arith.constant 0 : index
      %c0_34 = arith.constant 0 : index
      %49 = vector.load %arg10[%c0_33, %c0_34] : memref<1024x10xf32, #tpu.memory_space<vmem>>, vector<1024x10xf32>
      %cst_35 = arith.constant dense<0.000000e+00> : vector<1x10xf32>
      %50 = tpu.matmul %48, %49, %cst_35 {dimension_numbers = #tpu.dot_dimension_numbers<[1], [0], [0], [1], [0, 0, 1, 1], [], []>} : vector<1x1024xf32>, vector<1024x10xf32>, vector<1x10xf32> -> vector<1x10xf32>
      %c0_36 = arith.constant 0 : index
      %c0_37 = arith.constant 0 : index
      %51 = vector.load %arg11[%c0_36, %c0_37] : memref<1x10xf32, #tpu.memory_space<vmem>>, vector<1x10xf32>
      %52 = arith.addf %50, %51 : vector<1x10xf32>
      %c0_38 = arith.constant 0 : index
      %c0_39 = arith.constant 0 : index
      %53 = vector.load %arg12[%c0_38, %c0_39] : memref<1x10xf32, #tpu.memory_space<vmem>>, vector<1x10xf32>
      tpu.vector_store %arg12[%c0_38, %c0_39], %52 {strides = array<i32>} : memref<1x10xf32, #tpu.memory_space<vmem>>, vector<1x10xf32>,
      %c0_40 = arith.constant 0 : index
      %c0_41 = arith.constant 0 : index
      %54 = vector.load %arg13[%c0_40, %c0_41] : memref<1x8xf32, #tpu.memory_space<vmem>>, vector<1x8xf32>
      tpu.vector_store %arg13[%c0_40, %c0_41], %47 {strides = array<i32>} : memref<1x8xf32, #tpu.memory_space<vmem>>, vector<1x8xf32>,
      %c0_42 = arith.constant 0 : index
      %c0_43 = arith.constant 0 : index
      %55 = vector.load %arg14[%c0_42, %c0_43] : memref<1x8xf32, #tpu.memory_space<vmem>>, vector<1x8xf32>
      tpu.vector_store %arg14[%c0_42, %c0_43], %38 {strides = array<i32>} : memref<1x8xf32, #tpu.memory_space<vmem>>, vector<1x8xf32>,
    } else {
    }
    return
  }
  func.func @transform_0(%arg0: i32) -> (i32, i32) {
    %c0_i32 = arith.constant 0 : i32
    %c0_i32_0 = arith.constant 0 : i32
    %c0_i32_1 = arith.constant 0 : i32
    return %c0_i32, %c0_i32_0 : i32, i32
  }
  func.func @transform_1(%arg0: i32) -> (i32, i32) {
    %c0_i32 = arith.constant 0 : i32
    %c0_i32_0 = arith.constant 0 : i32
    return %c0_i32, %arg0 : i32, i32
  }
  func.func @transform_2(%arg0: i32) -> (i32, i32) {
    %c0_i32 = arith.constant 0 : i32
    %c0_i32_0 = arith.constant 0 : i32
    return %c0_i32, %arg0 : i32, i32
  }
  func.func @transform_3(%arg0: i32) -> (i32, i32) {
    %c0_i32 = arith.constant 0 : i32
    %c0_i32_0 = arith.constant 0 : i32
    return %arg0, %c0_i32 : i32, i32
  }
  func.func @transform_4(%arg0: i32) -> (i32, i32) {
    %c0_i32 = arith.constant 0 : i32
    %c0_i32_0 = arith.constant 0 : i32
    %c0_i32_1 = arith.constant 0 : i32
    return %c0_i32, %c0_i32_0 : i32, i32
  }
  func.func @transform_5(%arg0: i32) -> (i32, i32) {
    %c0_i32 = arith.constant 0 : i32
    %c0_i32_0 = arith.constant 0 : i32
    %c0_i32_1 = arith.constant 0 : i32
    return %c0_i32, %c0_i32_0 : i32, i32
  }
  func.func @transform_6(%arg0: i32) -> (i32, i32) {
    %c0_i32 = arith.constant 0 : i32
    %c0_i32_0 = arith.constant 0 : i32
    %c0_i32_1 = arith.constant 0 : i32
    return %c0_i32, %c0_i32_0 : i32, i32
  }
  func.func @transform_7(%arg0: i32) -> (i32, i32) {
    %c0_i32 = arith.constant 0 : i32
    %c0_i32_0 = arith.constant 0 : i32
    %c0_i32_1 = arith.constant 0 : i32
    return %c0_i32, %c0_i32_0 : i32, i32
  }
  func.func @transform_8(%arg0: i32) -> (i32, i32) {
    %c0_i32 = arith.constant 0 : i32
    %c0_i32_0 = arith.constant 0 : i32
    %c0_i32_1 = arith.constant 0 : i32
    return %c0_i32, %c0_i32_0 : i32, i32
  }
  func.func @transform_9(%arg0: i32) -> (i32, i32) {
    %c0_i32 = arith.constant 0 : i32
    %c0_i32_0 = arith.constant 0 : i32
    %c0_i32_1 = arith.constant 0 : i32
    return %c0_i32, %c0_i32_0 : i32, i32
  }
  func.func @transform_10(%arg0: i32) -> (i32, i32) {
    %c0_i32 = arith.constant 0 : i32
    %c0_i32_0 = arith.constant 0 : i32
    %c0_i32_1 = arith.constant 0 : i32
    return %c0_i32, %c0_i32_0 : i32, i32
  }
  func.func @transform_11(%arg0: i32) -> (i32, i32) {
    %c0_i32 = arith.constant 0 : i32
    %c0_i32_0 = arith.constant 0 : i32
    %c0_i32_1 = arith.constant 0 : i32
    return %c0_i32, %c0_i32_0 : i32, i32
  }
  func.func @transform_12(%arg0: i32) -> (i32, i32) {
    %c0_i32 = arith.constant 0 : i32
    %c0_i32_0 = arith.constant 0 : i32
    %c0_i32_1 = arith.constant 0 : i32
    return %c0_i32, %c0_i32_0 : i32, i32
  }
  func.func @transform_13(%arg0: i32) -> (i32, i32) {
    %c0_i32 = arith.constant 0 : i32
    %c0_i32_0 = arith.constant 0 : i32
    %c0_i32_1 = arith.constant 0 : i32
    return %c0_i32, %c0_i32_0 : i32, i32
  }
}

</mosaic_0001>

<llo_original>
// kernel: tpu_custom_call.1
$region0: #{tpu_custom_call.1}
  #allocation0 [shape = 'u32[]', space=smem, size = 0x4, offset = 0x4, fixed_abs, tag = 'smem constant byte address 0x4 - core index']
  #allocation1 [shape = 'u32[72,128]{1,0:T(1,128)}', space=vmem, size = 0x9000, scoped, tag = 'internal scratch']
  #allocation2 [shape = 'f32[8,1024]{1,0:T(8,128)}', space=vmem, size = 0x8000, scoped, tag = 'scratch operand']
  #allocation3 [shape = 'f32[1,1]{1,0:T(1,128)S(1)}', space=vmem, size = 0x200, scoped, tag = 'scoped memory for tpu_custom_call.1']
  %s0 = inlined_call_operand.hbm [shape: f32[8,1024], index: 0, kind: input, shape index: {}]
  %s1 = inlined_call_operand.hbm [shape: bf16[1024,1024], index: 1, kind: input, shape index: {}]
  %s2 = inlined_call_operand.hbm [shape: f32[1,1024], index: 2, kind: input, shape index: {}]
  %s3 = inlined_call_operand.hbm [shape: bf16[1024,1024], index: 3, kind: input, shape index: {}]
  %s4 = inlined_call_operand.hbm [shape: f32[1,1024], index: 4, kind: input, shape index: {}]
  %s5 = inlined_call_operand.hbm [shape: bf16[1024,512], index: 5, kind: input, shape index: {}]
  %s6 = inlined_call_operand.hbm [shape: f32[1,512], index: 6, kind: input, shape index: {}]
  %s7 = inlined_call_operand.hbm [shape: f32[1,512], index: 7, kind: input, shape index: {}]
  %s8 = inlined_call_operand.<no memory space> [shape: f32[1,1], index: 8, kind: input, shape index: {}]
  %s9 = inlined_call_operand.vmem [shape: f32[1024,10], index: 9, kind: input, shape index: {}]
  %s10 = inlined_call_operand.hbm [shape: f32[1,10], index: 10, kind: input, shape index: {}]
  %s11 = inlined_call_operand.hbm [shape: f32[1,10], index: 11, kind: output, shape index: {0}]
  %s12 = inlined_call_operand.hbm [shape: f32[1,8], index: 12, kind: output, shape index: {1}]
  %s13 = inlined_call_operand.hbm [shape: f32[1,8], index: 13, kind: output, shape index: {2}]
  %14 = xla_tuple %s11, %s12, %s13
  %s15 = sld [smem:[#allocation0]]
  $region137: #{tpu_custom_call.1} parent=0
    _
  %s17 = ssub.s32 1, %s15
  %s18 = scalar_select 0, %s17, %s15
  %v19 = vstv %s8
  %20 = vst [vmem:[#allocation3] sm:$0x1] %v19
  $region1: #{tpu_custom_call.1} parent=0
    #allocation4 [shape = 'u8[32768]{0}', space=vmem, size = 0x8000, scoped, tag = 'input window, operand 0, single buffered']
    #allocation5 [shape = 's32[2]{0}', space=sflag, size = 0x8, scoped, tag = 'scoped memory for tpu_custom_call.1']
    #allocation6 [shape = 's32[2]{0}', space=sflag, size = 0x8, scoped, tag = 'scoped memory for tpu_custom_call.1']
    #allocation7 [shape = 'u8[1048576]{0}', space=vmem, size = 0x100000, scoped, tag = 'input window, operand 1']
    #allocation8 [shape = 's32[2]{0}', space=sflag, size = 0x8, scoped, tag = 'scoped memory for tpu_custom_call.1']
    #allocation9 [shape = 'u8[2048]{0}', space=vmem, size = 0x800, scoped, tag = 'input window, operand 2']
    #allocation10 [shape = 'u8[1048576]{0}', space=vmem, size = 0x100000, scoped, tag = 'input window, operand 3']
    #allocation11 [shape = 's32[2]{0}', space=sflag, size = 0x8, scoped, tag = 'scoped memory for tpu_custom_call.1']
    #allocation12 [shape = 'u8[4096]{0}', space=vmem, size = 0x1000, scoped, tag = 'input window, operand 4, single buffered']
    #allocation13 [shape = 'u8[1048576]{0}', space=vmem, size = 0x100000, scoped, tag = 'input window, operand 5, single buffered']
    #allocation14 [shape = 's32[1]{0}', space=sflag, size = 0x4, scoped, tag = 'scoped memory for tpu_custom_call.1']
    #allocation15 [shape = 'u8[2048]{0}', space=vmem, size = 0x800, scoped, tag = 'input window, operand 6, single buffered']
    #allocation16 [shape = 'u8[2048]{0}', space=vmem, size = 0x800, scoped, tag = 'input window, operand 7, single buffered']
    #allocation17 [shape = 's32[1]{0}', space=sflag, size = 0x4, scoped, tag = 'scoped memory for tpu_custom_call.1']
    #allocation18 [shape = 'u8[512]{0}', space=vmem, size = 0x400, scoped, tag = 'input window, operand 10, single buffered']
    #allocation19 [shape = 'u8[512]{0}', space=vmem, size = 0x400, scoped, tag = 'output window, operand 0, single buffered']
    #allocation20 [shape = 'u8[512]{0}', space=vmem, size = 0x400, scoped, tag = 'output window, operand 1, single buffered']
    #allocation21 [shape = 's32[1]{0}', space=sflag, size = 0x4, scoped, tag = 'scoped memory for tpu_custom_call.1']
    #allocation22 [shape = 'u8[512]{0}', space=vmem, size = 0x400, scoped, tag = 'output window, operand 2, single buffered']
    %21 = vsyncpa [#allocation5], 0
    %22 = vsyncpa [#allocation8], 0
    %s23 = scalar_lea.sflag [#allocation8], 1
    %24 = vsyncpa %s23, 0
    %25 = vsyncpa [#allocation11], 0
    %s26 = scalar_lea.sflag [#allocation11], 1
    %27 = vsyncpa %s26, 0
    %28 = vsyncpa [#allocation14], 0
    %29 = vsyncpa [#allocation17], 0
    %30 = vsyncpa [#allocation6], 0
    %31 = vsyncpa [#allocation21], 0
    loop: start=0, step=1, limit=6
    $region2: #{tpu_custom_call.1} parent=1 // loop_pre_header
      _
    $region3: #{tpu_custom_call.1} parent=1 // loop_header
      %s33 = sphi 0, %s37
      %p34 = scmp.ge.s32.totalorder %s33, 6
      %s41 = sphi 0, %s41
      %s43 = sphi 0, %s41
      %s44 = sphi 0, %s43
      %s58 = sphi 0, %s44
      %s64 = sphi 0, %s66
      %s67 = sphi 0, %s64
      %s68 = sphi 0, %s67
      %s84 = sphi 0, %s68
      %s90 = sphi 0, %s92
      %s93 = sphi 0, %s90
      %s94 = sphi 0, %s93
      %s110 = sphi 0, %s94
      %s116 = sphi 0, %s118
      %s119 = sphi 0, %s116
      %s120 = sphi 0, %s119
      %s136 = sphi 0, %s120
      %s140 = sphi 0, %s140
      %s142 = sphi 0, %s140
      %s143 = sphi 0, %s142
      %s157 = sphi 0, %s143
      %s161 = sphi 0, %s161
      %s163 = sphi 0, %s161
      %s164 = sphi 0, %s163
      %s178 = sphi 0, %s164
      %s182 = sphi 0, %s182
      %s184 = sphi 0, %s182
      %s185 = sphi 0, %s184
      %s199 = sphi 0, %s185
      %s203 = sphi 0, %s203
      %s205 = sphi 0, %s203
      %s206 = sphi 0, %s205
      %s220 = sphi 0, %s206
      %s224 = sphi 0, %s224
      %s226 = sphi 0, %s224
      %s227 = sphi 0, %s226
      %s241 = sphi 0, %s227
      %s245 = sphi 0, %s245
      %s247 = sphi 0, %s245
      %s248 = sphi 0, %s247
      %s262 = sphi 0, %s248
      %s266 = sphi 0, %s266
      %s268 = sphi 0, %s266
      %s269 = sphi 0, %s268
      %s283 = sphi 0, %s269
      %s287 = sphi 0, %s287
      %s289 = sphi 0, %s287
      %s290 = sphi 0, %s289
      %s304 = sphi 0, %s290
      %s308 = sphi 0, %s308
      %s310 = sphi 0, %s308
      %s311 = sphi 0, %s310
      %s325 = sphi 0, %s311
      %s329 = sphi 0, %s329
      %s331 = sphi 0, %s329
      %s332 = sphi 0, %s331
      %s346 = sphi 0, %s332
    $region4: #{tpu_custom_call.1} parent=1 // loop_header_branch
      %36 = sbr.rel (%p34) target = $region8
    $region5: #{tpu_custom_call.1} parent=1 // loop_body
      %s38 = ssub.s32 %s33, 1
      %s39 = ssub.s32 %s33, 2
      %s40 = sadd.s32 %s33, 1
      %s42 = sadd.s32 %s41, 1
      %p45 = scmp.eq.s32.totalorder %s33, 3
      %p46 = scmp.ne.s32.totalorder %s41, %s43
      %p47 = scmp.eq.s32.totalorder %s33, 0
      %p48 = por %p46, %p47
      %p49 = scmp.ne.s32.totalorder %s41, %s43
      %p50 = scmp.eq.s32.totalorder %s38, 3
      %p51 = por %p49, %p50
      %p52 = scmp.ne.s32.totalorder %s43, %s44
      %p53 = scmp.eq.s32.totalorder %s38, 0
      %p54 = por %p52, %p53
      %p55 = scmp.ne.s32.totalorder %s43, %s44
      %p56 = scmp.eq.s32.totalorder %s39, 3
      %p57 = por %p55, %p56
      %p59 = scmp.ne.s32.totalorder %s44, %s58
      %p60 = scmp.eq.s32.totalorder %s39, 0
      %p61 = por %p59, %p60
      %s62 = ssub.s32 %s33, %s40
      %p63 = scmp.eq.s32.totalorder %s62, 0
      %s65 = sadd.s32 %s64, 1
      %s66 = scalar_select %p63, %s64, %s65
      %p69 = pneg %p63
      %p70 = scmp.eq.s32.totalorder %s33, 3
      %p71 = por %p69, %p70
      %p72 = scmp.ne.s32.totalorder %s64, %s67
      %p73 = scmp.eq.s32.totalorder %s33, 0
      %p74 = por %p72, %p73
      %p75 = scmp.ne.s32.totalorder %s64, %s67
      %p76 = scmp.eq.s32.totalorder %s38, 3
      %p77 = por %p75, %p76
      %p78 = scmp.ne.s32.totalorder %s67, %s68
      %p79 = scmp.eq.s32.totalorder %s38, 0
      %p80 = por %p78, %p79
      %p81 = scmp.ne.s32.totalorder %s67, %s68
      %p82 = scmp.eq.s32.totalorder %s39, 3
      %p83 = por %p81, %p82
      %p85 = scmp.ne.s32.totalorder %s68, %s84
      %p86 = scmp.eq.s32.totalorder %s39, 0
      %p87 = por %p85, %p86
      %s88 = ssub.s32 %s33, %s40
      %p89 = scmp.eq.s32.totalorder %s88, 0
      %s91 = sadd.s32 %s90, 1
      %s92 = scalar_select %p89, %s90, %s91
      %p95 = pneg %p89
      %p96 = scmp.eq.s32.totalorder %s33, 3
      %p97 = por %p95, %p96
      %p98 = scmp.ne.s32.totalorder %s90, %s93
      %p99 = scmp.eq.s32.totalorder %s33, 0
      %p100 = por %p98, %p99
      %p101 = scmp.ne.s32.totalorder %s90, %s93
      %p102 = scmp.eq.s32.totalorder %s38, 3
      %p103 = por %p101, %p102
      %p104 = scmp.ne.s32.totalorder %s93, %s94
      %p105 = scmp.eq.s32.totalorder %s38, 0
      %p106 = por %p104, %p105
      %p107 = scmp.ne.s32.totalorder %s93, %s94
      %p108 = scmp.eq.s32.totalorder %s39, 3
      %p109 = por %p107, %p108
      %p111 = scmp.ne.s32.totalorder %s94, %s110
      %p112 = scmp.eq.s32.totalorder %s39, 0
      %p113 = por %p111, %p112
      %s114 = ssub.s32 %s33, %s40
      %p115 = scmp.eq.s32.totalorder %s114, 0
      %s117 = sadd.s32 %s116, 1
      %s118 = scalar_select %p115, %s116, %s117
      %p121 = pneg %p115
      %p122 = scmp.eq.s32.totalorder %s33, 3
      %p123 = por %p121, %p122
      %p124 = scmp.ne.s32.totalorder %s116, %s119
      %p125 = scmp.eq.s32.totalorder %s33, 0
      %p126 = por %p124, %p125
      %p127 = scmp.ne.s32.totalorder %s116, %s119
      %p128 = scmp.eq.s32.totalorder %s38, 3
      %p129 = por %p127, %p128
      %p130 = scmp.ne.s32.totalorder %s119, %s120
      %p131 = scmp.eq.s32.totalorder %s38, 0
      %p132 = por %p130, %p131
      %p133 = scmp.ne.s32.totalorder %s119, %s120
      %p134 = scmp.eq.s32.totalorder %s39, 3
      %p135 = por %p133, %p134
      %p137 = scmp.ne.s32.totalorder %s120, %s136
      %p138 = scmp.eq.s32.totalorder %s39, 0
      %p139 = por %p137, %p138
      %s141 = sadd.s32 %s140, 1
      %p144 = scmp.eq.s32.totalorder %s33, 3
      %p145 = scmp.ne.s32.totalorder %s140, %s142
      %p146 = scmp.eq.s32.totalorder %s33, 0
      %p147 = por %p145, %p146
      %p148 = scmp.ne.s32.totalorder %s140, %s142
      %p149 = scmp.eq.s32.totalorder %s38, 3
      %p150 = por %p148, %p149
      %p151 = scmp.ne.s32.totalorder %s142, %s143
      %p152 = scmp.eq.s32.totalorder %s38, 0
      %p153 = por %p151, %p152
      %p154 = scmp.ne.s32.totalorder %s142, %s143
      %p155 = scmp.eq.s32.totalorder %s39, 3
      %p156 = por %p154, %p155
      %p158 = scmp.ne.s32.totalorder %s143, %s157
      %p159 = scmp.eq.s32.totalorder %s39, 0
      %p160 = por %p158, %p159
      %s162 = sadd.s32 %s161, 1
      %p165 = scmp.eq.s32.totalorder %s33, 3
      %p166 = scmp.ne.s32.totalorder %s161, %s163
      %p167 = scmp.eq.s32.totalorder %s33, 0
      %p168 = por %p166, %p167
      %p169 = scmp.ne.s32.totalorder %s161, %s163
      %p170 = scmp.eq.s32.totalorder %s38, 3
      %p171 = por %p169, %p170
      %p172 = scmp.ne.s32.totalorder %s163, %s164
      %p173 = scmp.eq.s32.totalorder %s38, 0
      %p174 = por %p172, %p173
      %p175 = scmp.ne.s32.totalorder %s163, %s164
      %p176 = scmp.eq.s32.totalorder %s39, 3
      %p177 = por %p175, %p176
      %p179 = scmp.ne.s32.totalorder %s164, %s178
      %p180 = scmp.eq.s32.totalorder %s39, 0
      %p181 = por %p179, %p180
      %s183 = sadd.s32 %s182, 1
      %p186 = scmp.eq.s32.totalorder %s33, 3
      %p187 = scmp.ne.s32.totalorder %s182, %s184
      %p188 = scmp.eq.s32.totalorder %s33, 0
      %p189 = por %p187, %p188
      %p190 = scmp.ne.s32.totalorder %s182, %s184
      %p191 = scmp.eq.s32.totalorder %s38, 3
      %p192 = por %p190, %p191
      %p193 = scmp.ne.s32.totalorder %s184, %s185
      %p194 = scmp.eq.s32.totalorder %s38, 0
      %p195 = por %p193, %p194
      %p196 = scmp.ne.s32.totalorder %s184, %s185
      %p197 = scmp.eq.s32.totalorder %s39, 3
      %p198 = por %p196, %p197
      %p200 = scmp.ne.s32.totalorder %s185, %s199
      %p201 = scmp.eq.s32.totalorder %s39, 0
      %p202 = por %p200, %p201
      %s204 = sadd.s32 %s203, 1
      %p207 = scmp.eq.s32.totalorder %s33, 3
      %p208 = scmp.ne.s32.totalorder %s203, %s205
      %p209 = scmp.eq.s32.totalorder %s33, 0
      %p210 = por %p208, %p209
      %p211 = scmp.ne.s32.totalorder %s203, %s205
      %p212 = scmp.eq.s32.totalorder %s38, 3
      %p213 = por %p211, %p212
      %p214 = scmp.ne.s32.totalorder %s205, %s206
      %p215 = scmp.eq.s32.totalorder %s38, 0
      %p216 = por %p214, %p215
      %p217 = scmp.ne.s32.totalorder %s205, %s206
      %p218 = scmp.eq.s32.totalorder %s39, 3
      %p219 = por %p217, %p218
      %p221 = scmp.ne.s32.totalorder %s206, %s220
      %p222 = scmp.eq.s32.totalorder %s39, 0
      %p223 = por %p221, %p222
      %s225 = sadd.s32 %s224, 1
      %p228 = scmp.eq.s32.totalorder %s33, 3
      %p229 = scmp.ne.s32.totalorder %s224, %s226
      %p230 = scmp.eq.s32.totalorder %s33, 0
      %p231 = por %p229, %p230
      %p232 = scmp.ne.s32.totalorder %s224, %s226
      %p233 = scmp.eq.s32.totalorder %s38, 3
      %p234 = por %p232, %p233
      %p235 = scmp.ne.s32.totalorder %s226, %s227
      %p236 = scmp.eq.s32.totalorder %s38, 0
      %p237 = por %p235, %p236
      %p238 = scmp.ne.s32.totalorder %s226, %s227
      %p239 = scmp.eq.s32.totalorder %s39, 3
      %p240 = por %p238, %p239
      %p242 = scmp.ne.s32.totalorder %s227, %s241
      %p243 = scmp.eq.s32.totalorder %s39, 0
      %p244 = por %p242, %p243
      %s246 = sadd.s32 %s245, 1
      %p249 = scmp.eq.s32.totalorder %s33, 3
      %p250 = scmp.ne.s32.totalorder %s245, %s247
      %p251 = scmp.eq.s32.totalorder %s33, 0
      %p252 = por %p250, %p251
      %p253 = scmp.ne.s32.totalorder %s245, %s247
      %p254 = scmp.eq.s32.totalorder %s38, 3
      %p255 = por %p253, %p254
      %p256 = scmp.ne.s32.totalorder %s247, %s248
      %p257 = scmp.eq.s32.totalorder %s38, 0
      %p258 = por %p256, %p257
      %p259 = scmp.ne.s32.totalorder %s247, %s248
      %p260 = scmp.eq.s32.totalorder %s39, 3
      %p261 = por %p259, %p260
      %p263 = scmp.ne.s32.totalorder %s248, %s262
      %p264 = scmp.eq.s32.totalorder %s39, 0
      %p265 = por %p263, %p264
      %s267 = sadd.s32 %s266, 1
      %p270 = scmp.eq.s32.totalorder %s33, 3
      %p271 = scmp.ne.s32.totalorder %s266, %s268
      %p272 = scmp.eq.s32.totalorder %s33, 0
      %p273 = por %p271, %p272
      %p274 = scmp.ne.s32.totalorder %s266, %s268
      %p275 = scmp.eq.s32.totalorder %s38, 3
      %p276 = por %p274, %p275
      %p277 = scmp.ne.s32.totalorder %s268, %s269
      %p278 = scmp.eq.s32.totalorder %s38, 0
      %p279 = por %p277, %p278
      %p280 = scmp.ne.s32.totalorder %s268, %s269
      %p281 = scmp.eq.s32.totalorder %s39, 3
      %p282 = por %p280, %p281
      %p284 = scmp.ne.s32.totalorder %s269, %s283
      %p285 = scmp.eq.s32.totalorder %s39, 0
      %p286 = por %p284, %p285
      %s288 = sadd.s32 %s287, 1
      %p291 = scmp.eq.s32.totalorder %s33, 3
      %p292 = scmp.ne.s32.totalorder %s287, %s289
      %p293 = scmp.eq.s32.totalorder %s33, 0
      %p294 = por %p292, %p293
      %p295 = scmp.ne.s32.totalorder %s287, %s289
      %p296 = scmp.eq.s32.totalorder %s38, 3
      %p297 = por %p295, %p296
      %p298 = scmp.ne.s32.totalorder %s289, %s290
      %p299 = scmp.eq.s32.totalorder %s38, 0
      %p300 = por %p298, %p299
      %p301 = scmp.ne.s32.totalorder %s289, %s290
      %p302 = scmp.eq.s32.totalorder %s39, 3
      %p303 = por %p301, %p302
      %p305 = scmp.ne.s32.totalorder %s290, %s304
      %p306 = scmp.eq.s32.totalorder %s39, 0
      %p307 = por %p305, %p306
      %s309 = sadd.s32 %s308, 1
      %p312 = scmp.eq.s32.totalorder %s33, 3
      %p313 = scmp.ne.s32.totalorder %s308, %s310
      %p314 = scmp.eq.s32.totalorder %s33, 0
      %p315 = por %p313, %p314
      %p316 = scmp.ne.s32.totalorder %s308, %s310
      %p317 = scmp.eq.s32.totalorder %s38, 3
      %p318 = por %p316, %p317
      %p319 = scmp.ne.s32.totalorder %s310, %s311
      %p320 = scmp.eq.s32.totalorder %s38, 0
      %p321 = por %p319, %p320
      %p322 = scmp.ne.s32.totalorder %s310, %s311
      %p323 = scmp.eq.s32.totalorder %s39, 3
      %p324 = por %p322, %p323
      %p326 = scmp.ne.s32.totalorder %s311, %s325
      %p327 = scmp.eq.s32.totalorder %s39, 0
      %p328 = por %p326, %p327
      %s330 = sadd.s32 %s329, 1
      %p333 = scmp.eq.s32.totalorder %s33, 3
      %p334 = scmp.ne.s32.totalorder %s329, %s331
      %p335 = scmp.eq.s32.totalorder %s33, 0
      %p336 = por %p334, %p335
      %p337 = scmp.ne.s32.totalorder %s329, %s331
      %p338 = scmp.eq.s32.totalorder %s38, 3
      %p339 = por %p337, %p338
      %p340 = scmp.ne.s32.totalorder %s331, %s332
      %p341 = scmp.eq.s32.totalorder %s38, 0
      %p342 = por %p340, %p341
      %p343 = scmp.ne.s32.totalorder %s331, %s332
      %p344 = scmp.eq.s32.totalorder %s39, 3
      %p345 = por %p343, %p344
      %p347 = scmp.ne.s32.totalorder %s332, %s346
      %p348 = scmp.eq.s32.totalorder %s39, 0
      %p349 = por %p347, %p348
      %p350 = scmp.le.s32.totalorder 1, %s33
      %p351 = scmp.lt.s32.totalorder %s33, 5
      %p352 = pnand %p350, %p351
      %p353 = pneg %p352
      // Predicated region
      $region9: #{tpu_custom_call.1} parent=5 // pred_check
        _
      $region10: #{tpu_custom_call.1} parent=5 // pred_check_branch
        %355 = sbr.rel (%p352) target = $region12
      $region11: #{tpu_custom_call.1} parent=5 // pred_region
        %s356 = ssub.s32 %s33, 1
        // Predicated region
        $region13: #{tpu_custom_call.1} parent=11 // pred_check
          %p357 = pneg %p54
        $region14: #{tpu_custom_call.1} parent=11 // pred_check_branch
          %359 = sbr.rel (%p357) target = $region16
        $region15: #{tpu_custom_call.1} parent=11 // pred_region
          %361 = vsyncadd [#allocation5], 0
          %s363 = sshll.u32 %s0, 4
          %s364 = int_to_ptr.hbm [resolvable:$true] %s363
          %s365 = sshll.u32 [#allocation4], 4
          %s366 = int_to_ptr.vmem [resolvable:$true] %s365
          %368 = dma.hbm_to_vmem [thread:$0]  %s364, 1024, %s366, [#allocation5]
        $region16: #{tpu_custom_call.1} parent=11 // pred_fallthru
          _
        // Predicated region
        $region17: #{tpu_custom_call.1} parent=11 // pred_check
          %p369 = pneg %p153
        $region18: #{tpu_custom_call.1} parent=11 // pred_check_branch
          %371 = sbr.rel (%p369) target = $region20
        $region19: #{tpu_custom_call.1} parent=11 // pred_region
          %373 = vsyncadd [#allocation11], 0
          %s375 = sshll.u32 %s4, 4
          %s376 = int_to_ptr.hbm [resolvable:$true] %s375
          %s377 = sshll.u32 [#allocation12], 4
          %s378 = int_to_ptr.vmem [resolvable:$true] %s377
          %380 = dma.hbm_to_vmem [thread:$0]  %s376, 128, %s378, [#allocation11]
        $region20: #{tpu_custom_call.1} parent=11 // pred_fallthru
          _
        // Predicated region
        $region21: #{tpu_custom_call.1} parent=11 // pred_check
          %p381 = pneg %p174
        $region22: #{tpu_custom_call.1} parent=11 // pred_check_branch
          %383 = sbr.rel (%p381) target = $region24
        $region23: #{tpu_custom_call.1} parent=11 // pred_region
          %385 = vsyncadd [#allocation14], 0
          %s386 = sshll.u32 %s5, 4
          %s387 = int_to_ptr.hbm [resolvable:$true] %s386
          %s388 = sshll.u32 [#allocation13], 4
          %s389 = int_to_ptr.vmem [resolvable:$true] %s388
          %394 = dma.hbm_to_vmem [thread:$0]  %s387, 32768, %s389, [#allocation14], 256, 256, 16
        $region24: #{tpu_custom_call.1} parent=11 // pred_fallthru
          _
        // Predicated region
        $region25: #{tpu_custom_call.1} parent=11 // pred_check
          %p395 = pneg %p195
        $region26: #{tpu_custom_call.1} parent=11 // pred_check_branch
          %397 = sbr.rel (%p395) target = $region28
        $region27: #{tpu_custom_call.1} parent=11 // pred_region
          %399 = vsyncadd [#allocation14], 0
          %s401 = sshll.u32 %s6, 4
          %s402 = int_to_ptr.hbm [resolvable:$true] %s401
          %s403 = sshll.u32 [#allocation15], 4
          %s404 = int_to_ptr.vmem [resolvable:$true] %s403
          %406 = dma.hbm_to_vmem [thread:$0]  %s402, 64, %s404, [#allocation14]
        $region28: #{tpu_custom_call.1} parent=11 // pred_fallthru
          _
        // Predicated region
        $region29: #{tpu_custom_call.1} parent=11 // pred_check
          %p407 = pneg %p216
        $region30: #{tpu_custom_call.1} parent=11 // pred_check_branch
          %409 = sbr.rel (%p407) target = $region32
        $region31: #{tpu_custom_call.1} parent=11 // pred_region
          %411 = vsyncadd [#allocation17], 0
          %s413 = sshll.u32 %s7, 4
          %s414 = int_to_ptr.hbm [resolvable:$true] %s413
          %s415 = sshll.u32 [#allocation16], 4
          %s416 = int_to_ptr.vmem [resolvable:$true] %s415
          %418 = dma.hbm_to_vmem [thread:$0]  %s414, 64, %s416, [#allocation17]
        $region32: #{tpu_custom_call.1} parent=11 // pred_fallthru
          _
        // Predicated region
        $region33: #{tpu_custom_call.1} parent=11 // pred_check
          %p419 = pneg %p237
        $region34: #{tpu_custom_call.1} parent=11 // pred_check_branch
          %421 = sbr.rel (%p419) target = $region36
        $region35: #{tpu_custom_call.1} parent=11 // pred_region
          _
        $region36: #{tpu_custom_call.1} parent=11 // pred_fallthru
          _
        // Predicated region
        $region37: #{tpu_custom_call.1} parent=11 // pred_check
          %p422 = pneg %p258
        $region38: #{tpu_custom_call.1} parent=11 // pred_check_branch
          %424 = sbr.rel (%p422) target = $region40
        $region39: #{tpu_custom_call.1} parent=11 // pred_region
          _
        $region40: #{tpu_custom_call.1} parent=11 // pred_fallthru
          _
        // Predicated region
        $region41: #{tpu_custom_call.1} parent=11 // pred_check
          %p425 = pneg %p279
        $region42: #{tpu_custom_call.1} parent=11 // pred_check_branch
          %427 = sbr.rel (%p425) target = $region44
        $region43: #{tpu_custom_call.1} parent=11 // pred_region
          %429 = vsyncadd [#allocation17], 0
          %s431 = sshll.u32 %s10, 4
          %s432 = int_to_ptr.hbm [resolvable:$true] %s431
          %s433 = sshll.u32 [#allocation18], 4
          %s434 = int_to_ptr.vmem [resolvable:$true] %s433
          %436 = dma.hbm_to_vmem [thread:$0]  %s432, 16, %s434, [#allocation17]
        $region44: #{tpu_custom_call.1} parent=11 // pred_fallthru
          _
      $region12: #{tpu_custom_call.1} parent=5 // pred_fallthru
        _
      %p437 = scmp.lt.s32.totalorder %s33, 4
      // Predicated region
      $region45: #{tpu_custom_call.1} parent=5 // pred_check
        %p438 = pneg %p437
      $region46: #{tpu_custom_call.1} parent=5 // pred_check_branch
        %440 = sbr.rel (%p438) target = $region48
      $region47: #{tpu_custom_call.1} parent=5 // pred_region
        // Predicated region
        $region49: #{tpu_custom_call.1} parent=47 // pred_check
          %p441 = pneg %p74
        $region50: #{tpu_custom_call.1} parent=47 // pred_check_branch
          %443 = sbr.rel (%p441) target = $region52
        $region51: #{tpu_custom_call.1} parent=47 // pred_region
          %s444 = sand.u32 %s33, 1
          %s445 = scalar_lea.sflag [#allocation8], %s444
          %s446 = sand.u32 %s64, 1
          %s447 = smul.addr %s446, 1024
          %s448 = scalar_lea.vmem [#allocation7], %s447
          %s449 = smul.u32 2, %s33
          %451 = vsyncadd %s445, 0
          %s452 = smul.addr %s449, 4
          %s453 = scalar_lea.hbm %s1, %s452
          %s454 = sshll.u32 %s453, 4
          %s455 = int_to_ptr.hbm [resolvable:$true] %s454
          %s456 = sshll.u32 %s448, 4
          %s457 = int_to_ptr.vmem [resolvable:$true] %s456
          %462 = dma.hbm_to_vmem [thread:$0]  %s455, 16384, %s457, %s445, 512, 128, 8
        $region52: #{tpu_custom_call.1} parent=47 // pred_fallthru
          _
        // Predicated region
        $region53: #{tpu_custom_call.1} parent=47 // pred_check
          %p463 = pneg %p100
        $region54: #{tpu_custom_call.1} parent=47 // pred_check_branch
          %465 = sbr.rel (%p463) target = $region56
        $region55: #{tpu_custom_call.1} parent=47 // pred_region
          %s466 = sand.u32 %s33, 1
          %s467 = scalar_lea.sflag [#allocation8], %s466
          %s468 = sand.u32 %s90, 1
          %s469 = smul.addr %s468, 2
          %s470 = scalar_lea.vmem [#allocation9], %s469
          %s471 = smul.u32 2, %s33
          %473 = vsyncadd %s467, 0
          %s474 = scalar_lea.hbm %s2, %s471
          %s476 = sshll.u32 %s474, 4
          %s477 = int_to_ptr.hbm [resolvable:$true] %s476
          %s478 = sshll.u32 %s470, 4
          %s479 = int_to_ptr.vmem [resolvable:$true] %s478
          %481 = dma.hbm_to_vmem [thread:$0]  %s477, 32, %s479, %s467
        $region56: #{tpu_custom_call.1} parent=47 // pred_fallthru
          _
        // Predicated region
        $region57: #{tpu_custom_call.1} parent=47 // pred_check
          %p482 = pneg %p126
        $region58: #{tpu_custom_call.1} parent=47 // pred_check_branch
          %484 = sbr.rel (%p482) target = $region60
        $region59: #{tpu_custom_call.1} parent=47 // pred_region
          %s485 = sand.u32 %s33, 1
          %s486 = scalar_lea.sflag [#allocation11], %s485
          %s487 = sand.u32 %s116, 1
          %s488 = smul.addr %s487, 1024
          %s489 = scalar_lea.vmem [#allocation10], %s488
          %s490 = smul.u32 32, %s33
          %492 = vsyncadd %s486, 0
          %s493 = smul.addr %s490, 8
          %s494 = smul.addr %s493, 4
          %s495 = scalar_lea.hbm %s3, %s494
          %s496 = sshll.u32 %s495, 4
          %s497 = int_to_ptr.hbm [resolvable:$true] %s496
          %s498 = sshll.u32 %s489, 4
          %s499 = int_to_ptr.vmem [resolvable:$true] %s498
          %504 = dma.hbm_to_vmem [thread:$0]  %s497, 16384, %s499, %s486, 512, 512, 32
        $region60: #{tpu_custom_call.1} parent=47 // pred_fallthru
          _
      $region48: #{tpu_custom_call.1} parent=5 // pred_fallthru
        _
      %p505 = scmp.le.s32.totalorder 1, %s33
      %p506 = scmp.lt.s32.totalorder %s33, 5
      %p507 = pnand %p505, %p506
      %p508 = pneg %p507
      // Predicated region
      $region61: #{tpu_custom_call.1} parent=5 // pred_check
        _
      $region62: #{tpu_custom_call.1} parent=5 // pred_check_branch
        %510 = sbr.rel (%p507) target = $region64
      $region63: #{tpu_custom_call.1} parent=5 // pred_region
        %s511 = ssub.s32 %s33, 1
        // Predicated region
        $region65: #{tpu_custom_call.1} parent=63 // pred_check
          %p512 = pneg %p54
        $region66: #{tpu_custom_call.1} parent=63 // pred_check_branch
          %514 = sbr.rel (%p512) target = $region68
        $region67: #{tpu_custom_call.1} parent=63 // pred_region
          %516 = dma.done [#allocation5], 1024
        $region68: #{tpu_custom_call.1} parent=63 // pred_fallthru
          _
        %s517 = sand.u32 %s38, 1
        %s518 = scalar_lea.sflag [#allocation8], %s517
        %s519 = sand.u32 %s67, 1
        %s520 = smul.addr %s519, 1024
        %s521 = scalar_lea.vmem [#allocation7], %s520
        // Predicated region
        $region69: #{tpu_custom_call.1} parent=63 // pred_check
          %p522 = pneg %p80
        $region70: #{tpu_custom_call.1} parent=63 // pred_check_branch
          %524 = sbr.rel (%p522) target = $region72
        $region71: #{tpu_custom_call.1} parent=63 // pred_region
          %526 = dma.done %s518, 16384
        $region72: #{tpu_custom_call.1} parent=63 // pred_fallthru
          _
        %s527 = sand.u32 %s38, 1
        %s528 = scalar_lea.sflag [#allocation8], %s527
        %s529 = sand.u32 %s93, 1
        %s530 = smul.addr %s529, 2
        %s531 = scalar_lea.vmem [#allocation9], %s530
        // Predicated region
        $region73: #{tpu_custom_call.1} parent=63 // pred_check
          %p532 = pneg %p106
        $region74: #{tpu_custom_call.1} parent=63 // pred_check_branch
          %534 = sbr.rel (%p532) target = $region76
        $region75: #{tpu_custom_call.1} parent=63 // pred_region
          %536 = dma.done %s528, 32
        $region76: #{tpu_custom_call.1} parent=63 // pred_fallthru
          _
        %s537 = sand.u32 %s38, 1
        %s538 = scalar_lea.sflag [#allocation11], %s537
        %s539 = sand.u32 %s119, 1
        %s540 = smul.addr %s539, 1024
        %s541 = scalar_lea.vmem [#allocation10], %s540
        // Predicated region
        $region77: #{tpu_custom_call.1} parent=63 // pred_check
          %p542 = pneg %p132
        $region78: #{tpu_custom_call.1} parent=63 // pred_check_branch
          %544 = sbr.rel (%p542) target = $region80
        $region79: #{tpu_custom_call.1} parent=63 // pred_region
          %546 = dma.done %s538, 16384
        $region80: #{tpu_custom_call.1} parent=63 // pred_fallthru
          _
        // Predicated region
        $region81: #{tpu_custom_call.1} parent=63 // pred_check
          %p547 = pneg %p153
        $region82: #{tpu_custom_call.1} parent=63 // pred_check_branch
          %549 = sbr.rel (%p547) target = $region84
        $region83: #{tpu_custom_call.1} parent=63 // pred_region
          %551 = dma.done [#allocation11], 128
        $region84: #{tpu_custom_call.1} parent=63 // pred_fallthru
          _
        // Predicated region
        $region85: #{tpu_custom_call.1} parent=63 // pred_check
          %p552 = pneg %p174
        $region86: #{tpu_custom_call.1} parent=63 // pred_check_branch
          %554 = sbr.rel (%p552) target = $region88
        $region87: #{tpu_custom_call.1} parent=63 // pred_region
          %556 = dma.done [#allocation14], 32768
        $region88: #{tpu_custom_call.1} parent=63 // pred_fallthru
          _
        // Predicated region
        $region89: #{tpu_custom_call.1} parent=63 // pred_check
          %p557 = pneg %p195
        $region90: #{tpu_custom_call.1} parent=63 // pred_check_branch
          %559 = sbr.rel (%p557) target = $region92
        $region91: #{tpu_custom_call.1} parent=63 // pred_region
          %561 = dma.done [#allocation14], 64
        $region92: #{tpu_custom_call.1} parent=63 // pred_fallthru
          _
        // Predicated region
        $region93: #{tpu_custom_call.1} parent=63 // pred_check
          %p562 = pneg %p216
        $region94: #{tpu_custom_call.1} parent=63 // pred_check_branch
          %564 = sbr.rel (%p562) target = $region96
        $region95: #{tpu_custom_call.1} parent=63 // pred_region
          %566 = dma.done [#allocation17], 64
        $region96: #{tpu_custom_call.1} parent=63 // pred_fallthru
          _
        // Predicated region
        $region97: #{tpu_custom_call.1} parent=63 // pred_check
          %p567 = pneg %p279
        $region98: #{tpu_custom_call.1} parent=63 // pred_check_branch
          %569 = sbr.rel (%p567) target = $region100
        $region99: #{tpu_custom_call.1} parent=63 // pred_region
          %571 = dma.done [#allocation17], 16
        $region100: #{tpu_custom_call.1} parent=63 // pred_fallthru
          _
        %p572 = pneg %p54
        %p573 = pneg %p51
        %s574 = sand.u32 %s38, 1
        %s575 = scalar_lea.sflag [#allocation8], %s574
        %s576 = sand.u32 %s67, 1
        %s577 = smul.addr %s576, 1024
        %s578 = scalar_lea.vmem [#allocation7], %s577
        %p579 = pneg %p80
        %p580 = pneg %p77
        %s581 = sand.u32 %s38, 1
        %s582 = scalar_lea.sflag [#allocation8], %s581
        %s583 = sand.u32 %s93, 1
        %s584 = smul.addr %s583, 2
        %s585 = scalar_lea.vmem [#allocation9], %s584
        %p586 = pneg %p106
        %p587 = pneg %p103
        %s588 = sand.u32 %s38, 1
        %s589 = scalar_lea.sflag [#allocation11], %s588
        %s590 = sand.u32 %s119, 1
        %s591 = smul.addr %s590, 1024
        %s592 = scalar_lea.vmem [#allocation10], %s591
        %p593 = pneg %p132
        %p594 = pneg %p129
        %p595 = pneg %p153
        %p596 = pneg %p150
        %p597 = pneg %p174
        %p598 = pneg %p171
        %p599 = pneg %p195
        %p600 = pneg %p192
        %p601 = pneg %p216
        %p602 = pneg %p213
        %p603 = pneg %p237
        %p604 = pneg %p234
        %p605 = pneg %p258
        %p606 = pneg %p255
        %p607 = pneg %p279
        %p608 = pneg %p276
        %p609 = pneg %p300
        %p610 = pneg %p297
        %p611 = pneg %p321
        %p612 = pneg %p318
        %p613 = pneg %p342
        %p614 = pneg %p339
        %s615 = smul.u32 2, %s38
        %s616 = smul.u32 2, %s38
        %s617 = smul.u32 32, %s38
        %p618 = scmp.eq.s32.totalorder %s38, 0
        // Predicated region
        $region101: #{tpu_custom_call.1} parent=63 // pred_check
          %p619 = pneg %p618
        $region102: #{tpu_custom_call.1} parent=63 // pred_check_branch
          %621 = sbr.rel (%p619) target = $region104
        $region103: #{tpu_custom_call.1} parent=63 // pred_region
          %622 = vst [vmem:[#allocation2] sm:$0xff] 0.0
          %623 = vst [vmem:[#allocation2 + $0x8] sm:$0xff] 0.0
          %624 = vst [vmem:[#allocation2 + $0x10] sm:$0xff] 0.0
          %625 = vst [vmem:[#allocation2 + $0x18] sm:$0xff] 0.0
          %626 = vst [vmem:[#allocation2 + $0x20] sm:$0xff] 0.0
          %627 = vst [vmem:[#allocation2 + $0x28] sm:$0xff] 0.0
          %628 = vst [vmem:[#allocation2 + $0x30] sm:$0xff] 0.0
          %629 = vst [vmem:[#allocation2 + $0x38] sm:$0xff] 0.0
        $region104: #{tpu_custom_call.1} parent=63 // pred_fallthru
          _
        %v630 = vld [vmem:[#allocation4] sm:$0xff]
        %v631 = vld [vmem:[#allocation4 + $0x8] sm:$0xff]
        %v632 = vld [vmem:[#allocation4 + $0x10] sm:$0xff]
        %v633 = vld [vmem:[#allocation4 + $0x18] sm:$0xff]
        %v634 = vld [vmem:[#allocation4 + $0x20] sm:$0xff]
        %v635 = vld [vmem:[#allocation4 + $0x28] sm:$0xff]
        %v636 = vld [vmem:[#allocation4 + $0x30] sm:$0xff]
        %v637 = vld [vmem:[#allocation4 + $0x38] sm:$0xff]
        %v638 = vpack.c.bf16 %v630, %v630
        %v639 = vpack.c.bf16 %v631, %v631
        %v640 = vpack.c.bf16 %v632, %v632
        %v641 = vpack.c.bf16 %v633, %v633
        %v642 = vpack.c.bf16 %v634, %v634
        %v643 = vpack.c.bf16 %v635, %v635
        %v644 = vpack.c.bf16 %v636, %v636
        %v645 = vpack.c.bf16 %v637, %v637
        %v646 = vld [vmem:[%s521] sm:$0xff]
        %v647 = vld [vmem:[%s521 + $0x8] sm:$0xff]
        %v648 = vld [vmem:[%s521 + $0x10] sm:$0xff]
        %v649 = vld [vmem:[%s521 + $0x18] sm:$0xff]
        %v650 = vld [vmem:[%s521 + $0x20] sm:$0xff]
        %v651 = vld [vmem:[%s521 + $0x28] sm:$0xff]
        %v652 = vld [vmem:[%s521 + $0x30] sm:$0xff]
        %v653 = vld [vmem:[%s521 + $0x38] sm:$0xff]
        %v654 = vld [vmem:[%s521 + $0x40] sm:$0xff]
        %v655 = vld [vmem:[%s521 + $0x48] sm:$0xff]
        %v656 = vld [vmem:[%s521 + $0x50] sm:$0xff]
        %v657 = vld [vmem:[%s521 + $0x58] sm:$0xff]
        %v658 = vld [vmem:[%s521 + $0x60] sm:$0xff]
        %v659 = vld [vmem:[%s521 + $0x68] sm:$0xff]
        %v660 = vld [vmem:[%s521 + $0x70] sm:$0xff]
        %v661 = vld [vmem:[%s521 + $0x78] sm:$0xff]
        %v662 = vld [vmem:[%s521 + $0x80] sm:$0xff]
        %v663 = vld [vmem:[%s521 + $0x88] sm:$0xff]
        %v664 = vld [vmem:[%s521 + $0x90] sm:$0xff]
        %v665 = vld [vmem:[%s521 + $0x98] sm:$0xff]
        %v666 = vld [vmem:[%s521 + $0xa0] sm:$0xff]
        %v667 = vld [vmem:[%s521 + $0xa8] sm:$0xff]
        %v668 = vld [vmem:[%s521 + $0xb0] sm:$0xff]
        %v669 = vld [vmem:[%s521 + $0xb8] sm:$0xff]
        %v670 = vld [vmem:[%s521 + $0xc0] sm:$0xff]
        %v671 = vld [vmem:[%s521 + $0xc8] sm:$0xff]
        %v672 = vld [vmem:[%s521 + $0xd0] sm:$0xff]
        %v673 = vld [vmem:[%s521 + $0xd8] sm:$0xff]
        %v674 = vld [vmem:[%s521 + $0xe0] sm:$0xff]
        %v675 = vld [vmem:[%s521 + $0xe8] sm:$0xff]
        %v676 = vld [vmem:[%s521 + $0xf0] sm:$0xff]
        %v677 = vld [vmem:[%s521 + $0xf8] sm:$0xff]
        %v678 = vld [vmem:[%s521 + $0x100] sm:$0xff]
        %v679 = vld [vmem:[%s521 + $0x108] sm:$0xff]
        %v680 = vld [vmem:[%s521 + $0x110] sm:$0xff]
        %v681 = vld [vmem:[%s521 + $0x118] sm:$0xff]
        %v682 = vld [vmem:[%s521 + $0x120] sm:$0xff]
        %v683 = vld [vmem:[%s521 + $0x128] sm:$0xff]
        %v684 = vld [vmem:[%s521 + $0x130] sm:$0xff]
        %v685 = vld [vmem:[%s521 + $0x138] sm:$0xff]
        %v686 = vld [vmem:[%s521 + $0x140] sm:$0xff]
        %v687 = vld [vmem:[%s521 + $0x148] sm:$0xff]
        %v688 = vld [vmem:[%s521 + $0x150] sm:$0xff]
        %v689 = vld [vmem:[%s521 + $0x158] sm:$0xff]
        %v690 = vld [vmem:[%s521 + $0x160] sm:$0xff]
        %v691 = vld [vmem:[%s521 + $0x168] sm:$0xff]
        %v692 = vld [vmem:[%s521 + $0x170] sm:$0xff]
        %v693 = vld [vmem:[%s521 + $0x178] sm:$0xff]
        %v694 = vld [vmem:[%s521 + $0x180] sm:$0xff]
        %v695 = vld [vmem:[%s521 + $0x188] sm:$0xff]
        %v696 = vld [vmem:[%s521 + $0x190] sm:$0xff]
        %v697 = vld [vmem:[%s521 + $0x198] sm:$0xff]
        %v698 = vld [vmem:[%s521 + $0x1a0] sm:$0xff]
        %v699 = vld [vmem:[%s521 + $0x1a8] sm:$0xff]
        %v700 = vld [vmem:[%s521 + $0x1b0] sm:$0xff]
        %v701 = vld [vmem:[%s521 + $0x1b8] sm:$0xff]
        %v702 = vld [vmem:[%s521 + $0x1c0] sm:$0xff]
        %v703 = vld [vmem:[%s521 + $0x1c8] sm:$0xff]
        %v704 = vld [vmem:[%s521 + $0x1d0] sm:$0xff]
        %v705 = vld [vmem:[%s521 + $0x1d8] sm:$0xff]
        %v706 = vld [vmem:[%s521 + $0x1e0] sm:$0xff]
        %v707 = vld [vmem:[%s521 + $0x1e8] sm:$0xff]
        %v708 = vld [vmem:[%s521 + $0x1f0] sm:$0xff]
        %v709 = vld [vmem:[%s521 + $0x1f8] sm:$0xff]
        %v710 = vld [vmem:[%s521 + $0x200] sm:$0xff]
        %v711 = vld [vmem:[%s521 + $0x208] sm:$0xff]
        %v712 = vld [vmem:[%s521 + $0x210] sm:$0xff]
        %v713 = vld [vmem:[%s521 + $0x218] sm:$0xff]
        %v714 = vld [vmem:[%s521 + $0x220] sm:$0xff]
        %v715 = vld [vmem:[%s521 + $0x228] sm:$0xff]
        %v716 = vld [vmem:[%s521 + $0x230] sm:$0xff]
        %v717 = vld [vmem:[%s521 + $0x238] sm:$0xff]
        %v718 = vld [vmem:[%s521 + $0x240] sm:$0xff]
        %v719 = vld [vmem:[%s521 + $0x248] sm:$0xff]
        %v720 = vld [vmem:[%s521 + $0x250] sm:$0xff]
        %v721 = vld [vmem:[%s521 + $0x258] sm:$0xff]
        %v722 = vld [vmem:[%s521 + $0x260] sm:$0xff]
        %v723 = vld [vmem:[%s521 + $0x268] sm:$0xff]
        %v724 = vld [vmem:[%s521 + $0x270] sm:$0xff]
        %v725 = vld [vmem:[%s521 + $0x278] sm:$0xff]
        %v726 = vld [vmem:[%s521 + $0x280] sm:$0xff]
        %v727 = vld [vmem:[%s521 + $0x288] sm:$0xff]
        %v728 = vld [vmem:[%s521 + $0x290] sm:$0xff]
        %v729 = vld [vmem:[%s521 + $0x298] sm:$0xff]
        %v730 = vld [vmem:[%s521 + $0x2a0] sm:$0xff]
        %v731 = vld [vmem:[%s521 + $0x2a8] sm:$0xff]
        %v732 = vld [vmem:[%s521 + $0x2b0] sm:$0xff]
        %v733 = vld [vmem:[%s521 + $0x2b8] sm:$0xff]
        %v734 = vld [vmem:[%s521 + $0x2c0] sm:$0xff]
        %v735 = vld [vmem:[%s521 + $0x2c8] sm:$0xff]
        %v736 = vld [vmem:[%s521 + $0x2d0] sm:$0xff]
        %v737 = vld [vmem:[%s521 + $0x2d8] sm:$0xff]
        %v738 = vld [vmem:[%s521 + $0x2e0] sm:$0xff]
        %v739 = vld [vmem:[%s521 + $0x2e8] sm:$0xff]
        %v740 = vld [vmem:[%s521 + $0x2f0] sm:$0xff]
        %v741 = vld [vmem:[%s521 + $0x2f8] sm:$0xff]
        %v742 = vld [vmem:[%s521 + $0x300] sm:$0xff]
        %v743 = vld [vmem:[%s521 + $0x308] sm:$0xff]
        %v744 = vld [vmem:[%s521 + $0x310] sm:$0xff]
        %v745 = vld [vmem:[%s521 + $0x318] sm:$0xff]
        %v746 = vld [vmem:[%s521 + $0x320] sm:$0xff]
        %v747 = vld [vmem:[%s521 + $0x328] sm:$0xff]
        %v748 = vld [vmem:[%s521 + $0x330] sm:$0xff]
        %v749 = vld [vmem:[%s521 + $0x338] sm:$0xff]
        %v750 = vld [vmem:[%s521 + $0x340] sm:$0xff]
        %v751 = vld [vmem:[%s521 + $0x348] sm:$0xff]
        %v752 = vld [vmem:[%s521 + $0x350] sm:$0xff]
        %v753 = vld [vmem:[%s521 + $0x358] sm:$0xff]
        %v754 = vld [vmem:[%s521 + $0x360] sm:$0xff]
        %v755 = vld [vmem:[%s521 + $0x368] sm:$0xff]
        %v756 = vld [vmem:[%s521 + $0x370] sm:$0xff]
        %v757 = vld [vmem:[%s521 + $0x378] sm:$0xff]
        %v758 = vld [vmem:[%s521 + $0x380] sm:$0xff]
        %v759 = vld [vmem:[%s521 + $0x388] sm:$0xff]
        %v760 = vld [vmem:[%s521 + $0x390] sm:$0xff]
        %v761 = vld [vmem:[%s521 + $0x398] sm:$0xff]
        %v762 = vld [vmem:[%s521 + $0x3a0] sm:$0xff]
        %v763 = vld [vmem:[%s521 + $0x3a8] sm:$0xff]
        %v764 = vld [vmem:[%s521 + $0x3b0] sm:$0xff]
        %v765 = vld [vmem:[%s521 + $0x3b8] sm:$0xff]
        %v766 = vld [vmem:[%s521 + $0x3c0] sm:$0xff]
        %v767 = vld [vmem:[%s521 + $0x3c8] sm:$0xff]
        %v768 = vld [vmem:[%s521 + $0x3d0] sm:$0xff]
        %v769 = vld [vmem:[%s521 + $0x3d8] sm:$0xff]
        %v770 = vld [vmem:[%s521 + $0x3e0] sm:$0xff]
        %v771 = vld [vmem:[%s521 + $0x3e8] sm:$0xff]
        %v772 = vld [vmem:[%s521 + $0x3f0] sm:$0xff]
        %v773 = vld [vmem:[%s521 + $0x3f8] sm:$0xff]
        %v774 = vld [vmem:[%s531] sm:$0x3]
        %v776 = vperm.slane %v774, 0
        %v777 = vperm.slane %v774, 1
        %v908 = vunpack.c.l.b16 %v646
        %v909 = vunpack.c.h.b16 %v646
        %v910 = vunpack.c.l.b16 %v647
        %v911 = vunpack.c.h.b16 %v647
        %v912 = vunpack.c.l.b16 %v648
        %v913 = vunpack.c.h.b16 %v648
        %v914 = vunpack.c.l.b16 %v649
        %v915 = vunpack.c.h.b16 %v649
        %v916 = vunpack.c.l.b16 %v650
        %v917 = vunpack.c.h.b16 %v650
        %v918 = vunpack.c.l.b16 %v651
        %v919 = vunpack.c.h.b16 %v651
        %v920 = vunpack.c.l.b16 %v652
        %v921 = vunpack.c.h.b16 %v652
        %v922 = vunpack.c.l.b16 %v653
        %v923 = vunpack.c.h.b16 %v653
        %v924 = vunpack.c.l.b16 %v654
        %v925 = vunpack.c.h.b16 %v654
        %v926 = vunpack.c.l.b16 %v655
        %v927 = vunpack.c.h.b16 %v655
        %v928 = vunpack.c.l.b16 %v656
        %v929 = vunpack.c.h.b16 %v656
        %v930 = vunpack.c.l.b16 %v657
        %v931 = vunpack.c.h.b16 %v657
        %v932 = vunpack.c.l.b16 %v658
        %v933 = vunpack.c.h.b16 %v658
        %v934 = vunpack.c.l.b16 %v659
        %v935 = vunpack.c.h.b16 %v659
        %v936 = vunpack.c.l.b16 %v660
        %v937 = vunpack.c.h.b16 %v660
        %v938 = vunpack.c.l.b16 %v661
        %v939 = vunpack.c.h.b16 %v661
        %v940 = vunpack.c.l.b16 %v662
        %v941 = vunpack.c.h.b16 %v662
        %v942 = vunpack.c.l.b16 %v663
        %v943 = vunpack.c.h.b16 %v663
        %v944 = vunpack.c.l.b16 %v664
        %v945 = vunpack.c.h.b16 %v664
        %v946 = vunpack.c.l.b16 %v665
        %v947 = vunpack.c.h.b16 %v665
        %v948 = vunpack.c.l.b16 %v666
        %v949 = vunpack.c.h.b16 %v666
        %v950 = vunpack.c.l.b16 %v667
        %v951 = vunpack.c.h.b16 %v667
        %v952 = vunpack.c.l.b16 %v668
        %v953 = vunpack.c.h.b16 %v668
        %v954 = vunpack.c.l.b16 %v669
        %v955 = vunpack.c.h.b16 %v669
        %v956 = vunpack.c.l.b16 %v670
        %v957 = vunpack.c.h.b16 %v670
        %v958 = vunpack.c.l.b16 %v671
        %v959 = vunpack.c.h.b16 %v671
        %v960 = vunpack.c.l.b16 %v672
        %v961 = vunpack.c.h.b16 %v672
        %v962 = vunpack.c.l.b16 %v673
        %v963 = vunpack.c.h.b16 %v673
        %v964 = vunpack.c.l.b16 %v674
        %v965 = vunpack.c.h.b16 %v674
        %v966 = vunpack.c.l.b16 %v675
        %v967 = vunpack.c.h.b16 %v675
        %v968 = vunpack.c.l.b16 %v676
        %v969 = vunpack.c.h.b16 %v676
        %v970 = vunpack.c.l.b16 %v677
        %v971 = vunpack.c.h.b16 %v677
        %v972 = vunpack.c.l.b16 %v678
        %v973 = vunpack.c.h.b16 %v678
        %v974 = vunpack.c.l.b16 %v679
        %v975 = vunpack.c.h.b16 %v679
        %v976 = vunpack.c.l.b16 %v680
        %v977 = vunpack.c.h.b16 %v680
        %v978 = vunpack.c.l.b16 %v681
        %v979 = vunpack.c.h.b16 %v681
        %v980 = vunpack.c.l.b16 %v682
        %v981 = vunpack.c.h.b16 %v682
        %v982 = vunpack.c.l.b16 %v683
        %v983 = vunpack.c.h.b16 %v683
        %v984 = vunpack.c.l.b16 %v684
        %v985 = vunpack.c.h.b16 %v684
        %v986 = vunpack.c.l.b16 %v685
        %v987 = vunpack.c.h.b16 %v685
        %v988 = vunpack.c.l.b16 %v686
        %v989 = vunpack.c.h.b16 %v686
        %v990 = vunpack.c.l.b16 %v687
        %v991 = vunpack.c.h.b16 %v687
        %v992 = vunpack.c.l.b16 %v688
        %v993 = vunpack.c.h.b16 %v688
        %v994 = vunpack.c.l.b16 %v689
        %v995 = vunpack.c.h.b16 %v689
        %v996 = vunpack.c.l.b16 %v690
        %v997 = vunpack.c.h.b16 %v690
        %v998 = vunpack.c.l.b16 %v691
        %v999 = vunpack.c.h.b16 %v691
        %v1000 = vunpack.c.l.b16 %v692
        %v1001 = vunpack.c.h.b16 %v692
        %v1002 = vunpack.c.l.b16 %v693
        %v1003 = vunpack.c.h.b16 %v693
        %v1004 = vunpack.c.l.b16 %v694
        %v1005 = vunpack.c.h.b16 %v694
        %v1006 = vunpack.c.l.b16 %v695
        %v1007 = vunpack.c.h.b16 %v695
        %v1008 = vunpack.c.l.b16 %v696
        %v1009 = vunpack.c.h.b16 %v696
        %v1010 = vunpack.c.l.b16 %v697
        %v1011 = vunpack.c.h.b16 %v697
        %v1012 = vunpack.c.l.b16 %v698
        %v1013 = vunpack.c.h.b16 %v698
        %v1014 = vunpack.c.l.b16 %v699
        %v1015 = vunpack.c.h.b16 %v699
        %v1016 = vunpack.c.l.b16 %v700
        %v1017 = vunpack.c.h.b16 %v700
        %v1018 = vunpack.c.l.b16 %v701
        %v1019 = vunpack.c.h.b16 %v701
        %v1020 = vunpack.c.l.b16 %v702
        %v1021 = vunpack.c.h.b16 %v702
        %v1022 = vunpack.c.l.b16 %v703
        %v1023 = vunpack.c.h.b16 %v703
        %v1024 = vunpack.c.l.b16 %v704
        %v1025 = vunpack.c.h.b16 %v704
        %v1026 = vunpack.c.l.b16 %v705
        %v1027 = vunpack.c.h.b16 %v705
        %v1028 = vunpack.c.l.b16 %v706
        %v1029 = vunpack.c.h.b16 %v706
        %v1030 = vunpack.c.l.b16 %v707
        %v1031 = vunpack.c.h.b16 %v707
        %v1032 = vunpack.c.l.b16 %v708
        %v1033 = vunpack.c.h.b16 %v708
        %v1034 = vunpack.c.l.b16 %v709
        %v1035 = vunpack.c.h.b16 %v709
        %v1036 = vunpack.c.l.b16 %v710
        %v1037 = vunpack.c.h.b16 %v710
        %v1038 = vunpack.c.l.b16 %v711
        %v1039 = vunpack.c.h.b16 %v711
        %v1040 = vunpack.c.l.b16 %v712
        %v1041 = vunpack.c.h.b16 %v712
        %v1042 = vunpack.c.l.b16 %v713
        %v1043 = vunpack.c.h.b16 %v713
        %v1044 = vunpack.c.l.b16 %v714
        %v1045 = vunpack.c.h.b16 %v714
        %v1046 = vunpack.c.l.b16 %v715
        %v1047 = vunpack.c.h.b16 %v715
        %v1048 = vunpack.c.l.b16 %v716
        %v1049 = vunpack.c.h.b16 %v716
        %v1050 = vunpack.c.l.b16 %v717
        %v1051 = vunpack.c.h.b16 %v717
        %v1052 = vunpack.c.l.b16 %v718
        %v1053 = vunpack.c.h.b16 %v718
        %v1054 = vunpack.c.l.b16 %v719
        %v1055 = vunpack.c.h.b16 %v719
        %v1056 = vunpack.c.l.b16 %v720
        %v1057 = vunpack.c.h.b16 %v720
        %v1058 = vunpack.c.l.b16 %v721
        %v1059 = vunpack.c.h.b16 %v721
        %v1060 = vunpack.c.l.b16 %v722
        %v1061 = vunpack.c.h.b16 %v722
        %v1062 = vunpack.c.l.b16 %v723
        %v1063 = vunpack.c.h.b16 %v723
        %v1064 = vunpack.c.l.b16 %v724
        %v1065 = vunpack.c.h.b16 %v724
        %v1066 = vunpack.c.l.b16 %v725
        %v1067 = vunpack.c.h.b16 %v725
        %v1068 = vunpack.c.l.b16 %v726
        %v1069 = vunpack.c.h.b16 %v726
        %v1070 = vunpack.c.l.b16 %v727
        %v1071 = vunpack.c.h.b16 %v727
        %v1072 = vunpack.c.l.b16 %v728
        %v1073 = vunpack.c.h.b16 %v728
        %v1074 = vunpack.c.l.b16 %v729
        %v1075 = vunpack.c.h.b16 %v729
        %v1076 = vunpack.c.l.b16 %v730
        %v1077 = vunpack.c.h.b16 %v730
        %v1078 = vunpack.c.l.b16 %v731
        %v1079 = vunpack.c.h.b16 %v731
        %v1080 = vunpack.c.l.b16 %v732
        %v1081 = vunpack.c.h.b16 %v732
        %v1082 = vunpack.c.l.b16 %v733
        %v1083 = vunpack.c.h.b16 %v733
        %v1084 = vunpack.c.l.b16 %v734
        %v1085 = vunpack.c.h.b16 %v734
        %v1086 = vunpack.c.l.b16 %v735
        %v1087 = vunpack.c.h.b16 %v735
        %v1088 = vunpack.c.l.b16 %v736
        %v1089 = vunpack.c.h.b16 %v736
        %v1090 = vunpack.c.l.b16 %v737
        %v1091 = vunpack.c.h.b16 %v737
        %v1092 = vunpack.c.l.b16 %v738
        %v1093 = vunpack.c.h.b16 %v738
        %v1094 = vunpack.c.l.b16 %v739
        %v1095 = vunpack.c.h.b16 %v739
        %v1096 = vunpack.c.l.b16 %v740
        %v1097 = vunpack.c.h.b16 %v740
        %v1098 = vunpack.c.l.b16 %v741
        %v1099 = vunpack.c.h.b16 %v741
        %v1100 = vunpack.c.l.b16 %v742
        %v1101 = vunpack.c.h.b16 %v742
        %v1102 = vunpack.c.l.b16 %v743
        %v1103 = vunpack.c.h.b16 %v743
        %v1104 = vunpack.c.l.b16 %v744
        %v1105 = vunpack.c.h.b16 %v744
        %v1106 = vunpack.c.l.b16 %v745
        %v1107 = vunpack.c.h.b16 %v745
        %v1108 = vunpack.c.l.b16 %v746
        %v1109 = vunpack.c.h.b16 %v746
        %v1110 = vunpack.c.l.b16 %v747
        %v1111 = vunpack.c.h.b16 %v747
        %v1112 = vunpack.c.l.b16 %v748
        %v1113 = vunpack.c.h.b16 %v748
        %v1114 = vunpack.c.l.b16 %v749
        %v1115 = vunpack.c.h.b16 %v749
        %v1116 = vunpack.c.l.b16 %v750
        %v1117 = vunpack.c.h.b16 %v750
        %v1118 = vunpack.c.l.b16 %v751
        %v1119 = vunpack.c.h.b16 %v751
        %v1120 = vunpack.c.l.b16 %v752
        %v1121 = vunpack.c.h.b16 %v752
        %v1122 = vunpack.c.l.b16 %v753
        %v1123 = vunpack.c.h.b16 %v753
        %v1124 = vunpack.c.l.b16 %v754
        %v1125 = vunpack.c.h.b16 %v754
        %v1126 = vunpack.c.l.b16 %v755
        %v1127 = vunpack.c.h.b16 %v755
        %v1128 = vunpack.c.l.b16 %v756
        %v1129 = vunpack.c.h.b16 %v756
        %v1130 = vunpack.c.l.b16 %v757
        %v1131 = vunpack.c.h.b16 %v757
        %v1132 = vunpack.c.l.b16 %v758
        %v1133 = vunpack.c.h.b16 %v758
        %v1134 = vunpack.c.l.b16 %v759
        %v1135 = vunpack.c.h.b16 %v759
        %v1136 = vunpack.c.l.b16 %v760
        %v1137 = vunpack.c.h.b16 %v760
        %v1138 = vunpack.c.l.b16 %v761
        %v1139 = vunpack.c.h.b16 %v761
        %v1140 = vunpack.c.l.b16 %v762
        %v1141 = vunpack.c.h.b16 %v762
        %v1142 = vunpack.c.l.b16 %v763
        %v1143 = vunpack.c.h.b16 %v763
        %v1144 = vunpack.c.l.b16 %v764
        %v1145 = vunpack.c.h.b16 %v764
        %v1146 = vunpack.c.l.b16 %v765
        %v1147 = vunpack.c.h.b16 %v765
        %v1148 = vunpack.c.l.b16 %v766
        %v1149 = vunpack.c.h.b16 %v766
        %v1150 = vunpack.c.l.b16 %v767
        %v1151 = vunpack.c.h.b16 %v767
        %v1152 = vunpack.c.l.b16 %v768
        %v1153 = vunpack.c.h.b16 %v768
        %v1154 = vunpack.c.l.b16 %v769
        %v1155 = vunpack.c.h.b16 %v769
        %v1156 = vunpack.c.l.b16 %v770
        %v1157 = vunpack.c.h.b16 %v770
        %v1158 = vunpack.c.l.b16 %v771
        %v1159 = vunpack.c.h.b16 %v771
        %v1160 = vunpack.c.l.b16 %v772
        %v1161 = vunpack.c.h.b16 %v772
        %v1162 = vunpack.c.l.b16 %v773
        %v1163 = vunpack.c.h.b16 %v773
        %v1164 = vpack.c.b16 %v910, %v908
        %v1165 = vpack.c.b16 %v911, %v909
        %v1166 = vpack.c.b16 %v914, %v912
        %v1167 = vpack.c.b16 %v915, %v913
        %v1168 = vpack.c.b16 %v918, %v916
        %v1169 = vpack.c.b16 %v919, %v917
        %v1170 = vpack.c.b16 %v922, %v920
        %v1171 = vpack.c.b16 %v923, %v921
        %v1172 = vpack.c.b16 %v926, %v924
        %v1173 = vpack.c.b16 %v927, %v925
        %v1174 = vpack.c.b16 %v930, %v928
        %v1175 = vpack.c.b16 %v931, %v929
        %v1176 = vpack.c.b16 %v934, %v932
        %v1177 = vpack.c.b16 %v935, %v933
        %v1178 = vpack.c.b16 %v938, %v936
        %v1179 = vpack.c.b16 %v939, %v937
        %v1180 = vpack.c.b16 %v942, %v940
        %v1181 = vpack.c.b16 %v943, %v941
        %v1182 = vpack.c.b16 %v946, %v944
        %v1183 = vpack.c.b16 %v947, %v945
        %v1184 = vpack.c.b16 %v950, %v948
        %v1185 = vpack.c.b16 %v951, %v949
        %v1186 = vpack.c.b16 %v954, %v952
        %v1187 = vpack.c.b16 %v955, %v953
        %v1188 = vpack.c.b16 %v958, %v956
        %v1189 = vpack.c.b16 %v959, %v957
        %v1190 = vpack.c.b16 %v962, %v960
        %v1191 = vpack.c.b16 %v963, %v961
        %v1192 = vpack.c.b16 %v966, %v964
        %v1193 = vpack.c.b16 %v967, %v965
        %v1194 = vpack.c.b16 %v970, %v968
        %v1195 = vpack.c.b16 %v971, %v969
        %v1196 = vpack.c.b16 %v974, %v972
        %v1197 = vpack.c.b16 %v975, %v973
        %v1198 = vpack.c.b16 %v978, %v976
        %v1199 = vpack.c.b16 %v979, %v977
        %v1200 = vpack.c.b16 %v982, %v980
        %v1201 = vpack.c.b16 %v983, %v981
        %v1202 = vpack.c.b16 %v986, %v984
        %v1203 = vpack.c.b16 %v987, %v985
        %v1204 = vpack.c.b16 %v990, %v988
        %v1205 = vpack.c.b16 %v991, %v989
        %v1206 = vpack.c.b16 %v994, %v992
        %v1207 = vpack.c.b16 %v995, %v993
        %v1208 = vpack.c.b16 %v998, %v996
        %v1209 = vpack.c.b16 %v999, %v997
        %v1210 = vpack.c.b16 %v1002, %v1000
        %v1211 = vpack.c.b16 %v1003, %v1001
        %v1212 = vpack.c.b16 %v1006, %v1004
        %v1213 = vpack.c.b16 %v1007, %v1005
        %v1214 = vpack.c.b16 %v1010, %v1008
        %v1215 = vpack.c.b16 %v1011, %v1009
        %v1216 = vpack.c.b16 %v1014, %v1012
        %v1217 = vpack.c.b16 %v1015, %v1013
        %v1218 = vpack.c.b16 %v1018, %v1016
        %v1219 = vpack.c.b16 %v1019, %v1017
        %v1220 = vpack.c.b16 %v1022, %v1020
        %v1221 = vpack.c.b16 %v1023, %v1021
        %v1222 = vpack.c.b16 %v1026, %v1024
        %v1223 = vpack.c.b16 %v1027, %v1025
        %v1224 = vpack.c.b16 %v1030, %v1028
        %v1225 = vpack.c.b16 %v1031, %v1029
        %v1226 = vpack.c.b16 %v1034, %v1032
        %v1227 = vpack.c.b16 %v1035, %v1033
        %v1228 = vpack.c.b16 %v1038, %v1036
        %v1229 = vpack.c.b16 %v1039, %v1037
        %v1230 = vpack.c.b16 %v1042, %v1040
        %v1231 = vpack.c.b16 %v1043, %v1041
        %v1232 = vpack.c.b16 %v1046, %v1044
        %v1233 = vpack.c.b16 %v1047, %v1045
        %v1234 = vpack.c.b16 %v1050, %v1048
        %v1235 = vpack.c.b16 %v1051, %v1049
        %v1236 = vpack.c.b16 %v1054, %v1052
        %v1237 = vpack.c.b16 %v1055, %v1053
        %v1238 = vpack.c.b16 %v1058, %v1056
        %v1239 = vpack.c.b16 %v1059, %v1057
        %v1240 = vpack.c.b16 %v1062, %v1060
        %v1241 = vpack.c.b16 %v1063, %v1061
        %v1242 = vpack.c.b16 %v1066, %v1064
        %v1243 = vpack.c.b16 %v1067, %v1065
        %v1244 = vpack.c.b16 %v1070, %v1068
        %v1245 = vpack.c.b16 %v1071, %v1069
        %v1246 = vpack.c.b16 %v1074, %v1072
        %v1247 = vpack.c.b16 %v1075, %v1073
        %v1248 = vpack.c.b16 %v1078, %v1076
        %v1249 = vpack.c.b16 %v1079, %v1077
        %v1250 = vpack.c.b16 %v1082, %v1080
        %v1251 = vpack.c.b16 %v1083, %v1081
        %v1252 = vpack.c.b16 %v1086, %v1084
        %v1253 = vpack.c.b16 %v1087, %v1085
        %v1254 = vpack.c.b16 %v1090, %v1088
        %v1255 = vpack.c.b16 %v1091, %v1089
        %v1256 = vpack.c.b16 %v1094, %v1092
        %v1257 = vpack.c.b16 %v1095, %v1093
        %v1258 = vpack.c.b16 %v1098, %v1096
        %v1259 = vpack.c.b16 %v1099, %v1097
        %v1260 = vpack.c.b16 %v1102, %v1100
        %v1261 = vpack.c.b16 %v1103, %v1101
        %v1262 = vpack.c.b16 %v1106, %v1104
        %v1263 = vpack.c.b16 %v1107, %v1105
        %v1264 = vpack.c.b16 %v1110, %v1108
        %v1265 = vpack.c.b16 %v1111, %v1109
        %v1266 = vpack.c.b16 %v1114, %v1112
        %v1267 = vpack.c.b16 %v1115, %v1113
        %v1268 = vpack.c.b16 %v1118, %v1116
        %v1269 = vpack.c.b16 %v1119, %v1117
        %v1270 = vpack.c.b16 %v1122, %v1120
        %v1271 = vpack.c.b16 %v1123, %v1121
        %v1272 = vpack.c.b16 %v1126, %v1124
        %v1273 = vpack.c.b16 %v1127, %v1125
        %v1274 = vpack.c.b16 %v1130, %v1128
        %v1275 = vpack.c.b16 %v1131, %v1129
        %v1276 = vpack.c.b16 %v1134, %v1132
        %v1277 = vpack.c.b16 %v1135, %v1133
        %v1278 = vpack.c.b16 %v1138, %v1136
        %v1279 = vpack.c.b16 %v1139, %v1137
        %v1280 = vpack.c.b16 %v1142, %v1140
        %v1281 = vpack.c.b16 %v1143, %v1141
        %v1282 = vpack.c.b16 %v1146, %v1144
        %v1283 = vpack.c.b16 %v1147, %v1145
        %v1284 = vpack.c.b16 %v1150, %v1148
        %v1285 = vpack.c.b16 %v1151, %v1149
        %v1286 = vpack.c.b16 %v1154, %v1152
        %v1287 = vpack.c.b16 %v1155, %v1153
        %v1288 = vpack.c.b16 %v1158, %v1156
        %v1289 = vpack.c.b16 %v1159, %v1157
        %v1290 = vpack.c.b16 %v1162, %v1160
        %v1291 = vpack.c.b16 %v1163, %v1161
        %1420 = vmatpush.bf16.msra.mxu0 %v1178
        %1421 = vmatpush.bf16.msra.mxu0 %v1176
        %1422 = vmatpush.bf16.msra.mxu0 %v1174
        %1423 = vmatpush.bf16.msra.mxu0 %v1172
        %1424 = vmatpush.bf16.msra.mxu0 %v1170
        %1425 = vmatpush.bf16.msra.mxu0 %v1168
        %1426 = vmatpush.bf16.msra.mxu0 %v1166
        %1427 = vmatpush.bf16.msra.mxu0 %v1164
        %1428 = vmatmul.bf16.gmra.mxu0 %v638
        %v1429 = vpop.f32.mrf.mxu0
        %v1430 = vadd.f32 %v776, %v1429
        %v1431 = vpop.f32.mrf.mxu0
        %1432 = vdwg.mxu0
        %1433 = vmatpush.bf16.msra.mxu0 %v1194
        %1434 = vmatpush.bf16.msra.mxu0 %v1192
        %1435 = vmatpush.bf16.msra.mxu0 %v1190
        %1436 = vmatpush.bf16.msra.mxu0 %v1188
        %1437 = vmatpush.bf16.msra.mxu0 %v1186
        %1438 = vmatpush.bf16.msra.mxu0 %v1184
        %1439 = vmatpush.bf16.msra.mxu0 %v1182
        %1440 = vmatpush.bf16.msra.mxu0 %v1180
        %1441 = vmatmul.bf16.gmra.mxu0 %v639
        %v1442 = vpop.f32.mrf.mxu0
        %v1443 = vadd.f32 %v1430, %v1442
        %v1444 = vpop.f32.mrf.mxu0
        %1445 = vdwg.mxu0
        %1446 = vmatpush.bf16.msra.mxu0 %v1210
        %1447 = vmatpush.bf16.msra.mxu0 %v1208
        %1448 = vmatpush.bf16.msra.mxu0 %v1206
        %1449 = vmatpush.bf16.msra.mxu0 %v1204
        %1450 = vmatpush.bf16.msra.mxu0 %v1202
        %1451 = vmatpush.bf16.msra.mxu0 %v1200
        %1452 = vmatpush.bf16.msra.mxu0 %v1198
        %1453 = vmatpush.bf16.msra.mxu0 %v1196
        %1454 = vmatmul.bf16.gmra.mxu0 %v640
        %v1455 = vpop.f32.mrf.mxu0
        %v1456 = vadd.f32 %v1443, %v1455
        %v1457 = vpop.f32.mrf.mxu0
        %1458 = vdwg.mxu0
        %1459 = vmatpush.bf16.msra.mxu0 %v1226
        %1460 = vmatpush.bf16.msra.mxu0 %v1224
        %1461 = vmatpush.bf16.msra.mxu0 %v1222
        %1462 = vmatpush.bf16.msra.mxu0 %v1220
        %1463 = vmatpush.bf16.msra.mxu0 %v1218
        %1464 = vmatpush.bf16.msra.mxu0 %v1216
        %1465 = vmatpush.bf16.msra.mxu0 %v1214
        %1466 = vmatpush.bf16.msra.mxu0 %v1212
        %1467 = vmatmul.bf16.gmra.mxu0 %v641
        %v1468 = vpop.f32.mrf.mxu0
        %v1469 = vadd.f32 %v1456, %v1468
        %v1470 = vpop.f32.mrf.mxu0
        %1471 = vdwg.mxu0
        %1472 = vmatpush.bf16.msra.mxu0 %v1242
        %1473 = vmatpush.bf16.msra.mxu0 %v1240
        %1474 = vmatpush.bf16.msra.mxu0 %v1238
        %1475 = vmatpush.bf16.msra.mxu0 %v1236
        %1476 = vmatpush.bf16.msra.mxu0 %v1234
        %1477 = vmatpush.bf16.msra.mxu0 %v1232
        %1478 = vmatpush.bf16.msra.mxu0 %v1230
        %1479 = vmatpush.bf16.msra.mxu0 %v1228
        %1480 = vmatmul.bf16.gmra.mxu0 %v642
        %v1481 = vpop.f32.mrf.mxu0
        %v1482 = vadd.f32 %v1469, %v1481
        %v1483 = vpop.f32.mrf.mxu0
        %1484 = vdwg.mxu0
        %1485 = vmatpush.bf16.msra.mxu0 %v1258
        %1486 = vmatpush.bf16.msra.mxu0 %v1256
        %1487 = vmatpush.bf16.msra.mxu0 %v1254
        %1488 = vmatpush.bf16.msra.mxu0 %v1252
        %1489 = vmatpush.bf16.msra.mxu0 %v1250
        %1490 = vmatpush.bf16.msra.mxu0 %v1248
        %1491 = vmatpush.bf16.msra.mxu0 %v1246
        %1492 = vmatpush.bf16.msra.mxu0 %v1244
        %1493 = vmatmul.bf16.gmra.mxu0 %v643
        %v1494 = vpop.f32.mrf.mxu0
        %v1495 = vadd.f32 %v1482, %v1494
        %v1496 = vpop.f32.mrf.mxu0
        %1497 = vdwg.mxu0
        %1498 = vmatpush.bf16.msra.mxu0 %v1274
        %1499 = vmatpush.bf16.msra.mxu0 %v1272
        %1500 = vmatpush.bf16.msra.mxu0 %v1270
        %1501 = vmatpush.bf16.msra.mxu0 %v1268
        %1502 = vmatpush.bf16.msra.mxu0 %v1266
        %1503 = vmatpush.bf16.msra.mxu0 %v1264
        %1504 = vmatpush.bf16.msra.mxu0 %v1262
        %1505 = vmatpush.bf16.msra.mxu0 %v1260
        %1506 = vmatmul.bf16.gmra.mxu0 %v644
        %v1507 = vpop.f32.mrf.mxu0
        %v1508 = vadd.f32 %v1495, %v1507
        %v1509 = vpop.f32.mrf.mxu0
        %1510 = vdwg.mxu0
        %1511 = vmatpush.bf16.msra.mxu0 %v1290
        %1512 = vmatpush.bf16.msra.mxu0 %v1288
        %1513 = vmatpush.bf16.msra.mxu0 %v1286
        %1514 = vmatpush.bf16.msra.mxu0 %v1284
        %1515 = vmatpush.bf16.msra.mxu0 %v1282
        %1516 = vmatpush.bf16.msra.mxu0 %v1280
        %1517 = vmatpush.bf16.msra.mxu0 %v1278
        %1518 = vmatpush.bf16.msra.mxu0 %v1276
        %1519 = vmatmul.bf16.gmra.mxu0 %v645
        %v1520 = vpop.f32.mrf.mxu0
        %v1521 = vadd.f32 %v1508, %v1520
        %v1522 = vpop.f32.mrf.mxu0
        %1523 = vdwg.mxu0
        %1524 = vmatpush.bf16.msra.mxu0 %v1179
        %1525 = vmatpush.bf16.msra.mxu0 %v1177
        %1526 = vmatpush.bf16.msra.mxu0 %v1175
        %1527 = vmatpush.bf16.msra.mxu0 %v1173
        %1528 = vmatpush.bf16.msra.mxu0 %v1171
        %1529 = vmatpush.bf16.msra.mxu0 %v1169
        %1530 = vmatpush.bf16.msra.mxu0 %v1167
        %1531 = vmatpush.bf16.msra.mxu0 %v1165
        %1532 = vmatmul.bf16.gmra.mxu0 %v638
        %v1533 = vpop.f32.mrf.mxu0
        %v1534 = vadd.f32 %v777, %v1533
        %v1535 = vpop.f32.mrf.mxu0
        %1536 = vdwg.mxu0
        %1537 = vmatpush.bf16.msra.mxu0 %v1195
        %1538 = vmatpush.bf16.msra.mxu0 %v1193
        %1539 = vmatpush.bf16.msra.mxu0 %v1191
        %1540 = vmatpush.bf16.msra.mxu0 %v1189
        %1541 = vmatpush.bf16.msra.mxu0 %v1187
        %1542 = vmatpush.bf16.msra.mxu0 %v1185
        %1543 = vmatpush.bf16.msra.mxu0 %v1183
        %1544 = vmatpush.bf16.msra.mxu0 %v1181
        %1545 = vmatmul.bf16.gmra.mxu0 %v639
        %v1546 = vpop.f32.mrf.mxu0
        %v1547 = vadd.f32 %v1534, %v1546
        %v1548 = vpop.f32.mrf.mxu0
        %1549 = vdwg.mxu0
        %1550 = vmatpush.bf16.msra.mxu0 %v1211
        %1551 = vmatpush.bf16.msra.mxu0 %v1209
        %1552 = vmatpush.bf16.msra.mxu0 %v1207
        %1553 = vmatpush.bf16.msra.mxu0 %v1205
        %1554 = vmatpush.bf16.msra.mxu0 %v1203
        %1555 = vmatpush.bf16.msra.mxu0 %v1201
        %1556 = vmatpush.bf16.msra.mxu0 %v1199
        %1557 = vmatpush.bf16.msra.mxu0 %v1197
        %1558 = vmatmul.bf16.gmra.mxu0 %v640
        %v1559 = vpop.f32.mrf.mxu0
        %v1560 = vadd.f32 %v1547, %v1559
        %v1561 = vpop.f32.mrf.mxu0
        %1562 = vdwg.mxu0
        %1563 = vmatpush.bf16.msra.mxu0 %v1227
        %1564 = vmatpush.bf16.msra.mxu0 %v1225
        %1565 = vmatpush.bf16.msra.mxu0 %v1223
        %1566 = vmatpush.bf16.msra.mxu0 %v1221
        %1567 = vmatpush.bf16.msra.mxu0 %v1219
        %1568 = vmatpush.bf16.msra.mxu0 %v1217
        %1569 = vmatpush.bf16.msra.mxu0 %v1215
        %1570 = vmatpush.bf16.msra.mxu0 %v1213
        %1571 = vmatmul.bf16.gmra.mxu0 %v641
        %v1572 = vpop.f32.mrf.mxu0
        %v1573 = vadd.f32 %v1560, %v1572
        %v1574 = vpop.f32.mrf.mxu0
        %1575 = vdwg.mxu0
        %1576 = vmatpush.bf16.msra.mxu0 %v1243
        %1577 = vmatpush.bf16.msra.mxu0 %v1241
        %1578 = vmatpush.bf16.msra.mxu0 %v1239
        %1579 = vmatpush.bf16.msra.mxu0 %v1237
        %1580 = vmatpush.bf16.msra.mxu0 %v1235
        %1581 = vmatpush.bf16.msra.mxu0 %v1233
        %1582 = vmatpush.bf16.msra.mxu0 %v1231
        %1583 = vmatpush.bf16.msra.mxu0 %v1229
        %1584 = vmatmul.bf16.gmra.mxu0 %v642
        %v1585 = vpop.f32.mrf.mxu0
        %v1586 = vadd.f32 %v1573, %v1585
        %v1587 = vpop.f32.mrf.mxu0
        %1588 = vdwg.mxu0
        %1589 = vmatpush.bf16.msra.mxu0 %v1259
        %1590 = vmatpush.bf16.msra.mxu0 %v1257
        %1591 = vmatpush.bf16.msra.mxu0 %v1255
        %1592 = vmatpush.bf16.msra.mxu0 %v1253
        %1593 = vmatpush.bf16.msra.mxu0 %v1251
        %1594 = vmatpush.bf16.msra.mxu0 %v1249
        %1595 = vmatpush.bf16.msra.mxu0 %v1247
        %1596 = vmatpush.bf16.msra.mxu0 %v1245
        %1597 = vmatmul.bf16.gmra.mxu0 %v643
        %v1598 = vpop.f32.mrf.mxu0
        %v1599 = vadd.f32 %v1586, %v1598
        %v1600 = vpop.f32.mrf.mxu0
        %1601 = vdwg.mxu0
        %1602 = vmatpush.bf16.msra.mxu0 %v1275
        %1603 = vmatpush.bf16.msra.mxu0 %v1273
        %1604 = vmatpush.bf16.msra.mxu0 %v1271
        %1605 = vmatpush.bf16.msra.mxu0 %v1269
        %1606 = vmatpush.bf16.msra.mxu0 %v1267
        %1607 = vmatpush.bf16.msra.mxu0 %v1265
        %1608 = vmatpush.bf16.msra.mxu0 %v1263
        %1609 = vmatpush.bf16.msra.mxu0 %v1261
        %1610 = vmatmul.bf16.gmra.mxu0 %v644
        %v1611 = vpop.f32.mrf.mxu0
        %v1612 = vadd.f32 %v1599, %v1611
        %v1613 = vpop.f32.mrf.mxu0
        %1614 = vdwg.mxu0
        %1615 = vmatpush.bf16.msra.mxu0 %v1291
        %1616 = vmatpush.bf16.msra.mxu0 %v1289
        %1617 = vmatpush.bf16.msra.mxu0 %v1287
        %1618 = vmatpush.bf16.msra.mxu0 %v1285
        %1619 = vmatpush.bf16.msra.mxu0 %v1283
        %1620 = vmatpush.bf16.msra.mxu0 %v1281
        %1621 = vmatpush.bf16.msra.mxu0 %v1279
        %1622 = vmatpush.bf16.msra.mxu0 %v1277
        %1623 = vmatmul.bf16.gmra.mxu0 %v645
        %v1624 = vpop.f32.mrf.mxu0
        %v1625 = vadd.f32 %v1612, %v1624
        %v1626 = vpop.f32.mrf.mxu0
        %1627 = vdwg.mxu0
        %v1628 = vmax.f32 %v1521, 0.0
        %v1629 = vmax.f32 %v1625, 0.0
        %v1630 = vld [vmem:[#allocation2] sm:$0xff]
        %v1631 = vld [vmem:[#allocation2 + $0x8] sm:$0xff]
        %v1632 = vld [vmem:[#allocation2 + $0x10] sm:$0xff]
        %v1633 = vld [vmem:[#allocation2 + $0x18] sm:$0xff]
        %v1634 = vld [vmem:[#allocation2 + $0x20] sm:$0xff]
        %v1635 = vld [vmem:[#allocation2 + $0x28] sm:$0xff]
        %v1636 = vld [vmem:[#allocation2 + $0x30] sm:$0xff]
        %v1637 = vld [vmem:[#allocation2 + $0x38] sm:$0xff]
        %v1638 = vpack.c.bf16 %v1628, %v1628
        %v1639 = vpack.c.bf16 %v1629, %v1629
        %v1640 = vld [vmem:[%s541] sm:$0xff]
        %v1641 = vld [vmem:[%s541 + $0x8] sm:$0xff]
        %v1642 = vld [vmem:[%s541 + $0x10] sm:$0xff]
        %v1643 = vld [vmem:[%s541 + $0x18] sm:$0xff]
        %v1644 = vld [vmem:[%s541 + $0x20] sm:$0xff]
        %v1645 = vld [vmem:[%s541 + $0x28] sm:$0xff]
        %v1646 = vld [vmem:[%s541 + $0x30] sm:$0xff]
        %v1647 = vld [vmem:[%s541 + $0x38] sm:$0xff]
        %v1648 = vld [vmem:[%s541 + $0x40] sm:$0xff]
        %v1649 = vld [vmem:[%s541 + $0x48] sm:$0xff]
        %v1650 = vld [vmem:[%s541 + $0x50] sm:$0xff]
        %v1651 = vld [vmem:[%s541 + $0x58] sm:$0xff]
        %v1652 = vld [vmem:[%s541 + $0x60] sm:$0xff]
        %v1653 = vld [vmem:[%s541 + $0x68] sm:$0xff]
        %v1654 = vld [vmem:[%s541 + $0x70] sm:$0xff]
        %v1655 = vld [vmem:[%s541 + $0x78] sm:$0xff]
        %v1656 = vld [vmem:[%s541 + $0x80] sm:$0xff]
        %v1657 = vld [vmem:[%s541 + $0x88] sm:$0xff]
        %v1658 = vld [vmem:[%s541 + $0x90] sm:$0xff]
        %v1659 = vld [vmem:[%s541 + $0x98] sm:$0xff]
        %v1660 = vld [vmem:[%s541 + $0xa0] sm:$0xff]
        %v1661 = vld [vmem:[%s541 + $0xa8] sm:$0xff]
        %v1662 = vld [vmem:[%s541 + $0xb0] sm:$0xff]
        %v1663 = vld [vmem:[%s541 + $0xb8] sm:$0xff]
        %v1664 = vld [vmem:[%s541 + $0xc0] sm:$0xff]
        %v1665 = vld [vmem:[%s541 + $0xc8] sm:$0xff]
        %v1666 = vld [vmem:[%s541 + $0xd0] sm:$0xff]
        %v1667 = vld [vmem:[%s541 + $0xd8] sm:$0xff]
        %v1668 = vld [vmem:[%s541 + $0xe0] sm:$0xff]
        %v1669 = vld [vmem:[%s541 + $0xe8] sm:$0xff]
        %v1670 = vld [vmem:[%s541 + $0xf0] sm:$0xff]
        %v1671 = vld [vmem:[%s541 + $0xf8] sm:$0xff]
        %v1672 = vld [vmem:[%s541 + $0x100] sm:$0xff]
        %v1673 = vld [vmem:[%s541 + $0x108] sm:$0xff]
        %v1674 = vld [vmem:[%s541 + $0x110] sm:$0xff]
        %v1675 = vld [vmem:[%s541 + $0x118] sm:$0xff]
        %v1676 = vld [vmem:[%s541 + $0x120] sm:$0xff]
        %v1677 = vld [vmem:[%s541 + $0x128] sm:$0xff]
        %v1678 = vld [vmem:[%s541 + $0x130] sm:$0xff]
        %v1679 = vld [vmem:[%s541 + $0x138] sm:$0xff]
        %v1680 = vld [vmem:[%s541 + $0x140] sm:$0xff]
        %v1681 = vld [vmem:[%s541 + $0x148] sm:$0xff]
        %v1682 = vld [vmem:[%s541 + $0x150] sm:$0xff]
        %v1683 = vld [vmem:[%s541 + $0x158] sm:$0xff]
        %v1684 = vld [vmem:[%s541 + $0x160] sm:$0xff]
        %v1685 = vld [vmem:[%s541 + $0x168] sm:$0xff]
        %v1686 = vld [vmem:[%s541 + $0x170] sm:$0xff]
        %v1687 = vld [vmem:[%s541 + $0x178] sm:$0xff]
        %v1688 = vld [vmem:[%s541 + $0x180] sm:$0xff]
        %v1689 = vld [vmem:[%s541 + $0x188] sm:$0xff]
        %v1690 = vld [vmem:[%s541 + $0x190] sm:$0xff]
        %v1691 = vld [vmem:[%s541 + $0x198] sm:$0xff]
        %v1692 = vld [vmem:[%s541 + $0x1a0] sm:$0xff]
        %v1693 = vld [vmem:[%s541 + $0x1a8] sm:$0xff]
        %v1694 = vld [vmem:[%s541 + $0x1b0] sm:$0xff]
        %v1695 = vld [vmem:[%s541 + $0x1b8] sm:$0xff]
        %v1696 = vld [vmem:[%s541 + $0x1c0] sm:$0xff]
        %v1697 = vld [vmem:[%s541 + $0x1c8] sm:$0xff]
        %v1698 = vld [vmem:[%s541 + $0x1d0] sm:$0xff]
        %v1699 = vld [vmem:[%s541 + $0x1d8] sm:$0xff]
        %v1700 = vld [vmem:[%s541 + $0x1e0] sm:$0xff]
        %v1701 = vld [vmem:[%s541 + $0x1e8] sm:$0xff]
        %v1702 = vld [vmem:[%s541 + $0x1f0] sm:$0xff]
        %v1703 = vld [vmem:[%s541 + $0x1f8] sm:$0xff]
        %v1704 = vld [vmem:[%s541 + $0x200] sm:$0xff]
        %v1705 = vld [vmem:[%s541 + $0x208] sm:$0xff]
        %v1706 = vld [vmem:[%s541 + $0x210] sm:$0xff]
        %v1707 = vld [vmem:[%s541 + $0x218] sm:$0xff]
        %v1708 = vld [vmem:[%s541 + $0x220] sm:$0xff]
        %v1709 = vld [vmem:[%s541 + $0x228] sm:$0xff]
        %v1710 = vld [vmem:[%s541 + $0x230] sm:$0xff]
        %v1711 = vld [vmem:[%s541 + $0x238] sm:$0xff]
        %v1712 = vld [vmem:[%s541 + $0x240] sm:$0xff]
        %v1713 = vld [vmem:[%s541 + $0x248] sm:$0xff]
        %v1714 = vld [vmem:[%s541 + $0x250] sm:$0xff]
        %v1715 = vld [vmem:[%s541 + $0x258] sm:$0xff]
        %v1716 = vld [vmem:[%s541 + $0x260] sm:$0xff]
        %v1717 = vld [vmem:[%s541 + $0x268] sm:$0xff]
        %v1718 = vld [vmem:[%s541 + $0x270] sm:$0xff]
        %v1719 = vld [vmem:[%s541 + $0x278] sm:$0xff]
        %v1720 = vld [vmem:[%s541 + $0x280] sm:$0xff]
        %v1721 = vld [vmem:[%s541 + $0x288] sm:$0xff]
        %v1722 = vld [vmem:[%s541 + $0x290] sm:$0xff]
        %v1723 = vld [vmem:[%s541 + $0x298] sm:$0xff]
        %v1724 = vld [vmem:[%s541 + $0x2a0] sm:$0xff]
        %v1725 = vld [vmem:[%s541 + $0x2a8] sm:$0xff]
        %v1726 = vld [vmem:[%s541 + $0x2b0] sm:$0xff]
        %v1727 = vld [vmem:[%s541 + $0x2b8] sm:$0xff]
        %v1728 = vld [vmem:[%s541 + $0x2c0] sm:$0xff]
        %v1729 = vld [vmem:[%s541 + $0x2c8] sm:$0xff]
        %v1730 = vld [vmem:[%s541 + $0x2d0] sm:$0xff]
        %v1731 = vld [vmem:[%s541 + $0x2d8] sm:$0xff]
        %v1732 = vld [vmem:[%s541 + $0x2e0] sm:$0xff]
        %v1733 = vld [vmem:[%s541 + $0x2e8] sm:$0xff]
        %v1734 = vld [vmem:[%s541 + $0x2f0] sm:$0xff]
        %v1735 = vld [vmem:[%s541 + $0x2f8] sm:$0xff]
        %v1736 = vld [vmem:[%s541 + $0x300] sm:$0xff]
        %v1737 = vld [vmem:[%s541 + $0x308] sm:$0xff]
        %v1738 = vld [vmem:[%s541 + $0x310] sm:$0xff]
        %v1739 = vld [vmem:[%s541 + $0x318] sm:$0xff]
        %v1740 = vld [vmem:[%s541 + $0x320] sm:$0xff]
        %v1741 = vld [vmem:[%s541 + $0x328] sm:$0xff]
        %v1742 = vld [vmem:[%s541 + $0x330] sm:$0xff]
        %v1743 = vld [vmem:[%s541 + $0x338] sm:$0xff]
        %v1744 = vld [vmem:[%s541 + $0x340] sm:$0xff]
        %v1745 = vld [vmem:[%s541 + $0x348] sm:$0xff]
        %v1746 = vld [vmem:[%s541 + $0x350] sm:$0xff]
        %v1747 = vld [vmem:[%s541 + $0x358] sm:$0xff]
        %v1748 = vld [vmem:[%s541 + $0x360] sm:$0xff]
        %v1749 = vld [vmem:[%s541 + $0x368] sm:$0xff]
        %v1750 = vld [vmem:[%s541 + $0x370] sm:$0xff]
        %v1751 = vld [vmem:[%s541 + $0x378] sm:$0xff]
        %v1752 = vld [vmem:[%s541 + $0x380] sm:$0xff]
        %v1753 = vld [vmem:[%s541 + $0x388] sm:$0xff]
        %v1754 = vld [vmem:[%s541 + $0x390] sm:$0xff]
        %v1755 = vld [vmem:[%s541 + $0x398] sm:$0xff]
        %v1756 = vld [vmem:[%s541 + $0x3a0] sm:$0xff]
        %v1757 = vld [vmem:[%s541 + $0x3a8] sm:$0xff]
        %v1758 = vld [vmem:[%s541 + $0x3b0] sm:$0xff]
        %v1759 = vld [vmem:[%s541 + $0x3b8] sm:$0xff]
        %v1760 = vld [vmem:[%s541 + $0x3c0] sm:$0xff]
        %v1761 = vld [vmem:[%s541 + $0x3c8] sm:$0xff]
        %v1762 = vld [vmem:[%s541 + $0x3d0] sm:$0xff]
        %v1763 = vld [vmem:[%s541 + $0x3d8] sm:$0xff]
        %v1764 = vld [vmem:[%s541 + $0x3e0] sm:$0xff]
        %v1765 = vld [vmem:[%s541 + $0x3e8] sm:$0xff]
        %v1766 = vld [vmem:[%s541 + $0x3f0] sm:$0xff]
        %v1767 = vld [vmem:[%s541 + $0x3f8] sm:$0xff]
        %v1896 = vunpack.c.l.b16 %v1640
        %v1897 = vunpack.c.h.b16 %v1640
        %v1898 = vunpack.c.l.b16 %v1641
        %v1899 = vunpack.c.h.b16 %v1641
        %v1900 = vunpack.c.l.b16 %v1642
        %v1901 = vunpack.c.h.b16 %v1642
        %v1902 = vunpack.c.l.b16 %v1643
        %v1903 = vunpack.c.h.b16 %v1643
        %v1904 = vunpack.c.l.b16 %v1644
        %v1905 = vunpack.c.h.b16 %v1644
        %v1906 = vunpack.c.l.b16 %v1645
        %v1907 = vunpack.c.h.b16 %v1645
        %v1908 = vunpack.c.l.b16 %v1646
        %v1909 = vunpack.c.h.b16 %v1646
        %v1910 = vunpack.c.l.b16 %v1647
        %v1911 = vunpack.c.h.b16 %v1647
        %v1912 = vunpack.c.l.b16 %v1648
        %v1913 = vunpack.c.h.b16 %v1648
        %v1914 = vunpack.c.l.b16 %v1649
        %v1915 = vunpack.c.h.b16 %v1649
        %v1916 = vunpack.c.l.b16 %v1650
        %v1917 = vunpack.c.h.b16 %v1650
        %v1918 = vunpack.c.l.b16 %v1651
        %v1919 = vunpack.c.h.b16 %v1651
        %v1920 = vunpack.c.l.b16 %v1652
        %v1921 = vunpack.c.h.b16 %v1652
        %v1922 = vunpack.c.l.b16 %v1653
        %v1923 = vunpack.c.h.b16 %v1653
        %v1924 = vunpack.c.l.b16 %v1654
        %v1925 = vunpack.c.h.b16 %v1654
        %v1926 = vunpack.c.l.b16 %v1655
        %v1927 = vunpack.c.h.b16 %v1655
        %v1928 = vunpack.c.l.b16 %v1656
        %v1929 = vunpack.c.h.b16 %v1656
        %v1930 = vunpack.c.l.b16 %v1657
        %v1931 = vunpack.c.h.b16 %v1657
        %v1932 = vunpack.c.l.b16 %v1658
        %v1933 = vunpack.c.h.b16 %v1658
        %v1934 = vunpack.c.l.b16 %v1659
        %v1935 = vunpack.c.h.b16 %v1659
        %v1936 = vunpack.c.l.b16 %v1660
        %v1937 = vunpack.c.h.b16 %v1660
        %v1938 = vunpack.c.l.b16 %v1661
        %v1939 = vunpack.c.h.b16 %v1661
        %v1940 = vunpack.c.l.b16 %v1662
        %v1941 = vunpack.c.h.b16 %v1662
        %v1942 = vunpack.c.l.b16 %v1663
        %v1943 = vunpack.c.h.b16 %v1663
        %v1944 = vunpack.c.l.b16 %v1664
        %v1945 = vunpack.c.h.b16 %v1664
        %v1946 = vunpack.c.l.b16 %v1665
        %v1947 = vunpack.c.h.b16 %v1665
        %v1948 = vunpack.c.l.b16 %v1666
        %v1949 = vunpack.c.h.b16 %v1666
        %v1950 = vunpack.c.l.b16 %v1667
        %v1951 = vunpack.c.h.b16 %v1667
        %v1952 = vunpack.c.l.b16 %v1668
        %v1953 = vunpack.c.h.b16 %v1668
        %v1954 = vunpack.c.l.b16 %v1669
        %v1955 = vunpack.c.h.b16 %v1669
        %v1956 = vunpack.c.l.b16 %v1670
        %v1957 = vunpack.c.h.b16 %v1670
        %v1958 = vunpack.c.l.b16 %v1671
        %v1959 = vunpack.c.h.b16 %v1671
        %v1960 = vunpack.c.l.b16 %v1672
        %v1961 = vunpack.c.h.b16 %v1672
        %v1962 = vunpack.c.l.b16 %v1673
        %v1963 = vunpack.c.h.b16 %v1673
        %v1964 = vunpack.c.l.b16 %v1674
        %v1965 = vunpack.c.h.b16 %v1674
        %v1966 = vunpack.c.l.b16 %v1675
        %v1967 = vunpack.c.h.b16 %v1675
        %v1968 = vunpack.c.l.b16 %v1676
        %v1969 = vunpack.c.h.b16 %v1676
        %v1970 = vunpack.c.l.b16 %v1677
        %v1971 = vunpack.c.h.b16 %v1677
        %v1972 = vunpack.c.l.b16 %v1678
        %v1973 = vunpack.c.h.b16 %v1678
        %v1974 = vunpack.c.l.b16 %v1679
        %v1975 = vunpack.c.h.b16 %v1679
        %v1976 = vunpack.c.l.b16 %v1680
        %v1977 = vunpack.c.h.b16 %v1680
        %v1978 = vunpack.c.l.b16 %v1681
        %v1979 = vunpack.c.h.b16 %v1681
        %v1980 = vunpack.c.l.b16 %v1682
        %v1981 = vunpack.c.h.b16 %v1682
        %v1982 = vunpack.c.l.b16 %v1683
        %v1983 = vunpack.c.h.b16 %v1683
        %v1984 = vunpack.c.l.b16 %v1684
        %v1985 = vunpack.c.h.b16 %v1684
        %v1986 = vunpack.c.l.b16 %v1685
        %v1987 = vunpack.c.h.b16 %v1685
        %v1988 = vunpack.c.l.b16 %v1686
        %v1989 = vunpack.c.h.b16 %v1686
        %v1990 = vunpack.c.l.b16 %v1687
        %v1991 = vunpack.c.h.b16 %v1687
        %v1992 = vunpack.c.l.b16 %v1688
        %v1993 = vunpack.c.h.b16 %v1688
        %v1994 = vunpack.c.l.b16 %v1689
        %v1995 = vunpack.c.h.b16 %v1689
        %v1996 = vunpack.c.l.b16 %v1690
        %v1997 = vunpack.c.h.b16 %v1690
        %v1998 = vunpack.c.l.b16 %v1691
        %v1999 = vunpack.c.h.b16 %v1691
        %v2000 = vunpack.c.l.b16 %v1692
        %v2001 = vunpack.c.h.b16 %v1692
        %v2002 = vunpack.c.l.b16 %v1693
        %v2003 = vunpack.c.h.b16 %v1693
        %v2004 = vunpack.c.l.b16 %v1694
        %v2005 = vunpack.c.h.b16 %v1694
        %v2006 = vunpack.c.l.b16 %v1695
        %v2007 = vunpack.c.h.b16 %v1695
        %v2008 = vunpack.c.l.b16 %v1696
        %v2009 = vunpack.c.h.b16 %v1696
        %v2010 = vunpack.c.l.b16 %v1697
        %v2011 = vunpack.c.h.b16 %v1697
        %v2012 = vunpack.c.l.b16 %v1698
        %v2013 = vunpack.c.h.b16 %v1698
        %v2014 = vunpack.c.l.b16 %v1699
        %v2015 = vunpack.c.h.b16 %v1699
        %v2016 = vunpack.c.l.b16 %v1700
        %v2017 = vunpack.c.h.b16 %v1700
        %v2018 = vunpack.c.l.b16 %v1701
        %v2019 = vunpack.c.h.b16 %v1701
        %v2020 = vunpack.c.l.b16 %v1702
        %v2021 = vunpack.c.h.b16 %v1702
        %v2022 = vunpack.c.l.b16 %v1703
        %v2023 = vunpack.c.h.b16 %v1703
        %v2024 = vunpack.c.l.b16 %v1704
        %v2025 = vunpack.c.h.b16 %v1704
        %v2026 = vunpack.c.l.b16 %v1705
        %v2027 = vunpack.c.h.b16 %v1705
        %v2028 = vunpack.c.l.b16 %v1706
        %v2029 = vunpack.c.h.b16 %v1706
        %v2030 = vunpack.c.l.b16 %v1707
        %v2031 = vunpack.c.h.b16 %v1707
        %v2032 = vunpack.c.l.b16 %v1708
        %v2033 = vunpack.c.h.b16 %v1708
        %v2034 = vunpack.c.l.b16 %v1709
        %v2035 = vunpack.c.h.b16 %v1709
        %v2036 = vunpack.c.l.b16 %v1710
        %v2037 = vunpack.c.h.b16 %v1710
        %v2038 = vunpack.c.l.b16 %v1711
        %v2039 = vunpack.c.h.b16 %v1711
        %v2040 = vunpack.c.l.b16 %v1712
        %v2041 = vunpack.c.h.b16 %v1712
        %v2042 = vunpack.c.l.b16 %v1713
        %v2043 = vunpack.c.h.b16 %v1713
        %v2044 = vunpack.c.l.b16 %v1714
        %v2045 = vunpack.c.h.b16 %v1714
        %v2046 = vunpack.c.l.b16 %v1715
        %v2047 = vunpack.c.h.b16 %v1715
        %v2048 = vunpack.c.l.b16 %v1716
        %v2049 = vunpack.c.h.b16 %v1716
        %v2050 = vunpack.c.l.b16 %v1717
        %v2051 = vunpack.c.h.b16 %v1717
        %v2052 = vunpack.c.l.b16 %v1718
        %v2053 = vunpack.c.h.b16 %v1718
        %v2054 = vunpack.c.l.b16 %v1719
        %v2055 = vunpack.c.h.b16 %v1719
        %v2056 = vunpack.c.l.b16 %v1720
        %v2057 = vunpack.c.h.b16 %v1720
        %v2058 = vunpack.c.l.b16 %v1721
        %v2059 = vunpack.c.h.b16 %v1721
        %v2060 = vunpack.c.l.b16 %v1722
        %v2061 = vunpack.c.h.b16 %v1722
        %v2062 = vunpack.c.l.b16 %v1723
        %v2063 = vunpack.c.h.b16 %v1723
        %v2064 = vunpack.c.l.b16 %v1724
        %v2065 = vunpack.c.h.b16 %v1724
        %v2066 = vunpack.c.l.b16 %v1725
        %v2067 = vunpack.c.h.b16 %v1725
        %v2068 = vunpack.c.l.b16 %v1726
        %v2069 = vunpack.c.h.b16 %v1726
        %v2070 = vunpack.c.l.b16 %v1727
        %v2071 = vunpack.c.h.b16 %v1727
        %v2072 = vunpack.c.l.b16 %v1728
        %v2073 = vunpack.c.h.b16 %v1728
        %v2074 = vunpack.c.l.b16 %v1729
        %v2075 = vunpack.c.h.b16 %v1729
        %v2076 = vunpack.c.l.b16 %v1730
        %v2077 = vunpack.c.h.b16 %v1730
        %v2078 = vunpack.c.l.b16 %v1731
        %v2079 = vunpack.c.h.b16 %v1731
        %v2080 = vunpack.c.l.b16 %v1732
        %v2081 = vunpack.c.h.b16 %v1732
        %v2082 = vunpack.c.l.b16 %v1733
        %v2083 = vunpack.c.h.b16 %v1733
        %v2084 = vunpack.c.l.b16 %v1734
        %v2085 = vunpack.c.h.b16 %v1734
        %v2086 = vunpack.c.l.b16 %v1735
        %v2087 = vunpack.c.h.b16 %v1735
        %v2088 = vunpack.c.l.b16 %v1736
        %v2089 = vunpack.c.h.b16 %v1736
        %v2090 = vunpack.c.l.b16 %v1737
        %v2091 = vunpack.c.h.b16 %v1737
        %v2092 = vunpack.c.l.b16 %v1738
        %v2093 = vunpack.c.h.b16 %v1738
        %v2094 = vunpack.c.l.b16 %v1739
        %v2095 = vunpack.c.h.b16 %v1739
        %v2096 = vunpack.c.l.b16 %v1740
        %v2097 = vunpack.c.h.b16 %v1740
        %v2098 = vunpack.c.l.b16 %v1741
        %v2099 = vunpack.c.h.b16 %v1741
        %v2100 = vunpack.c.l.b16 %v1742
        %v2101 = vunpack.c.h.b16 %v1742
        %v2102 = vunpack.c.l.b16 %v1743
        %v2103 = vunpack.c.h.b16 %v1743
        %v2104 = vunpack.c.l.b16 %v1744
        %v2105 = vunpack.c.h.b16 %v1744
        %v2106 = vunpack.c.l.b16 %v1745
        %v2107 = vunpack.c.h.b16 %v1745
        %v2108 = vunpack.c.l.b16 %v1746
        %v2109 = vunpack.c.h.b16 %v1746
        %v2110 = vunpack.c.l.b16 %v1747
        %v2111 = vunpack.c.h.b16 %v1747
        %v2112 = vunpack.c.l.b16 %v1748
        %v2113 = vunpack.c.h.b16 %v1748
        %v2114 = vunpack.c.l.b16 %v1749
        %v2115 = vunpack.c.h.b16 %v1749
        %v2116 = vunpack.c.l.b16 %v1750
        %v2117 = vunpack.c.h.b16 %v1750
        %v2118 = vunpack.c.l.b16 %v1751
        %v2119 = vunpack.c.h.b16 %v1751
        %v2120 = vunpack.c.l.b16 %v1752
        %v2121 = vunpack.c.h.b16 %v1752
        %v2122 = vunpack.c.l.b16 %v1753
        %v2123 = vunpack.c.h.b16 %v1753
        %v2124 = vunpack.c.l.b16 %v1754
        %v2125 = vunpack.c.h.b16 %v1754
        %v2126 = vunpack.c.l.b16 %v1755
        %v2127 = vunpack.c.h.b16 %v1755
        %v2128 = vunpack.c.l.b16 %v1756
        %v2129 = vunpack.c.h.b16 %v1756
        %v2130 = vunpack.c.l.b16 %v1757
        %v2131 = vunpack.c.h.b16 %v1757
        %v2132 = vunpack.c.l.b16 %v1758
        %v2133 = vunpack.c.h.b16 %v1758
        %v2134 = vunpack.c.l.b16 %v1759
        %v2135 = vunpack.c.h.b16 %v1759
        %v2136 = vunpack.c.l.b16 %v1760
        %v2137 = vunpack.c.h.b16 %v1760
        %v2138 = vunpack.c.l.b16 %v1761
        %v2139 = vunpack.c.h.b16 %v1761
        %v2140 = vunpack.c.l.b16 %v1762
        %v2141 = vunpack.c.h.b16 %v1762
        %v2142 = vunpack.c.l.b16 %v1763
        %v2143 = vunpack.c.h.b16 %v1763
        %v2144 = vunpack.c.l.b16 %v1764
        %v2145 = vunpack.c.h.b16 %v1764
        %v2146 = vunpack.c.l.b16 %v1765
        %v2147 = vunpack.c.h.b16 %v1765
        %v2148 = vunpack.c.l.b16 %v1766
        %v2149 = vunpack.c.h.b16 %v1766
        %v2150 = vunpack.c.l.b16 %v1767
        %v2151 = vunpack.c.h.b16 %v1767
        %v2152 = vpack.c.b16 %v1904, %v1896
        %v2153 = vpack.c.b16 %v1905, %v1897
        %v2154 = vpack.c.b16 %v1906, %v1898
        %v2155 = vpack.c.b16 %v1907, %v1899
        %v2156 = vpack.c.b16 %v1908, %v1900
        %v2157 = vpack.c.b16 %v1909, %v1901
        %v2158 = vpack.c.b16 %v1910, %v1902
        %v2159 = vpack.c.b16 %v1911, %v1903
        %v2160 = vpack.c.b16 %v1920, %v1912
        %v2161 = vpack.c.b16 %v1921, %v1913
        %v2162 = vpack.c.b16 %v1922, %v1914
        %v2163 = vpack.c.b16 %v1923, %v1915
        %v2164 = vpack.c.b16 %v1924, %v1916
        %v2165 = vpack.c.b16 %v1925, %v1917
        %v2166 = vpack.c.b16 %v1926, %v1918
        %v2167 = vpack.c.b16 %v1927, %v1919
        %v2168 = vpack.c.b16 %v1936, %v1928
        %v2169 = vpack.c.b16 %v1937, %v1929
        %v2170 = vpack.c.b16 %v1938, %v1930
        %v2171 = vpack.c.b16 %v1939, %v1931
        %v2172 = vpack.c.b16 %v1940, %v1932
        %v2173 = vpack.c.b16 %v1941, %v1933
        %v2174 = vpack.c.b16 %v1942, %v1934
        %v2175 = vpack.c.b16 %v1943, %v1935
        %v2176 = vpack.c.b16 %v1952, %v1944
        %v2177 = vpack.c.b16 %v1953, %v1945
        %v2178 = vpack.c.b16 %v1954, %v1946
        %v2179 = vpack.c.b16 %v1955, %v1947
        %v2180 = vpack.c.b16 %v1956, %v1948
        %v2181 = vpack.c.b16 %v1957, %v1949
        %v2182 = vpack.c.b16 %v1958, %v1950
        %v2183 = vpack.c.b16 %v1959, %v1951
        %v2184 = vpack.c.b16 %v1968, %v1960
        %v2185 = vpack.c.b16 %v1969, %v1961
        %v2186 = vpack.c.b16 %v1970, %v1962
        %v2187 = vpack.c.b16 %v1971, %v1963
        %v2188 = vpack.c.b16 %v1972, %v1964
        %v2189 = vpack.c.b16 %v1973, %v1965
        %v2190 = vpack.c.b16 %v1974, %v1966
        %v2191 = vpack.c.b16 %v1975, %v1967
        %v2192 = vpack.c.b16 %v1984, %v1976
        %v2193 = vpack.c.b16 %v1985, %v1977
        %v2194 = vpack.c.b16 %v1986, %v1978
        %v2195 = vpack.c.b16 %v1987, %v1979
        %v2196 = vpack.c.b16 %v1988, %v1980
        %v2197 = vpack.c.b16 %v1989, %v1981
        %v2198 = vpack.c.b16 %v1990, %v1982
        %v2199 = vpack.c.b16 %v1991, %v1983
        %v2200 = vpack.c.b16 %v2000, %v1992
        %v2201 = vpack.c.b16 %v2001, %v1993
        %v2202 = vpack.c.b16 %v2002, %v1994
        %v2203 = vpack.c.b16 %v2003, %v1995
        %v2204 = vpack.c.b16 %v2004, %v1996
        %v2205 = vpack.c.b16 %v2005, %v1997
        %v2206 = vpack.c.b16 %v2006, %v1998
        %v2207 = vpack.c.b16 %v2007, %v1999
        %v2208 = vpack.c.b16 %v2016, %v2008
        %v2209 = vpack.c.b16 %v2017, %v2009
        %v2210 = vpack.c.b16 %v2018, %v2010
        %v2211 = vpack.c.b16 %v2019, %v2011
        %v2212 = vpack.c.b16 %v2020, %v2012
        %v2213 = vpack.c.b16 %v2021, %v2013
        %v2214 = vpack.c.b16 %v2022, %v2014
        %v2215 = vpack.c.b16 %v2023, %v2015
        %v2216 = vpack.c.b16 %v2032, %v2024
        %v2217 = vpack.c.b16 %v2033, %v2025
        %v2218 = vpack.c.b16 %v2034, %v2026
        %v2219 = vpack.c.b16 %v2035, %v2027
        %v2220 = vpack.c.b16 %v2036, %v2028
        %v2221 = vpack.c.b16 %v2037, %v2029
        %v2222 = vpack.c.b16 %v2038, %v2030
        %v2223 = vpack.c.b16 %v2039, %v2031
        %v2224 = vpack.c.b16 %v2048, %v2040
        %v2225 = vpack.c.b16 %v2049, %v2041
        %v2226 = vpack.c.b16 %v2050, %v2042
        %v2227 = vpack.c.b16 %v2051, %v2043
        %v2228 = vpack.c.b16 %v2052, %v2044
        %v2229 = vpack.c.b16 %v2053, %v2045
        %v2230 = vpack.c.b16 %v2054, %v2046
        %v2231 = vpack.c.b16 %v2055, %v2047
        %v2232 = vpack.c.b16 %v2064, %v2056
        %v2233 = vpack.c.b16 %v2065, %v2057
        %v2234 = vpack.c.b16 %v2066, %v2058
        %v2235 = vpack.c.b16 %v2067, %v2059
        %v2236 = vpack.c.b16 %v2068, %v2060
        %v2237 = vpack.c.b16 %v2069, %v2061
        %v2238 = vpack.c.b16 %v2070, %v2062
        %v2239 = vpack.c.b16 %v2071, %v2063
        %v2240 = vpack.c.b16 %v2080, %v2072
        %v2241 = vpack.c.b16 %v2081, %v2073
        %v2242 = vpack.c.b16 %v2082, %v2074
        %v2243 = vpack.c.b16 %v2083, %v2075
        %v2244 = vpack.c.b16 %v2084, %v2076
        %v2245 = vpack.c.b16 %v2085, %v2077
        %v2246 = vpack.c.b16 %v2086, %v2078
        %v2247 = vpack.c.b16 %v2087, %v2079
        %v2248 = vpack.c.b16 %v2096, %v2088
        %v2249 = vpack.c.b16 %v2097, %v2089
        %v2250 = vpack.c.b16 %v2098, %v2090
        %v2251 = vpack.c.b16 %v2099, %v2091
        %v2252 = vpack.c.b16 %v2100, %v2092
        %v2253 = vpack.c.b16 %v2101, %v2093
        %v2254 = vpack.c.b16 %v2102, %v2094
        %v2255 = vpack.c.b16 %v2103, %v2095
        %v2256 = vpack.c.b16 %v2112, %v2104
        %v2257 = vpack.c.b16 %v2113, %v2105
        %v2258 = vpack.c.b16 %v2114, %v2106
        %v2259 = vpack.c.b16 %v2115, %v2107
        %v2260 = vpack.c.b16 %v2116, %v2108
        %v2261 = vpack.c.b16 %v2117, %v2109
        %v2262 = vpack.c.b16 %v2118, %v2110
        %v2263 = vpack.c.b16 %v2119, %v2111
        %v2264 = vpack.c.b16 %v2128, %v2120
        %v2265 = vpack.c.b16 %v2129, %v2121
        %v2266 = vpack.c.b16 %v2130, %v2122
        %v2267 = vpack.c.b16 %v2131, %v2123
        %v2268 = vpack.c.b16 %v2132, %v2124
        %v2269 = vpack.c.b16 %v2133, %v2125
        %v2270 = vpack.c.b16 %v2134, %v2126
        %v2271 = vpack.c.b16 %v2135, %v2127
        %v2272 = vpack.c.b16 %v2144, %v2136
        %v2273 = vpack.c.b16 %v2145, %v2137
        %v2274 = vpack.c.b16 %v2146, %v2138
        %v2275 = vpack.c.b16 %v2147, %v2139
        %v2276 = vpack.c.b16 %v2148, %v2140
        %v2277 = vpack.c.b16 %v2149, %v2141
        %v2278 = vpack.c.b16 %v2150, %v2142
        %v2279 = vpack.c.b16 %v2151, %v2143
        %2408 = vmatpush.bf16.msra.mxu0 %v2208
        %2409 = vmatpush.bf16.msra.mxu0 %v2200
        %2410 = vmatpush.bf16.msra.mxu0 %v2192
        %2411 = vmatpush.bf16.msra.mxu0 %v2184
        %2412 = vmatpush.bf16.msra.mxu0 %v2176
        %2413 = vmatpush.bf16.msra.mxu0 %v2168
        %2414 = vmatpush.bf16.msra.mxu0 %v2160
        %2415 = vmatpush.bf16.msra.mxu0 %v2152
        %2416 = vmatmul.bf16.gmra.mxu0 %v1638
        %v2417 = vpop.f32.mrf.mxu0
        %v2418 = vadd.f32 0.0, %v2417
        %v2419 = vpop.f32.mrf.mxu0
        %2420 = vdwg.mxu0
        %2421 = vmatpush.bf16.msra.mxu0 %v2272
        %2422 = vmatpush.bf16.msra.mxu0 %v2264
        %2423 = vmatpush.bf16.msra.mxu0 %v2256
        %2424 = vmatpush.bf16.msra.mxu0 %v2248
        %2425 = vmatpush.bf16.msra.mxu0 %v2240
        %2426 = vmatpush.bf16.msra.mxu0 %v2232
        %2427 = vmatpush.bf16.msra.mxu0 %v2224
        %2428 = vmatpush.bf16.msra.mxu0 %v2216
        %2429 = vmatmul.bf16.gmra.mxu0 %v1639
        %v2430 = vpop.f32.mrf.mxu0
        %v2431 = vadd.f32 %v2418, %v2430
        %v2432 = vpop.f32.mrf.mxu0
        %2433 = vdwg.mxu0
        %2434 = vmatpush.bf16.msra.mxu0 %v2209
        %2435 = vmatpush.bf16.msra.mxu0 %v2201
        %2436 = vmatpush.bf16.msra.mxu0 %v2193
        %2437 = vmatpush.bf16.msra.mxu0 %v2185
        %2438 = vmatpush.bf16.msra.mxu0 %v2177
        %2439 = vmatpush.bf16.msra.mxu0 %v2169
        %2440 = vmatpush.bf16.msra.mxu0 %v2161
        %2441 = vmatpush.bf16.msra.mxu0 %v2153
        %2442 = vmatmul.bf16.gmra.mxu0 %v1638
        %v2443 = vpop.f32.mrf.mxu0
        %v2444 = vadd.f32 0.0, %v2443
        %v2445 = vpop.f32.mrf.mxu0
        %2446 = vdwg.mxu0
        %2447 = vmatpush.bf16.msra.mxu0 %v2273
        %2448 = vmatpush.bf16.msra.mxu0 %v2265
        %2449 = vmatpush.bf16.msra.mxu0 %v2257
        %2450 = vmatpush.bf16.msra.mxu0 %v2249
        %2451 = vmatpush.bf16.msra.mxu0 %v2241
        %2452 = vmatpush.bf16.msra.mxu0 %v2233
        %2453 = vmatpush.bf16.msra.mxu0 %v2225
        %2454 = vmatpush.bf16.msra.mxu0 %v2217
        %2455 = vmatmul.bf16.gmra.mxu0 %v1639
        %v2456 = vpop.f32.mrf.mxu0
        %v2457 = vadd.f32 %v2444, %v2456
        %v2458 = vpop.f32.mrf.mxu0
        %2459 = vdwg.mxu0
        %2460 = vmatpush.bf16.msra.mxu0 %v2210
        %2461 = vmatpush.bf16.msra.mxu0 %v2202
        %2462 = vmatpush.bf16.msra.mxu0 %v2194
        %2463 = vmatpush.bf16.msra.mxu0 %v2186
        %2464 = vmatpush.bf16.msra.mxu0 %v2178
        %2465 = vmatpush.bf16.msra.mxu0 %v2170
        %2466 = vmatpush.bf16.msra.mxu0 %v2162
        %2467 = vmatpush.bf16.msra.mxu0 %v2154
        %2468 = vmatmul.bf16.gmra.mxu0 %v1638
        %v2469 = vpop.f32.mrf.mxu0
        %v2470 = vadd.f32 0.0, %v2469
        %v2471 = vpop.f32.mrf.mxu0
        %2472 = vdwg.mxu0
        %2473 = vmatpush.bf16.msra.mxu0 %v2274
        %2474 = vmatpush.bf16.msra.mxu0 %v2266
        %2475 = vmatpush.bf16.msra.mxu0 %v2258
        %2476 = vmatpush.bf16.msra.mxu0 %v2250
        %2477 = vmatpush.bf16.msra.mxu0 %v2242
        %2478 = vmatpush.bf16.msra.mxu0 %v2234
        %2479 = vmatpush.bf16.msra.mxu0 %v2226
        %2480 = vmatpush.bf16.msra.mxu0 %v2218
        %2481 = vmatmul.bf16.gmra.mxu0 %v1639
        %v2482 = vpop.f32.mrf.mxu0
        %v2483 = vadd.f32 %v2470, %v2482
        %v2484 = vpop.f32.mrf.mxu0
        %2485 = vdwg.mxu0
        %2486 = vmatpush.bf16.msra.mxu0 %v2211
        %2487 = vmatpush.bf16.msra.mxu0 %v2203
        %2488 = vmatpush.bf16.msra.mxu0 %v2195
        %2489 = vmatpush.bf16.msra.mxu0 %v2187
        %2490 = vmatpush.bf16.msra.mxu0 %v2179
        %2491 = vmatpush.bf16.msra.mxu0 %v2171
        %2492 = vmatpush.bf16.msra.mxu0 %v2163
        %2493 = vmatpush.bf16.msra.mxu0 %v2155
        %2494 = vmatmul.bf16.gmra.mxu0 %v1638
        %v2495 = vpop.f32.mrf.mxu0
        %v2496 = vadd.f32 0.0, %v2495
        %v2497 = vpop.f32.mrf.mxu0
        %2498 = vdwg.mxu0
        %2499 = vmatpush.bf16.msra.mxu0 %v2275
        %2500 = vmatpush.bf16.msra.mxu0 %v2267
        %2501 = vmatpush.bf16.msra.mxu0 %v2259
        %2502 = vmatpush.bf16.msra.mxu0 %v2251
        %2503 = vmatpush.bf16.msra.mxu0 %v2243
        %2504 = vmatpush.bf16.msra.mxu0 %v2235
        %2505 = vmatpush.bf16.msra.mxu0 %v2227
        %2506 = vmatpush.bf16.msra.mxu0 %v2219
        %2507 = vmatmul.bf16.gmra.mxu0 %v1639
        %v2508 = vpop.f32.mrf.mxu0
        %v2509 = vadd.f32 %v2496, %v2508
        %v2510 = vpop.f32.mrf.mxu0
        %2511 = vdwg.mxu0
        %2512 = vmatpush.bf16.msra.mxu0 %v2212
        %2513 = vmatpush.bf16.msra.mxu0 %v2204
        %2514 = vmatpush.bf16.msra.mxu0 %v2196
        %2515 = vmatpush.bf16.msra.mxu0 %v2188
        %2516 = vmatpush.bf16.msra.mxu0 %v2180
        %2517 = vmatpush.bf16.msra.mxu0 %v2172
        %2518 = vmatpush.bf16.msra.mxu0 %v2164
        %2519 = vmatpush.bf16.msra.mxu0 %v2156
        %2520 = vmatmul.bf16.gmra.mxu0 %v1638
        %v2521 = vpop.f32.mrf.mxu0
        %v2522 = vadd.f32 0.0, %v2521
        %v2523 = vpop.f32.mrf.mxu0
        %2524 = vdwg.mxu0
        %2525 = vmatpush.bf16.msra.mxu0 %v2276
        %2526 = vmatpush.bf16.msra.mxu0 %v2268
        %2527 = vmatpush.bf16.msra.mxu0 %v2260
        %2528 = vmatpush.bf16.msra.mxu0 %v2252
        %2529 = vmatpush.bf16.msra.mxu0 %v2244
        %2530 = vmatpush.bf16.msra.mxu0 %v2236
        %2531 = vmatpush.bf16.msra.mxu0 %v2228
        %2532 = vmatpush.bf16.msra.mxu0 %v2220
        %2533 = vmatmul.bf16.gmra.mxu0 %v1639
        %v2534 = vpop.f32.mrf.mxu0
        %v2535 = vadd.f32 %v2522, %v2534
        %v2536 = vpop.f32.mrf.mxu0
        %2537 = vdwg.mxu0
        %2538 = vmatpush.bf16.msra.mxu0 %v2213
        %2539 = vmatpush.bf16.msra.mxu0 %v2205
        %2540 = vmatpush.bf16.msra.mxu0 %v2197
        %2541 = vmatpush.bf16.msra.mxu0 %v2189
        %2542 = vmatpush.bf16.msra.mxu0 %v2181
        %2543 = vmatpush.bf16.msra.mxu0 %v2173
        %2544 = vmatpush.bf16.msra.mxu0 %v2165
        %2545 = vmatpush.bf16.msra.mxu0 %v2157
        %2546 = vmatmul.bf16.gmra.mxu0 %v1638
        %v2547 = vpop.f32.mrf.mxu0
        %v2548 = vadd.f32 0.0, %v2547
        %v2549 = vpop.f32.mrf.mxu0
        %2550 = vdwg.mxu0
        %2551 = vmatpush.bf16.msra.mxu0 %v2277
        %2552 = vmatpush.bf16.msra.mxu0 %v2269
        %2553 = vmatpush.bf16.msra.mxu0 %v2261
        %2554 = vmatpush.bf16.msra.mxu0 %v2253
        %2555 = vmatpush.bf16.msra.mxu0 %v2245
        %2556 = vmatpush.bf16.msra.mxu0 %v2237
        %2557 = vmatpush.bf16.msra.mxu0 %v2229
        %2558 = vmatpush.bf16.msra.mxu0 %v2221
        %2559 = vmatmul.bf16.gmra.mxu0 %v1639
        %v2560 = vpop.f32.mrf.mxu0
        %v2561 = vadd.f32 %v2548, %v2560
        %v2562 = vpop.f32.mrf.mxu0
        %2563 = vdwg.mxu0
        %2564 = vmatpush.bf16.msra.mxu0 %v2214
        %2565 = vmatpush.bf16.msra.mxu0 %v2206
        %2566 = vmatpush.bf16.msra.mxu0 %v2198
        %2567 = vmatpush.bf16.msra.mxu0 %v2190
        %2568 = vmatpush.bf16.msra.mxu0 %v2182
        %2569 = vmatpush.bf16.msra.mxu0 %v2174
        %2570 = vmatpush.bf16.msra.mxu0 %v2166
        %2571 = vmatpush.bf16.msra.mxu0 %v2158
        %2572 = vmatmul.bf16.gmra.mxu0 %v1638
        %v2573 = vpop.f32.mrf.mxu0
        %v2574 = vadd.f32 0.0, %v2573
        %v2575 = vpop.f32.mrf.mxu0
        %2576 = vdwg.mxu0
        %2577 = vmatpush.bf16.msra.mxu0 %v2278
        %2578 = vmatpush.bf16.msra.mxu0 %v2270
        %2579 = vmatpush.bf16.msra.mxu0 %v2262
        %2580 = vmatpush.bf16.msra.mxu0 %v2254
        %2581 = vmatpush.bf16.msra.mxu0 %v2246
        %2582 = vmatpush.bf16.msra.mxu0 %v2238
        %2583 = vmatpush.bf16.msra.mxu0 %v2230
        %2584 = vmatpush.bf16.msra.mxu0 %v2222
        %2585 = vmatmul.bf16.gmra.mxu0 %v1639
        %v2586 = vpop.f32.mrf.mxu0
        %v2587 = vadd.f32 %v2574, %v2586
        %v2588 = vpop.f32.mrf.mxu0
        %2589 = vdwg.mxu0
        %2590 = vmatpush.bf16.msra.mxu0 %v2215
        %2591 = vmatpush.bf16.msra.mxu0 %v2207
        %2592 = vmatpush.bf16.msra.mxu0 %v2199
        %2593 = vmatpush.bf16.msra.mxu0 %v2191
        %2594 = vmatpush.bf16.msra.mxu0 %v2183
        %2595 = vmatpush.bf16.msra.mxu0 %v2175
        %2596 = vmatpush.bf16.msra.mxu0 %v2167
        %2597 = vmatpush.bf16.msra.mxu0 %v2159
        %2598 = vmatmul.bf16.gmra.mxu0 %v1638
        %v2599 = vpop.f32.mrf.mxu0
        %v2600 = vadd.f32 0.0, %v2599
        %v2601 = vpop.f32.mrf.mxu0
        %2602 = vdwg.mxu0
        %2603 = vmatpush.bf16.msra.mxu0 %v2279
        %2604 = vmatpush.bf16.msra.mxu0 %v2271
        %2605 = vmatpush.bf16.msra.mxu0 %v2263
        %2606 = vmatpush.bf16.msra.mxu0 %v2255
        %2607 = vmatpush.bf16.msra.mxu0 %v2247
        %2608 = vmatpush.bf16.msra.mxu0 %v2239
        %2609 = vmatpush.bf16.msra.mxu0 %v2231
        %2610 = vmatpush.bf16.msra.mxu0 %v2223
        %2611 = vmatmul.bf16.gmra.mxu0 %v1639
        %v2612 = vpop.f32.mrf.mxu0
        %v2613 = vadd.f32 %v2600, %v2612
        %v2614 = vpop.f32.mrf.mxu0
        %2615 = vdwg.mxu0
        %v2616 = vadd.f32 %v1630, %v2431
        %v2617 = vadd.f32 %v1631, %v2457
        %v2618 = vadd.f32 %v1632, %v2483
        %v2619 = vadd.f32 %v1633, %v2509
        %v2620 = vadd.f32 %v1634, %v2535
        %v2621 = vadd.f32 %v1635, %v2561
        %v2622 = vadd.f32 %v1636, %v2587
        %v2623 = vadd.f32 %v1637, %v2613
        %2624 = vst [vmem:[#allocation2] sm:$0xff] %v2616
        %2625 = vst [vmem:[#allocation2 + $0x8] sm:$0xff] %v2617
        %2626 = vst [vmem:[#allocation2 + $0x10] sm:$0xff] %v2618
        %2627 = vst [vmem:[#allocation2 + $0x18] sm:$0xff] %v2619
        %2628 = vst [vmem:[#allocation2 + $0x20] sm:$0xff] %v2620
        %2629 = vst [vmem:[#allocation2 + $0x28] sm:$0xff] %v2621
        %2630 = vst [vmem:[#allocation2 + $0x30] sm:$0xff] %v2622
        %2631 = vst [vmem:[#allocation2 + $0x38] sm:$0xff] %v2623
        %p2632 = scmp.eq.s32.totalorder %s38, 3
        // Predicated region
        $region105: #{tpu_custom_call.1} parent=63 // pred_check
          %p2633 = pneg %p2632
        $region106: #{tpu_custom_call.1} parent=63 // pred_check_branch
          %2635 = sbr.rel (%p2633) target = $region108
        $region107: #{tpu_custom_call.1} parent=63 // pred_region
          %v2636 = vld [vmem:[#allocation2] sm:$0xff]
          %v2637 = vld [vmem:[#allocation2 + $0x8] sm:$0xff]
          %v2638 = vld [vmem:[#allocation2 + $0x10] sm:$0xff]
          %v2639 = vld [vmem:[#allocation2 + $0x18] sm:$0xff]
          %v2640 = vld [vmem:[#allocation2 + $0x20] sm:$0xff]
          %v2641 = vld [vmem:[#allocation2 + $0x28] sm:$0xff]
          %v2642 = vld [vmem:[#allocation2 + $0x30] sm:$0xff]
          %v2643 = vld [vmem:[#allocation2 + $0x38] sm:$0xff]
          %v2644 = vld [vmem:[#allocation12] sm:$0xff]
          %v2646 = vperm.slane %v2644, 0
          %v2647 = vperm.slane %v2644, 1
          %v2648 = vperm.slane %v2644, 2
          %v2649 = vperm.slane %v2644, 3
          %v2650 = vperm.slane %v2644, 4
          %v2651 = vperm.slane %v2644, 5
          %v2652 = vperm.slane %v2644, 6
          %v2653 = vperm.slane %v2644, 7
          %v2662 = vadd.f32 %v2636, %v2646
          %v2663 = vadd.f32 %v2637, %v2647
          %v2664 = vadd.f32 %v2638, %v2648
          %v2665 = vadd.f32 %v2639, %v2649
          %v2666 = vadd.f32 %v2640, %v2650
          %v2667 = vadd.f32 %v2641, %v2651
          %v2668 = vadd.f32 %v2642, %v2652
          %v2669 = vadd.f32 %v2643, %v2653
          %v2670 = vmax.f32 %v2662, 0.0
          %v2671 = vmax.f32 %v2663, 0.0
          %v2672 = vmax.f32 %v2664, 0.0
          %v2673 = vmax.f32 %v2665, 0.0
          %v2674 = vmax.f32 %v2666, 0.0
          %v2675 = vmax.f32 %v2667, 0.0
          %v2676 = vmax.f32 %v2668, 0.0
          %v2677 = vmax.f32 %v2669, 0.0
          %v2678 = vpack.c.bf16 %v2670, %v2670
          %v2679 = vpack.c.bf16 %v2671, %v2671
          %v2680 = vpack.c.bf16 %v2672, %v2672
          %v2681 = vpack.c.bf16 %v2673, %v2673
          %v2682 = vpack.c.bf16 %v2674, %v2674
          %v2683 = vpack.c.bf16 %v2675, %v2675
          %v2684 = vpack.c.bf16 %v2676, %v2676
          %v2685 = vpack.c.bf16 %v2677, %v2677
          %v2686 = vld [vmem:[#allocation13] sm:$0xff]
          %v2687 = vld [vmem:[#allocation13 + $0x8] sm:$0xff]
          %v2688 = vld [vmem:[#allocation13 + $0x10] sm:$0xff]
          %v2689 = vld [vmem:[#allocation13 + $0x18] sm:$0xff]
          %v2690 = vld [vmem:[#allocation13 + $0x20] sm:$0xff]
          %v2691 = vld [vmem:[#allocation13 + $0x28] sm:$0xff]
          %v2692 = vld [vmem:[#allocation13 + $0x30] sm:$0xff]
          %v2693 = vld [vmem:[#allocation13 + $0x38] sm:$0xff]
          %v2694 = vld [vmem:[#allocation13 + $0x40] sm:$0xff]
          %v2695 = vld [vmem:[#allocation13 + $0x48] sm:$0xff]
          %v2696 = vld [vmem:[#allocation13 + $0x50] sm:$0xff]
          %v2697 = vld [vmem:[#allocation13 + $0x58] sm:$0xff]
          %v2698 = vld [vmem:[#allocation13 + $0x60] sm:$0xff]
          %v2699 = vld [vmem:[#allocation13 + $0x68] sm:$0xff]
          %v2700 = vld [vmem:[#allocation13 + $0x70] sm:$0xff]
          %v2701 = vld [vmem:[#allocation13 + $0x78] sm:$0xff]
          %v2702 = vld [vmem:[#allocation13 + $0x80] sm:$0xff]
          %v2703 = vld [vmem:[#allocation13 + $0x88] sm:$0xff]
          %v2704 = vld [vmem:[#allocation13 + $0x90] sm:$0xff]
          %v2705 = vld [vmem:[#allocation13 + $0x98] sm:$0xff]
          %v2706 = vld [vmem:[#allocation13 + $0xa0] sm:$0xff]
          %v2707 = vld [vmem:[#allocation13 + $0xa8] sm:$0xff]
          %v2708 = vld [vmem:[#allocation13 + $0xb0] sm:$0xff]
          %v2709 = vld [vmem:[#allocation13 + $0xb8] sm:$0xff]
          %v2710 = vld [vmem:[#allocation13 + $0xc0] sm:$0xff]
          %v2711 = vld [vmem:[#allocation13 + $0xc8] sm:$0xff]
          %v2712 = vld [vmem:[#allocation13 + $0xd0] sm:$0xff]
          %v2713 = vld [vmem:[#allocation13 + $0xd8] sm:$0xff]
          %v2714 = vld [vmem:[#allocation13 + $0xe0] sm:$0xff]
          %v2715 = vld [vmem:[#allocation13 + $0xe8] sm:$0xff]
          %v2716 = vld [vmem:[#allocation13 + $0xf0] sm:$0xff]
          %v2717 = vld [vmem:[#allocation13 + $0xf8] sm:$0xff]
          %v2718 = vld [vmem:[#allocation13 + $0x100] sm:$0xff]
          %v2719 = vld [vmem:[#allocation13 + $0x108] sm:$0xff]
          %v2720 = vld [vmem:[#allocation13 + $0x110] sm:$0xff]
          %v2721 = vld [vmem:[#allocation13 + $0x118] sm:$0xff]
          %v2722 = vld [vmem:[#allocation13 + $0x120] sm:$0xff]
          %v2723 = vld [vmem:[#allocation13 + $0x128] sm:$0xff]
          %v2724 = vld [vmem:[#allocation13 + $0x130] sm:$0xff]
          %v2725 = vld [vmem:[#allocation13 + $0x138] sm:$0xff]
          %v2726 = vld [vmem:[#allocation13 + $0x140] sm:$0xff]
          %v2727 = vld [vmem:[#allocation13 + $0x148] sm:$0xff]
          %v2728 = vld [vmem:[#allocation13 + $0x150] sm:$0xff]
          %v2729 = vld [vmem:[#allocation13 + $0x158] sm:$0xff]
          %v2730 = vld [vmem:[#allocation13 + $0x160] sm:$0xff]
          %v2731 = vld [vmem:[#allocation13 + $0x168] sm:$0xff]
          %v2732 = vld [vmem:[#allocation13 + $0x170] sm:$0xff]
          %v2733 = vld [vmem:[#allocation13 + $0x178] sm:$0xff]
          %v2734 = vld [vmem:[#allocation13 + $0x180] sm:$0xff]
          %v2735 = vld [vmem:[#allocation13 + $0x188] sm:$0xff]
          %v2736 = vld [vmem:[#allocation13 + $0x190] sm:$0xff]
          %v2737 = vld [vmem:[#allocation13 + $0x198] sm:$0xff]
          %v2738 = vld [vmem:[#allocation13 + $0x1a0] sm:$0xff]
          %v2739 = vld [vmem:[#allocation13 + $0x1a8] sm:$0xff]
          %v2740 = vld [vmem:[#allocation13 + $0x1b0] sm:$0xff]
          %v2741 = vld [vmem:[#allocation13 + $0x1b8] sm:$0xff]
          %v2742 = vld [vmem:[#allocation13 + $0x1c0] sm:$0xff]
          %v2743 = vld [vmem:[#allocation13 + $0x1c8] sm:$0xff]
          %v2744 = vld [vmem:[#allocation13 + $0x1d0] sm:$0xff]
          %v2745 = vld [vmem:[#allocation13 + $0x1d8] sm:$0xff]
          %v2746 = vld [vmem:[#allocation13 + $0x1e0] sm:$0xff]
          %v2747 = vld [vmem:[#allocation13 + $0x1e8] sm:$0xff]
          %v2748 = vld [vmem:[#allocation13 + $0x1f0] sm:$0xff]
          %v2749 = vld [vmem:[#allocation13 + $0x1f8] sm:$0xff]
          %v2750 = vld [vmem:[#allocation13 + $0x200] sm:$0xff]
          %v2751 = vld [vmem:[#allocation13 + $0x208] sm:$0xff]
          %v2752 = vld [vmem:[#allocation13 + $0x210] sm:$0xff]
          %v2753 = vld [vmem:[#allocation13 + $0x218] sm:$0xff]
          %v2754 = vld [vmem:[#allocation13 + $0x220] sm:$0xff]
          %v2755 = vld [vmem:[#allocation13 + $0x228] sm:$0xff]
          %v2756 = vld [vmem:[#allocation13 + $0x230] sm:$0xff]
          %v2757 = vld [vmem:[#allocation13 + $0x238] sm:$0xff]
          %v2758 = vld [vmem:[#allocation13 + $0x240] sm:$0xff]
          %v2759 = vld [vmem:[#allocation13 + $0x248] sm:$0xff]
          %v2760 = vld [vmem:[#allocation13 + $0x250] sm:$0xff]
          %v2761 = vld [vmem:[#allocation13 + $0x258] sm:$0xff]
          %v2762 = vld [vmem:[#allocation13 + $0x260] sm:$0xff]
          %v2763 = vld [vmem:[#allocation13 + $0x268] sm:$0xff]
          %v2764 = vld [vmem:[#allocation13 + $0x270] sm:$0xff]
          %v2765 = vld [vmem:[#allocation13 + $0x278] sm:$0xff]
          %v2766 = vld [vmem:[#allocation13 + $0x280] sm:$0xff]
          %v2767 = vld [vmem:[#allocation13 + $0x288] sm:$0xff]
          %v2768 = vld [vmem:[#allocation13 + $0x290] sm:$0xff]
          %v2769 = vld [vmem:[#allocation13 + $0x298] sm:$0xff]
          %v2770 = vld [vmem:[#allocation13 + $0x2a0] sm:$0xff]
          %v2771 = vld [vmem:[#allocation13 + $0x2a8] sm:$0xff]
          %v2772 = vld [vmem:[#allocation13 + $0x2b0] sm:$0xff]
          %v2773 = vld [vmem:[#allocation13 + $0x2b8] sm:$0xff]
          %v2774 = vld [vmem:[#allocation13 + $0x2c0] sm:$0xff]
          %v2775 = vld [vmem:[#allocation13 + $0x2c8] sm:$0xff]
          %v2776 = vld [vmem:[#allocation13 + $0x2d0] sm:$0xff]
          %v2777 = vld [vmem:[#allocation13 + $0x2d8] sm:$0xff]
          %v2778 = vld [vmem:[#allocation13 + $0x2e0] sm:$0xff]
          %v2779 = vld [vmem:[#allocation13 + $0x2e8] sm:$0xff]
          %v2780 = vld [vmem:[#allocation13 + $0x2f0] sm:$0xff]
          %v2781 = vld [vmem:[#allocation13 + $0x2f8] sm:$0xff]
          %v2782 = vld [vmem:[#allocation13 + $0x300] sm:$0xff]
          %v2783 = vld [vmem:[#allocation13 + $0x308] sm:$0xff]
          %v2784 = vld [vmem:[#allocation13 + $0x310] sm:$0xff]
          %v2785 = vld [vmem:[#allocation13 + $0x318] sm:$0xff]
          %v2786 = vld [vmem:[#allocation13 + $0x320] sm:$0xff]
          %v2787 = vld [vmem:[#allocation13 + $0x328] sm:$0xff]
          %v2788 = vld [vmem:[#allocation13 + $0x330] sm:$0xff]
          %v2789 = vld [vmem:[#allocation13 + $0x338] sm:$0xff]
          %v2790 = vld [vmem:[#allocation13 + $0x340] sm:$0xff]
          %v2791 = vld [vmem:[#allocation13 + $0x348] sm:$0xff]
          %v2792 = vld [vmem:[#allocation13 + $0x350] sm:$0xff]
          %v2793 = vld [vmem:[#allocation13 + $0x358] sm:$0xff]
          %v2794 = vld [vmem:[#allocation13 + $0x360] sm:$0xff]
          %v2795 = vld [vmem:[#allocation13 + $0x368] sm:$0xff]
          %v2796 = vld [vmem:[#allocation13 + $0x370] sm:$0xff]
          %v2797 = vld [vmem:[#allocation13 + $0x378] sm:$0xff]
          %v2798 = vld [vmem:[#allocation13 + $0x380] sm:$0xff]
          %v2799 = vld [vmem:[#allocation13 + $0x388] sm:$0xff]
          %v2800 = vld [vmem:[#allocation13 + $0x390] sm:$0xff]
          %v2801 = vld [vmem:[#allocation13 + $0x398] sm:$0xff]
          %v2802 = vld [vmem:[#allocation13 + $0x3a0] sm:$0xff]
          %v2803 = vld [vmem:[#allocation13 + $0x3a8] sm:$0xff]
          %v2804 = vld [vmem:[#allocation13 + $0x3b0] sm:$0xff]
          %v2805 = vld [vmem:[#allocation13 + $0x3b8] sm:$0xff]
          %v2806 = vld [vmem:[#allocation13 + $0x3c0] sm:$0xff]
          %v2807 = vld [vmem:[#allocation13 + $0x3c8] sm:$0xff]
          %v2808 = vld [vmem:[#allocation13 + $0x3d0] sm:$0xff]
          %v2809 = vld [vmem:[#allocation13 + $0x3d8] sm:$0xff]
          %v2810 = vld [vmem:[#allocation13 + $0x3e0] sm:$0xff]
          %v2811 = vld [vmem:[#allocation13 + $0x3e8] sm:$0xff]
          %v2812 = vld [vmem:[#allocation13 + $0x3f0] sm:$0xff]
          %v2813 = vld [vmem:[#allocation13 + $0x3f8] sm:$0xff]
          %v2814 = vld [vmem:[#allocation13 + $0x400] sm:$0xff]
          %v2815 = vld [vmem:[#allocation13 + $0x408] sm:$0xff]
          %v2816 = vld [vmem:[#allocation13 + $0x410] sm:$0xff]
          %v2817 = vld [vmem:[#allocation13 + $0x418] sm:$0xff]
          %v2818 = vld [vmem:[#allocation13 + $0x420] sm:$0xff]
          %v2819 = vld [vmem:[#allocation13 + $0x428] sm:$0xff]
          %v2820 = vld [vmem:[#allocation13 + $0x430] sm:$0xff]
          %v2821 = vld [vmem:[#allocation13 + $0x438] sm:$0xff]
          %v2822 = vld [vmem:[#allocation13 + $0x440] sm:$0xff]
          %v2823 = vld [vmem:[#allocation13 + $0x448] sm:$0xff]
          %v2824 = vld [vmem:[#allocation13 + $0x450] sm:$0xff]
          %v2825 = vld [vmem:[#allocation13 + $0x458] sm:$0xff]
          %v2826 = vld [vmem:[#allocation13 + $0x460] sm:$0xff]
          %v2827 = vld [vmem:[#allocation13 + $0x468] sm:$0xff]
          %v2828 = vld [vmem:[#allocation13 + $0x470] sm:$0xff]
          %v2829 = vld [vmem:[#allocation13 + $0x478] sm:$0xff]
          %v2830 = vld [vmem:[#allocation13 + $0x480] sm:$0xff]
          %v2831 = vld [vmem:[#allocation13 + $0x488] sm:$0xff]
          %v2832 = vld [vmem:[#allocation13 + $0x490] sm:$0xff]
          %v2833 = vld [vmem:[#allocation13 + $0x498] sm:$0xff]
          %v2834 = vld [vmem:[#allocation13 + $0x4a0] sm:$0xff]
          %v2835 = vld [vmem:[#allocation13 + $0x4a8] sm:$0xff]
          %v2836 = vld [vmem:[#allocation13 + $0x4b0] sm:$0xff]
          %v2837 = vld [vmem:[#allocation13 + $0x4b8] sm:$0xff]
          %v2838 = vld [vmem:[#allocation13 + $0x4c0] sm:$0xff]
          %v2839 = vld [vmem:[#allocation13 + $0x4c8] sm:$0xff]
          %v2840 = vld [vmem:[#allocation13 + $0x4d0] sm:$0xff]
          %v2841 = vld [vmem:[#allocation13 + $0x4d8] sm:$0xff]
          %v2842 = vld [vmem:[#allocation13 + $0x4e0] sm:$0xff]
          %v2843 = vld [vmem:[#allocation13 + $0x4e8] sm:$0xff]
          %v2844 = vld [vmem:[#allocation13 + $0x4f0] sm:$0xff]
          %v2845 = vld [vmem:[#allocation13 + $0x4f8] sm:$0xff]
          %v2846 = vld [vmem:[#allocation13 + $0x500] sm:$0xff]
          %v2847 = vld [vmem:[#allocation13 + $0x508] sm:$0xff]
          %v2848 = vld [vmem:[#allocation13 + $0x510] sm:$0xff]
          %v2849 = vld [vmem:[#allocation13 + $0x518] sm:$0xff]
          %v2850 = vld [vmem:[#allocation13 + $0x520] sm:$0xff]
          %v2851 = vld [vmem:[#allocation13 + $0x528] sm:$0xff]
          %v2852 = vld [vmem:[#allocation13 + $0x530] sm:$0xff]
          %v2853 = vld [vmem:[#allocation13 + $0x538] sm:$0xff]
          %v2854 = vld [vmem:[#allocation13 + $0x540] sm:$0xff]
          %v2855 = vld [vmem:[#allocation13 + $0x548] sm:$0xff]
          %v2856 = vld [vmem:[#allocation13 + $0x550] sm:$0xff]
          %v2857 = vld [vmem:[#allocation13 + $0x558] sm:$0xff]
          %v2858 = vld [vmem:[#allocation13 + $0x560] sm:$0xff]
          %v2859 = vld [vmem:[#allocation13 + $0x568] sm:$0xff]
          %v2860 = vld [vmem:[#allocation13 + $0x570] sm:$0xff]
          %v2861 = vld [vmem:[#allocation13 + $0x578] sm:$0xff]
          %v2862 = vld [vmem:[#allocation13 + $0x580] sm:$0xff]
          %v2863 = vld [vmem:[#allocation13 + $0x588] sm:$0xff]
          %v2864 = vld [vmem:[#allocation13 + $0x590] sm:$0xff]
          %v2865 = vld [vmem:[#allocation13 + $0x598] sm:$0xff]
          %v2866 = vld [vmem:[#allocation13 + $0x5a0] sm:$0xff]
          %v2867 = vld [vmem:[#allocation13 + $0x5a8] sm:$0xff]
          %v2868 = vld [vmem:[#allocation13 + $0x5b0] sm:$0xff]
          %v2869 = vld [vmem:[#allocation13 + $0x5b8] sm:$0xff]
          %v2870 = vld [vmem:[#allocation13 + $0x5c0] sm:$0xff]
          %v2871 = vld [vmem:[#allocation13 + $0x5c8] sm:$0xff]
          %v2872 = vld [vmem:[#allocation13 + $0x5d0] sm:$0xff]
          %v2873 = vld [vmem:[#allocation13 + $0x5d8] sm:$0xff]
          %v2874 = vld [vmem:[#allocation13 + $0x5e0] sm:$0xff]
          %v2875 = vld [vmem:[#allocation13 + $0x5e8] sm:$0xff]
          %v2876 = vld [vmem:[#allocation13 + $0x5f0] sm:$0xff]
          %v2877 = vld [vmem:[#allocation13 + $0x5f8] sm:$0xff]
          %v2878 = vld [vmem:[#allocation13 + $0x600] sm:$0xff]
          %v2879 = vld [vmem:[#allocation13 + $0x608] sm:$0xff]
          %v2880 = vld [vmem:[#allocation13 + $0x610] sm:$0xff]
          %v2881 = vld [vmem:[#allocation13 + $0x618] sm:$0xff]
          %v2882 = vld [vmem:[#allocation13 + $0x620] sm:$0xff]
          %v2883 = vld [vmem:[#allocation13 + $0x628] sm:$0xff]
          %v2884 = vld [vmem:[#allocation13 + $0x630] sm:$0xff]
          %v2885 = vld [vmem:[#allocation13 + $0x638] sm:$0xff]
          %v2886 = vld [vmem:[#allocation13 + $0x640] sm:$0xff]
          %v2887 = vld [vmem:[#allocation13 + $0x648] sm:$0xff]
          %v2888 = vld [vmem:[#allocation13 + $0x650] sm:$0xff]
          %v2889 = vld [vmem:[#allocation13 + $0x658] sm:$0xff]
          %v2890 = vld [vmem:[#allocation13 + $0x660] sm:$0xff]
          %v2891 = vld [vmem:[#allocation13 + $0x668] sm:$0xff]
          %v2892 = vld [vmem:[#allocation13 + $0x670] sm:$0xff]
          %v2893 = vld [vmem:[#allocation13 + $0x678] sm:$0xff]
          %v2894 = vld [vmem:[#allocation13 + $0x680] sm:$0xff]
          %v2895 = vld [vmem:[#allocation13 + $0x688] sm:$0xff]
          %v2896 = vld [vmem:[#allocation13 + $0x690] sm:$0xff]
          %v2897 = vld [vmem:[#allocation13 + $0x698] sm:$0xff]
          %v2898 = vld [vmem:[#allocation13 + $0x6a0] sm:$0xff]
          %v2899 = vld [vmem:[#allocation13 + $0x6a8] sm:$0xff]
          %v2900 = vld [vmem:[#allocation13 + $0x6b0] sm:$0xff]
          %v2901 = vld [vmem:[#allocation13 + $0x6b8] sm:$0xff]
          %v2902 = vld [vmem:[#allocation13 + $0x6c0] sm:$0xff]
          %v2903 = vld [vmem:[#allocation13 + $0x6c8] sm:$0xff]
          %v2904 = vld [vmem:[#allocation13 + $0x6d0] sm:$0xff]
          %v2905 = vld [vmem:[#allocation13 + $0x6d8] sm:$0xff]
          %v2906 = vld [vmem:[#allocation13 + $0x6e0] sm:$0xff]
          %v2907 = vld [vmem:[#allocation13 + $0x6e8] sm:$0xff]
          %v2908 = vld [vmem:[#allocation13 + $0x6f0] sm:$0xff]
          %v2909 = vld [vmem:[#allocation13 + $0x6f8] sm:$0xff]
          %v2910 = vld [vmem:[#allocation13 + $0x700] sm:$0xff]
          %v2911 = vld [vmem:[#allocation13 + $0x708] sm:$0xff]
          %v2912 = vld [vmem:[#allocation13 + $0x710] sm:$0xff]
          %v2913 = vld [vmem:[#allocation13 + $0x718] sm:$0xff]
          %v2914 = vld [vmem:[#allocation13 + $0x720] sm:$0xff]
          %v2915 = vld [vmem:[#allocation13 + $0x728] sm:$0xff]
          %v2916 = vld [vmem:[#allocation13 + $0x730] sm:$0xff]
          %v2917 = vld [vmem:[#allocation13 + $0x738] sm:$0xff]
          %v2918 = vld [vmem:[#allocation13 + $0x740] sm:$0xff]
          %v2919 = vld [vmem:[#allocation13 + $0x748] sm:$0xff]
          %v2920 = vld [vmem:[#allocation13 + $0x750] sm:$0xff]
          %v2921 = vld [vmem:[#allocation13 + $0x758] sm:$0xff]
          %v2922 = vld [vmem:[#allocation13 + $0x760] sm:$0xff]
          %v2923 = vld [vmem:[#allocation13 + $0x768] sm:$0xff]
          %v2924 = vld [vmem:[#allocation13 + $0x770] sm:$0xff]
          %v2925 = vld [vmem:[#allocation13 + $0x778] sm:$0xff]
          %v2926 = vld [vmem:[#allocation13 + $0x780] sm:$0xff]
          %v2927 = vld [vmem:[#allocation13 + $0x788] sm:$0xff]
          %v2928 = vld [vmem:[#allocation13 + $0x790] sm:$0xff]
          %v2929 = vld [vmem:[#allocation13 + $0x798] sm:$0xff]
          %v2930 = vld [vmem:[#allocation13 + $0x7a0] sm:$0xff]
          %v2931 = vld [vmem:[#allocation13 + $0x7a8] sm:$0xff]
          %v2932 = vld [vmem:[#allocation13 + $0x7b0] sm:$0xff]
          %v2933 = vld [vmem:[#allocation13 + $0x7b8] sm:$0xff]
          %v2934 = vld [vmem:[#allocation13 + $0x7c0] sm:$0xff]
          %v2935 = vld [vmem:[#allocation13 + $0x7c8] sm:$0xff]
          %v2936 = vld [vmem:[#allocation13 + $0x7d0] sm:$0xff]
          %v2937 = vld [vmem:[#allocation13 + $0x7d8] sm:$0xff]
          %v2938 = vld [vmem:[#allocation13 + $0x7e0] sm:$0xff]
          %v2939 = vld [vmem:[#allocation13 + $0x7e8] sm:$0xff]
          %v2940 = vld [vmem:[#allocation13 + $0x7f0] sm:$0xff]
          %v2941 = vld [vmem:[#allocation13 + $0x7f8] sm:$0xff]
          %v2942 = vld [vmem:[#allocation15] sm:$0xf]
          %v2944 = vperm.slane %v2942, 0
          %v2945 = vperm.slane %v2942, 1
          %v2946 = vperm.slane %v2942, 2
          %v2947 = vperm.slane %v2942, 3
          %v3208 = vunpack.c.l.b16 %v2686
          %v3209 = vunpack.c.h.b16 %v2686
          %v3210 = vunpack.c.l.b16 %v2687
          %v3211 = vunpack.c.h.b16 %v2687
          %v3212 = vunpack.c.l.b16 %v2688
          %v3213 = vunpack.c.h.b16 %v2688
          %v3214 = vunpack.c.l.b16 %v2689
          %v3215 = vunpack.c.h.b16 %v2689
          %v3216 = vunpack.c.l.b16 %v2690
          %v3217 = vunpack.c.h.b16 %v2690
          %v3218 = vunpack.c.l.b16 %v2691
          %v3219 = vunpack.c.h.b16 %v2691
          %v3220 = vunpack.c.l.b16 %v2692
          %v3221 = vunpack.c.h.b16 %v2692
          %v3222 = vunpack.c.l.b16 %v2693
          %v3223 = vunpack.c.h.b16 %v2693
          %v3224 = vunpack.c.l.b16 %v2694
          %v3225 = vunpack.c.h.b16 %v2694
          %v3226 = vunpack.c.l.b16 %v2695
          %v3227 = vunpack.c.h.b16 %v2695
          %v3228 = vunpack.c.l.b16 %v2696
          %v3229 = vunpack.c.h.b16 %v2696
          %v3230 = vunpack.c.l.b16 %v2697
          %v3231 = vunpack.c.h.b16 %v2697
          %v3232 = vunpack.c.l.b16 %v2698
          %v3233 = vunpack.c.h.b16 %v2698
          %v3234 = vunpack.c.l.b16 %v2699
          %v3235 = vunpack.c.h.b16 %v2699
          %v3236 = vunpack.c.l.b16 %v2700
          %v3237 = vunpack.c.h.b16 %v2700
          %v3238 = vunpack.c.l.b16 %v2701
          %v3239 = vunpack.c.h.b16 %v2701
          %v3240 = vunpack.c.l.b16 %v2702
          %v3241 = vunpack.c.h.b16 %v2702
          %v3242 = vunpack.c.l.b16 %v2703
          %v3243 = vunpack.c.h.b16 %v2703
          %v3244 = vunpack.c.l.b16 %v2704
          %v3245 = vunpack.c.h.b16 %v2704
          %v3246 = vunpack.c.l.b16 %v2705
          %v3247 = vunpack.c.h.b16 %v2705
          %v3248 = vunpack.c.l.b16 %v2706
          %v3249 = vunpack.c.h.b16 %v2706
          %v3250 = vunpack.c.l.b16 %v2707
          %v3251 = vunpack.c.h.b16 %v2707
          %v3252 = vunpack.c.l.b16 %v2708
          %v3253 = vunpack.c.h.b16 %v2708
          %v3254 = vunpack.c.l.b16 %v2709
          %v3255 = vunpack.c.h.b16 %v2709
          %v3256 = vunpack.c.l.b16 %v2710
          %v3257 = vunpack.c.h.b16 %v2710
          %v3258 = vunpack.c.l.b16 %v2711
          %v3259 = vunpack.c.h.b16 %v2711
          %v3260 = vunpack.c.l.b16 %v2712
          %v3261 = vunpack.c.h.b16 %v2712
          %v3262 = vunpack.c.l.b16 %v2713
          %v3263 = vunpack.c.h.b16 %v2713
          %v3264 = vunpack.c.l.b16 %v2714
          %v3265 = vunpack.c.h.b16 %v2714
          %v3266 = vunpack.c.l.b16 %v2715
          %v3267 = vunpack.c.h.b16 %v2715
          %v3268 = vunpack.c.l.b16 %v2716
          %v3269 = vunpack.c.h.b16 %v2716
          %v3270 = vunpack.c.l.b16 %v2717
          %v3271 = vunpack.c.h.b16 %v2717
          %v3272 = vunpack.c.l.b16 %v2718
          %v3273 = vunpack.c.h.b16 %v2718
          %v3274 = vunpack.c.l.b16 %v2719
          %v3275 = vunpack.c.h.b16 %v2719
          %v3276 = vunpack.c.l.b16 %v2720
          %v3277 = vunpack.c.h.b16 %v2720
          %v3278 = vunpack.c.l.b16 %v2721
          %v3279 = vunpack.c.h.b16 %v2721
          %v3280 = vunpack.c.l.b16 %v2722
          %v3281 = vunpack.c.h.b16 %v2722
          %v3282 = vunpack.c.l.b16 %v2723
          %v3283 = vunpack.c.h.b16 %v2723
          %v3284 = vunpack.c.l.b16 %v2724
          %v3285 = vunpack.c.h.b16 %v2724
          %v3286 = vunpack.c.l.b16 %v2725
          %v3287 = vunpack.c.h.b16 %v2725
          %v3288 = vunpack.c.l.b16 %v2726
          %v3289 = vunpack.c.h.b16 %v2726
          %v3290 = vunpack.c.l.b16 %v2727
          %v3291 = vunpack.c.h.b16 %v2727
          %v3292 = vunpack.c.l.b16 %v2728
          %v3293 = vunpack.c.h.b16 %v2728
          %v3294 = vunpack.c.l.b16 %v2729
          %v3295 = vunpack.c.h.b16 %v2729
          %v3296 = vunpack.c.l.b16 %v2730
          %v3297 = vunpack.c.h.b16 %v2730
          %v3298 = vunpack.c.l.b16 %v2731
          %v3299 = vunpack.c.h.b16 %v2731
          %v3300 = vunpack.c.l.b16 %v2732
          %v3301 = vunpack.c.h.b16 %v2732
          %v3302 = vunpack.c.l.b16 %v2733
          %v3303 = vunpack.c.h.b16 %v2733
          %v3304 = vunpack.c.l.b16 %v2734
          %v3305 = vunpack.c.h.b16 %v2734
          %v3306 = vunpack.c.l.b16 %v2735
          %v3307 = vunpack.c.h.b16 %v2735
          %v3308 = vunpack.c.l.b16 %v2736
          %v3309 = vunpack.c.h.b16 %v2736
          %v3310 = vunpack.c.l.b16 %v2737
          %v3311 = vunpack.c.h.b16 %v2737
          %v3312 = vunpack.c.l.b16 %v2738
          %v3313 = vunpack.c.h.b16 %v2738
          %v3314 = vunpack.c.l.b16 %v2739
          %v3315 = vunpack.c.h.b16 %v2739
          %v3316 = vunpack.c.l.b16 %v2740
          %v3317 = vunpack.c.h.b16 %v2740
          %v3318 = vunpack.c.l.b16 %v2741
          %v3319 = vunpack.c.h.b16 %v2741
          %v3320 = vunpack.c.l.b16 %v2742
          %v3321 = vunpack.c.h.b16 %v2742
          %v3322 = vunpack.c.l.b16 %v2743
          %v3323 = vunpack.c.h.b16 %v2743
          %v3324 = vunpack.c.l.b16 %v2744
          %v3325 = vunpack.c.h.b16 %v2744
          %v3326 = vunpack.c.l.b16 %v2745
          %v3327 = vunpack.c.h.b16 %v2745
          %v3328 = vunpack.c.l.b16 %v2746
          %v3329 = vunpack.c.h.b16 %v2746
          %v3330 = vunpack.c.l.b16 %v2747
          %v3331 = vunpack.c.h.b16 %v2747
          %v3332 = vunpack.c.l.b16 %v2748
          %v3333 = vunpack.c.h.b16 %v2748
          %v3334 = vunpack.c.l.b16 %v2749
          %v3335 = vunpack.c.h.b16 %v2749
          %v3336 = vunpack.c.l.b16 %v2750
          %v3337 = vunpack.c.h.b16 %v2750
          %v3338 = vunpack.c.l.b16 %v2751
          %v3339 = vunpack.c.h.b16 %v2751
          %v3340 = vunpack.c.l.b16 %v2752
          %v3341 = vunpack.c.h.b16 %v2752
          %v3342 = vunpack.c.l.b16 %v2753
          %v3343 = vunpack.c.h.b16 %v2753
          %v3344 = vunpack.c.l.b16 %v2754
          %v3345 = vunpack.c.h.b16 %v2754
          %v3346 = vunpack.c.l.b16 %v2755
          %v3347 = vunpack.c.h.b16 %v2755
          %v3348 = vunpack.c.l.b16 %v2756
          %v3349 = vunpack.c.h.b16 %v2756
          %v3350 = vunpack.c.l.b16 %v2757
          %v3351 = vunpack.c.h.b16 %v2757
          %v3352 = vunpack.c.l.b16 %v2758
          %v3353 = vunpack.c.h.b16 %v2758
          %v3354 = vunpack.c.l.b16 %v2759
          %v3355 = vunpack.c.h.b16 %v2759
          %v3356 = vunpack.c.l.b16 %v2760
          %v3357 = vunpack.c.h.b16 %v2760
          %v3358 = vunpack.c.l.b16 %v2761
          %v3359 = vunpack.c.h.b16 %v2761
          %v3360 = vunpack.c.l.b16 %v2762
          %v3361 = vunpack.c.h.b16 %v2762
          %v3362 = vunpack.c.l.b16 %v2763
          %v3363 = vunpack.c.h.b16 %v2763
          %v3364 = vunpack.c.l.b16 %v2764
          %v3365 = vunpack.c.h.b16 %v2764
          %v3366 = vunpack.c.l.b16 %v2765
          %v3367 = vunpack.c.h.b16 %v2765
          %v3368 = vunpack.c.l.b16 %v2766
          %v3369 = vunpack.c.h.b16 %v2766
          %v3370 = vunpack.c.l.b16 %v2767
          %v3371 = vunpack.c.h.b16 %v2767
          %v3372 = vunpack.c.l.b16 %v2768
          %v3373 = vunpack.c.h.b16 %v2768
          %v3374 = vunpack.c.l.b16 %v2769
          %v3375 = vunpack.c.h.b16 %v2769
          %v3376 = vunpack.c.l.b16 %v2770
          %v3377 = vunpack.c.h.b16 %v2770
          %v3378 = vunpack.c.l.b16 %v2771
          %v3379 = vunpack.c.h.b16 %v2771
          %v3380 = vunpack.c.l.b16 %v2772
          %v3381 = vunpack.c.h.b16 %v2772
          %v3382 = vunpack.c.l.b16 %v2773
          %v3383 = vunpack.c.h.b16 %v2773
          %v3384 = vunpack.c.l.b16 %v2774
          %v3385 = vunpack.c.h.b16 %v2774
          %v3386 = vunpack.c.l.b16 %v2775
          %v3387 = vunpack.c.h.b16 %v2775
          %v3388 = vunpack.c.l.b16 %v2776
          %v3389 = vunpack.c.h.b16 %v2776
          %v3390 = vunpack.c.l.b16 %v2777
          %v3391 = vunpack.c.h.b16 %v2777
          %v3392 = vunpack.c.l.b16 %v2778
          %v3393 = vunpack.c.h.b16 %v2778
          %v3394 = vunpack.c.l.b16 %v2779
          %v3395 = vunpack.c.h.b16 %v2779
          %v3396 = vunpack.c.l.b16 %v2780
          %v3397 = vunpack.c.h.b16 %v2780
          %v3398 = vunpack.c.l.b16 %v2781
          %v3399 = vunpack.c.h.b16 %v2781
          %v3400 = vunpack.c.l.b16 %v2782
          %v3401 = vunpack.c.h.b16 %v2782
          %v3402 = vunpack.c.l.b16 %v2783
          %v3403 = vunpack.c.h.b16 %v2783
          %v3404 = vunpack.c.l.b16 %v2784
          %v3405 = vunpack.c.h.b16 %v2784
          %v3406 = vunpack.c.l.b16 %v2785
          %v3407 = vunpack.c.h.b16 %v2785
          %v3408 = vunpack.c.l.b16 %v2786
          %v3409 = vunpack.c.h.b16 %v2786
          %v3410 = vunpack.c.l.b16 %v2787
          %v3411 = vunpack.c.h.b16 %v2787
          %v3412 = vunpack.c.l.b16 %v2788
          %v3413 = vunpack.c.h.b16 %v2788
          %v3414 = vunpack.c.l.b16 %v2789
          %v3415 = vunpack.c.h.b16 %v2789
          %v3416 = vunpack.c.l.b16 %v2790
          %v3417 = vunpack.c.h.b16 %v2790
          %v3418 = vunpack.c.l.b16 %v2791
          %v3419 = vunpack.c.h.b16 %v2791
          %v3420 = vunpack.c.l.b16 %v2792
          %v3421 = vunpack.c.h.b16 %v2792
          %v3422 = vunpack.c.l.b16 %v2793
          %v3423 = vunpack.c.h.b16 %v2793
          %v3424 = vunpack.c.l.b16 %v2794
          %v3425 = vunpack.c.h.b16 %v2794
          %v3426 = vunpack.c.l.b16 %v2795
          %v3427 = vunpack.c.h.b16 %v2795
          %v3428 = vunpack.c.l.b16 %v2796
          %v3429 = vunpack.c.h.b16 %v2796
          %v3430 = vunpack.c.l.b16 %v2797
          %v3431 = vunpack.c.h.b16 %v2797
          %v3432 = vunpack.c.l.b16 %v2798
          %v3433 = vunpack.c.h.b16 %v2798
          %v3434 = vunpack.c.l.b16 %v2799
          %v3435 = vunpack.c.h.b16 %v2799
          %v3436 = vunpack.c.l.b16 %v2800
          %v3437 = vunpack.c.h.b16 %v2800
          %v3438 = vunpack.c.l.b16 %v2801
          %v3439 = vunpack.c.h.b16 %v2801
          %v3440 = vunpack.c.l.b16 %v2802
          %v3441 = vunpack.c.h.b16 %v2802
          %v3442 = vunpack.c.l.b16 %v2803
          %v3443 = vunpack.c.h.b16 %v2803
          %v3444 = vunpack.c.l.b16 %v2804
          %v3445 = vunpack.c.h.b16 %v2804
          %v3446 = vunpack.c.l.b16 %v2805
          %v3447 = vunpack.c.h.b16 %v2805
          %v3448 = vunpack.c.l.b16 %v2806
          %v3449 = vunpack.c.h.b16 %v2806
          %v3450 = vunpack.c.l.b16 %v2807
          %v3451 = vunpack.c.h.b16 %v2807
          %v3452 = vunpack.c.l.b16 %v2808
          %v3453 = vunpack.c.h.b16 %v2808
          %v3454 = vunpack.c.l.b16 %v2809
          %v3455 = vunpack.c.h.b16 %v2809
          %v3456 = vunpack.c.l.b16 %v2810
          %v3457 = vunpack.c.h.b16 %v2810
          %v3458 = vunpack.c.l.b16 %v2811
          %v3459 = vunpack.c.h.b16 %v2811
          %v3460 = vunpack.c.l.b16 %v2812
          %v3461 = vunpack.c.h.b16 %v2812
          %v3462 = vunpack.c.l.b16 %v2813
          %v3463 = vunpack.c.h.b16 %v2813
          %v3464 = vunpack.c.l.b16 %v2814
          %v3465 = vunpack.c.h.b16 %v2814
          %v3466 = vunpack.c.l.b16 %v2815
          %v3467 = vunpack.c.h.b16 %v2815
          %v3468 = vunpack.c.l.b16 %v2816
          %v3469 = vunpack.c.h.b16 %v2816
          %v3470 = vunpack.c.l.b16 %v2817
          %v3471 = vunpack.c.h.b16 %v2817
          %v3472 = vunpack.c.l.b16 %v2818
          %v3473 = vunpack.c.h.b16 %v2818
          %v3474 = vunpack.c.l.b16 %v2819
          %v3475 = vunpack.c.h.b16 %v2819
          %v3476 = vunpack.c.l.b16 %v2820
          %v3477 = vunpack.c.h.b16 %v2820
          %v3478 = vunpack.c.l.b16 %v2821
          %v3479 = vunpack.c.h.b16 %v2821
          %v3480 = vunpack.c.l.b16 %v2822
          %v3481 = vunpack.c.h.b16 %v2822
          %v3482 = vunpack.c.l.b16 %v2823
          %v3483 = vunpack.c.h.b16 %v2823
          %v3484 = vunpack.c.l.b16 %v2824
          %v3485 = vunpack.c.h.b16 %v2824
          %v3486 = vunpack.c.l.b16 %v2825
          %v3487 = vunpack.c.h.b16 %v2825
          %v3488 = vunpack.c.l.b16 %v2826
          %v3489 = vunpack.c.h.b16 %v2826
          %v3490 = vunpack.c.l.b16 %v2827
          %v3491 = vunpack.c.h.b16 %v2827
          %v3492 = vunpack.c.l.b16 %v2828
          %v3493 = vunpack.c.h.b16 %v2828
          %v3494 = vunpack.c.l.b16 %v2829
          %v3495 = vunpack.c.h.b16 %v2829
          %v3496 = vunpack.c.l.b16 %v2830
          %v3497 = vunpack.c.h.b16 %v2830
          %v3498 = vunpack.c.l.b16 %v2831
          %v3499 = vunpack.c.h.b16 %v2831
          %v3500 = vunpack.c.l.b16 %v2832
          %v3501 = vunpack.c.h.b16 %v2832
          %v3502 = vunpack.c.l.b16 %v2833
          %v3503 = vunpack.c.h.b16 %v2833
          %v3504 = vunpack.c.l.b16 %v2834
          %v3505 = vunpack.c.h.b16 %v2834
          %v3506 = vunpack.c.l.b16 %v2835
          %v3507 = vunpack.c.h.b16 %v2835
          %v3508 = vunpack.c.l.b16 %v2836
          %v3509 = vunpack.c.h.b16 %v2836
          %v3510 = vunpack.c.l.b16 %v2837
          %v3511 = vunpack.c.h.b16 %v2837
          %v3512 = vunpack.c.l.b16 %v2838
          %v3513 = vunpack.c.h.b16 %v2838
          %v3514 = vunpack.c.l.b16 %v2839
          %v3515 = vunpack.c.h.b16 %v2839
          %v3516 = vunpack.c.l.b16 %v2840
          %v3517 = vunpack.c.h.b16 %v2840
          %v3518 = vunpack.c.l.b16 %v2841
          %v3519 = vunpack.c.h.b16 %v2841
          %v3520 = vunpack.c.l.b16 %v2842
          %v3521 = vunpack.c.h.b16 %v2842
          %v3522 = vunpack.c.l.b16 %v2843
          %v3523 = vunpack.c.h.b16 %v2843
          %v3524 = vunpack.c.l.b16 %v2844
          %v3525 = vunpack.c.h.b16 %v2844
          %v3526 = vunpack.c.l.b16 %v2845
          %v3527 = vunpack.c.h.b16 %v2845
          %v3528 = vunpack.c.l.b16 %v2846
          %v3529 = vunpack.c.h.b16 %v2846
          %v3530 = vunpack.c.l.b16 %v2847
          %v3531 = vunpack.c.h.b16 %v2847
          %v3532 = vunpack.c.l.b16 %v2848
          %v3533 = vunpack.c.h.b16 %v2848
          %v3534 = vunpack.c.l.b16 %v2849
          %v3535 = vunpack.c.h.b16 %v2849
          %v3536 = vunpack.c.l.b16 %v2850
          %v3537 = vunpack.c.h.b16 %v2850
          %v3538 = vunpack.c.l.b16 %v2851
          %v3539 = vunpack.c.h.b16 %v2851
          %v3540 = vunpack.c.l.b16 %v2852
          %v3541 = vunpack.c.h.b16 %v2852
          %v3542 = vunpack.c.l.b16 %v2853
          %v3543 = vunpack.c.h.b16 %v2853
          %v3544 = vunpack.c.l.b16 %v2854
          %v3545 = vunpack.c.h.b16 %v2854
          %v3546 = vunpack.c.l.b16 %v2855
          %v3547 = vunpack.c.h.b16 %v2855
          %v3548 = vunpack.c.l.b16 %v2856
          %v3549 = vunpack.c.h.b16 %v2856
          %v3550 = vunpack.c.l.b16 %v2857
          %v3551 = vunpack.c.h.b16 %v2857
          %v3552 = vunpack.c.l.b16 %v2858
          %v3553 = vunpack.c.h.b16 %v2858
          %v3554 = vunpack.c.l.b16 %v2859
          %v3555 = vunpack.c.h.b16 %v2859
          %v3556 = vunpack.c.l.b16 %v2860
          %v3557 = vunpack.c.h.b16 %v2860
          %v3558 = vunpack.c.l.b16 %v2861
          %v3559 = vunpack.c.h.b16 %v2861
          %v3560 = vunpack.c.l.b16 %v2862
          %v3561 = vunpack.c.h.b16 %v2862
          %v3562 = vunpack.c.l.b16 %v2863
          %v3563 = vunpack.c.h.b16 %v2863
          %v3564 = vunpack.c.l.b16 %v2864
          %v3565 = vunpack.c.h.b16 %v2864
          %v3566 = vunpack.c.l.b16 %v2865
          %v3567 = vunpack.c.h.b16 %v2865
          %v3568 = vunpack.c.l.b16 %v2866
          %v3569 = vunpack.c.h.b16 %v2866
          %v3570 = vunpack.c.l.b16 %v2867
          %v3571 = vunpack.c.h.b16 %v2867
          %v3572 = vunpack.c.l.b16 %v2868
          %v3573 = vunpack.c.h.b16 %v2868
          %v3574 = vunpack.c.l.b16 %v2869
          %v3575 = vunpack.c.h.b16 %v2869
          %v3576 = vunpack.c.l.b16 %v2870
          %v3577 = vunpack.c.h.b16 %v2870
          %v3578 = vunpack.c.l.b16 %v2871
          %v3579 = vunpack.c.h.b16 %v2871
          %v3580 = vunpack.c.l.b16 %v2872
          %v3581 = vunpack.c.h.b16 %v2872
          %v3582 = vunpack.c.l.b16 %v2873
          %v3583 = vunpack.c.h.b16 %v2873
          %v3584 = vunpack.c.l.b16 %v2874
          %v3585 = vunpack.c.h.b16 %v2874
          %v3586 = vunpack.c.l.b16 %v2875
          %v3587 = vunpack.c.h.b16 %v2875
          %v3588 = vunpack.c.l.b16 %v2876
          %v3589 = vunpack.c.h.b16 %v2876
          %v3590 = vunpack.c.l.b16 %v2877
          %v3591 = vunpack.c.h.b16 %v2877
          %v3592 = vunpack.c.l.b16 %v2878
          %v3593 = vunpack.c.h.b16 %v2878
          %v3594 = vunpack.c.l.b16 %v2879
          %v3595 = vunpack.c.h.b16 %v2879
          %v3596 = vunpack.c.l.b16 %v2880
          %v3597 = vunpack.c.h.b16 %v2880
          %v3598 = vunpack.c.l.b16 %v2881
          %v3599 = vunpack.c.h.b16 %v2881
          %v3600 = vunpack.c.l.b16 %v2882
          %v3601 = vunpack.c.h.b16 %v2882
          %v3602 = vunpack.c.l.b16 %v2883
          %v3603 = vunpack.c.h.b16 %v2883
          %v3604 = vunpack.c.l.b16 %v2884
          %v3605 = vunpack.c.h.b16 %v2884
          %v3606 = vunpack.c.l.b16 %v2885
          %v3607 = vunpack.c.h.b16 %v2885
          %v3608 = vunpack.c.l.b16 %v2886
          %v3609 = vunpack.c.h.b16 %v2886
          %v3610 = vunpack.c.l.b16 %v2887
          %v3611 = vunpack.c.h.b16 %v2887
          %v3612 = vunpack.c.l.b16 %v2888
          %v3613 = vunpack.c.h.b16 %v2888
          %v3614 = vunpack.c.l.b16 %v2889
          %v3615 = vunpack.c.h.b16 %v2889
          %v3616 = vunpack.c.l.b16 %v2890
          %v3617 = vunpack.c.h.b16 %v2890
          %v3618 = vunpack.c.l.b16 %v2891
          %v3619 = vunpack.c.h.b16 %v2891
          %v3620 = vunpack.c.l.b16 %v2892
          %v3621 = vunpack.c.h.b16 %v2892
          %v3622 = vunpack.c.l.b16 %v2893
          %v3623 = vunpack.c.h.b16 %v2893
          %v3624 = vunpack.c.l.b16 %v2894
          %v3625 = vunpack.c.h.b16 %v2894
          %v3626 = vunpack.c.l.b16 %v2895
          %v3627 = vunpack.c.h.b16 %v2895
          %v3628 = vunpack.c.l.b16 %v2896
          %v3629 = vunpack.c.h.b16 %v2896
          %v3630 = vunpack.c.l.b16 %v2897
          %v3631 = vunpack.c.h.b16 %v2897
          %v3632 = vunpack.c.l.b16 %v2898
          %v3633 = vunpack.c.h.b16 %v2898
          %v3634 = vunpack.c.l.b16 %v2899
          %v3635 = vunpack.c.h.b16 %v2899
          %v3636 = vunpack.c.l.b16 %v2900
          %v3637 = vunpack.c.h.b16 %v2900
          %v3638 = vunpack.c.l.b16 %v2901
          %v3639 = vunpack.c.h.b16 %v2901
          %v3640 = vunpack.c.l.b16 %v2902
          %v3641 = vunpack.c.h.b16 %v2902
          %v3642 = vunpack.c.l.b16 %v2903
          %v3643 = vunpack.c.h.b16 %v2903
          %v3644 = vunpack.c.l.b16 %v2904
          %v3645 = vunpack.c.h.b16 %v2904
          %v3646 = vunpack.c.l.b16 %v2905
          %v3647 = vunpack.c.h.b16 %v2905
          %v3648 = vunpack.c.l.b16 %v2906
          %v3649 = vunpack.c.h.b16 %v2906
          %v3650 = vunpack.c.l.b16 %v2907
          %v3651 = vunpack.c.h.b16 %v2907
          %v3652 = vunpack.c.l.b16 %v2908
          %v3653 = vunpack.c.h.b16 %v2908
          %v3654 = vunpack.c.l.b16 %v2909
          %v3655 = vunpack.c.h.b16 %v2909
          %v3656 = vunpack.c.l.b16 %v2910
          %v3657 = vunpack.c.h.b16 %v2910
          %v3658 = vunpack.c.l.b16 %v2911
          %v3659 = vunpack.c.h.b16 %v2911
          %v3660 = vunpack.c.l.b16 %v2912
          %v3661 = vunpack.c.h.b16 %v2912
          %v3662 = vunpack.c.l.b16 %v2913
          %v3663 = vunpack.c.h.b16 %v2913
          %v3664 = vunpack.c.l.b16 %v2914
          %v3665 = vunpack.c.h.b16 %v2914
          %v3666 = vunpack.c.l.b16 %v2915
          %v3667 = vunpack.c.h.b16 %v2915
          %v3668 = vunpack.c.l.b16 %v2916
          %v3669 = vunpack.c.h.b16 %v2916
          %v3670 = vunpack.c.l.b16 %v2917
          %v3671 = vunpack.c.h.b16 %v2917
          %v3672 = vunpack.c.l.b16 %v2918
          %v3673 = vunpack.c.h.b16 %v2918
          %v3674 = vunpack.c.l.b16 %v2919
          %v3675 = vunpack.c.h.b16 %v2919
          %v3676 = vunpack.c.l.b16 %v2920
          %v3677 = vunpack.c.h.b16 %v2920
          %v3678 = vunpack.c.l.b16 %v2921
          %v3679 = vunpack.c.h.b16 %v2921
          %v3680 = vunpack.c.l.b16 %v2922
          %v3681 = vunpack.c.h.b16 %v2922
          %v3682 = vunpack.c.l.b16 %v2923
          %v3683 = vunpack.c.h.b16 %v2923
          %v3684 = vunpack.c.l.b16 %v2924
          %v3685 = vunpack.c.h.b16 %v2924
          %v3686 = vunpack.c.l.b16 %v2925
          %v3687 = vunpack.c.h.b16 %v2925
          %v3688 = vunpack.c.l.b16 %v2926
          %v3689 = vunpack.c.h.b16 %v2926
          %v3690 = vunpack.c.l.b16 %v2927
          %v3691 = vunpack.c.h.b16 %v2927
          %v3692 = vunpack.c.l.b16 %v2928
          %v3693 = vunpack.c.h.b16 %v2928
          %v3694 = vunpack.c.l.b16 %v2929
          %v3695 = vunpack.c.h.b16 %v2929
          %v3696 = vunpack.c.l.b16 %v2930
          %v3697 = vunpack.c.h.b16 %v2930
          %v3698 = vunpack.c.l.b16 %v2931
          %v3699 = vunpack.c.h.b16 %v2931
          %v3700 = vunpack.c.l.b16 %v2932
          %v3701 = vunpack.c.h.b16 %v2932
          %v3702 = vunpack.c.l.b16 %v2933
          %v3703 = vunpack.c.h.b16 %v2933
          %v3704 = vunpack.c.l.b16 %v2934
          %v3705 = vunpack.c.h.b16 %v2934
          %v3706 = vunpack.c.l.b16 %v2935
          %v3707 = vunpack.c.h.b16 %v2935
          %v3708 = vunpack.c.l.b16 %v2936
          %v3709 = vunpack.c.h.b16 %v2936
          %v3710 = vunpack.c.l.b16 %v2937
          %v3711 = vunpack.c.h.b16 %v2937
          %v3712 = vunpack.c.l.b16 %v2938
          %v3713 = vunpack.c.h.b16 %v2938
          %v3714 = vunpack.c.l.b16 %v2939
          %v3715 = vunpack.c.h.b16 %v2939
          %v3716 = vunpack.c.l.b16 %v2940
          %v3717 = vunpack.c.h.b16 %v2940
          %v3718 = vunpack.c.l.b16 %v2941
          %v3719 = vunpack.c.h.b16 %v2941
          %v3720 = vpack.c.b16 %v3212, %v3208
          %v3721 = vpack.c.b16 %v3213, %v3209
          %v3722 = vpack.c.b16 %v3214, %v3210
          %v3723 = vpack.c.b16 %v3215, %v3211
          %v3724 = vpack.c.b16 %v3220, %v3216
          %v3725 = vpack.c.b16 %v3221, %v3217
          %v3726 = vpack.c.b16 %v3222, %v3218
          %v3727 = vpack.c.b16 %v3223, %v3219
          %v3728 = vpack.c.b16 %v3228, %v3224
          %v3729 = vpack.c.b16 %v3229, %v3225
          %v3730 = vpack.c.b16 %v3230, %v3226
          %v3731 = vpack.c.b16 %v3231, %v3227
          %v3732 = vpack.c.b16 %v3236, %v3232
          %v3733 = vpack.c.b16 %v3237, %v3233
          %v3734 = vpack.c.b16 %v3238, %v3234
          %v3735 = vpack.c.b16 %v3239, %v3235
          %v3736 = vpack.c.b16 %v3244, %v3240
          %v3737 = vpack.c.b16 %v3245, %v3241
          %v3738 = vpack.c.b16 %v3246, %v3242
          %v3739 = vpack.c.b16 %v3247, %v3243
          %v3740 = vpack.c.b16 %v3252, %v3248
          %v3741 = vpack.c.b16 %v3253, %v3249
          %v3742 = vpack.c.b16 %v3254, %v3250
          %v3743 = vpack.c.b16 %v3255, %v3251
          %v3744 = vpack.c.b16 %v3260, %v3256
          %v3745 = vpack.c.b16 %v3261, %v3257
          %v3746 = vpack.c.b16 %v3262, %v3258
          %v3747 = vpack.c.b16 %v3263, %v3259
          %v3748 = vpack.c.b16 %v3268, %v3264
          %v3749 = vpack.c.b16 %v3269, %v3265
          %v3750 = vpack.c.b16 %v3270, %v3266
          %v3751 = vpack.c.b16 %v3271, %v3267
          %v3752 = vpack.c.b16 %v3276, %v3272
          %v3753 = vpack.c.b16 %v3277, %v3273
          %v3754 = vpack.c.b16 %v3278, %v3274
          %v3755 = vpack.c.b16 %v3279, %v3275
          %v3756 = vpack.c.b16 %v3284, %v3280
          %v3757 = vpack.c.b16 %v3285, %v3281
          %v3758 = vpack.c.b16 %v3286, %v3282
          %v3759 = vpack.c.b16 %v3287, %v3283
          %v3760 = vpack.c.b16 %v3292, %v3288
          %v3761 = vpack.c.b16 %v3293, %v3289
          %v3762 = vpack.c.b16 %v3294, %v3290
          %v3763 = vpack.c.b16 %v3295, %v3291
          %v3764 = vpack.c.b16 %v3300, %v3296
          %v3765 = vpack.c.b16 %v3301, %v3297
          %v3766 = vpack.c.b16 %v3302, %v3298
          %v3767 = vpack.c.b16 %v3303, %v3299
          %v3768 = vpack.c.b16 %v3308, %v3304
          %v3769 = vpack.c.b16 %v3309, %v3305
          %v3770 = vpack.c.b16 %v3310, %v3306
          %v3771 = vpack.c.b16 %v3311, %v3307
          %v3772 = vpack.c.b16 %v3316, %v3312
          %v3773 = vpack.c.b16 %v3317, %v3313
          %v3774 = vpack.c.b16 %v3318, %v3314
          %v3775 = vpack.c.b16 %v3319, %v3315
          %v3776 = vpack.c.b16 %v3324, %v3320
          %v3777 = vpack.c.b16 %v3325, %v3321
          %v3778 = vpack.c.b16 %v3326, %v3322
          %v3779 = vpack.c.b16 %v3327, %v3323
          %v3780 = vpack.c.b16 %v3332, %v3328
          %v3781 = vpack.c.b16 %v3333, %v3329
          %v3782 = vpack.c.b16 %v3334, %v3330
          %v3783 = vpack.c.b16 %v3335, %v3331
          %v3784 = vpack.c.b16 %v3340, %v3336
          %v3785 = vpack.c.b16 %v3341, %v3337
          %v3786 = vpack.c.b16 %v3342, %v3338
          %v3787 = vpack.c.b16 %v3343, %v3339
          %v3788 = vpack.c.b16 %v3348, %v3344
          %v3789 = vpack.c.b16 %v3349, %v3345
          %v3790 = vpack.c.b16 %v3350, %v3346
          %v3791 = vpack.c.b16 %v3351, %v3347
          %v3792 = vpack.c.b16 %v3356, %v3352
          %v3793 = vpack.c.b16 %v3357, %v3353
          %v3794 = vpack.c.b16 %v3358, %v3354
          %v3795 = vpack.c.b16 %v3359, %v3355
          %v3796 = vpack.c.b16 %v3364, %v3360
          %v3797 = vpack.c.b16 %v3365, %v3361
          %v3798 = vpack.c.b16 %v3366, %v3362
          %v3799 = vpack.c.b16 %v3367, %v3363
          %v3800 = vpack.c.b16 %v3372, %v3368
          %v3801 = vpack.c.b16 %v3373, %v3369
          %v3802 = vpack.c.b16 %v3374, %v3370
          %v3803 = vpack.c.b16 %v3375, %v3371
          %v3804 = vpack.c.b16 %v3380, %v3376
          %v3805 = vpack.c.b16 %v3381, %v3377
          %v3806 = vpack.c.b16 %v3382, %v3378
          %v3807 = vpack.c.b16 %v3383, %v3379
          %v3808 = vpack.c.b16 %v3388, %v3384
          %v3809 = vpack.c.b16 %v3389, %v3385
          %v3810 = vpack.c.b16 %v3390, %v3386
          %v3811 = vpack.c.b16 %v3391, %v3387
          %v3812 = vpack.c.b16 %v3396, %v3392
          %v3813 = vpack.c.b16 %v3397, %v3393
          %v3814 = vpack.c.b16 %v3398, %v3394
          %v3815 = vpack.c.b16 %v3399, %v3395
          %v3816 = vpack.c.b16 %v3404, %v3400
          %v3817 = vpack.c.b16 %v3405, %v3401
          %v3818 = vpack.c.b16 %v3406, %v3402
          %v3819 = vpack.c.b16 %v3407, %v3403
          %v3820 = vpack.c.b16 %v3412, %v3408
          %v3821 = vpack.c.b16 %v3413, %v3409
          %v3822 = vpack.c.b16 %v3414, %v3410
          %v3823 = vpack.c.b16 %v3415, %v3411
          %v3824 = vpack.c.b16 %v3420, %v3416
          %v3825 = vpack.c.b16 %v3421, %v3417
          %v3826 = vpack.c.b16 %v3422, %v3418
          %v3827 = vpack.c.b16 %v3423, %v3419
          %v3828 = vpack.c.b16 %v3428, %v3424
          %v3829 = vpack.c.b16 %v3429, %v3425
          %v3830 = vpack.c.b16 %v3430, %v3426
          %v3831 = vpack.c.b16 %v3431, %v3427
          %v3832 = vpack.c.b16 %v3436, %v3432
          %v3833 = vpack.c.b16 %v3437, %v3433
          %v3834 = vpack.c.b16 %v3438, %v3434
          %v3835 = vpack.c.b16 %v3439, %v3435
          %v3836 = vpack.c.b16 %v3444, %v3440
          %v3837 = vpack.c.b16 %v3445, %v3441
          %v3838 = vpack.c.b16 %v3446, %v3442
          %v3839 = vpack.c.b16 %v3447, %v3443
          %v3840 = vpack.c.b16 %v3452, %v3448
          %v3841 = vpack.c.b16 %v3453, %v3449
          %v3842 = vpack.c.b16 %v3454, %v3450
          %v3843 = vpack.c.b16 %v3455, %v3451
          %v3844 = vpack.c.b16 %v3460, %v3456
          %v3845 = vpack.c.b16 %v3461, %v3457
          %v3846 = vpack.c.b16 %v3462, %v3458
          %v3847 = vpack.c.b16 %v3463, %v3459
          %v3848 = vpack.c.b16 %v3468, %v3464
          %v3849 = vpack.c.b16 %v3469, %v3465
          %v3850 = vpack.c.b16 %v3470, %v3466
          %v3851 = vpack.c.b16 %v3471, %v3467
          %v3852 = vpack.c.b16 %v3476, %v3472
          %v3853 = vpack.c.b16 %v3477, %v3473
          %v3854 = vpack.c.b16 %v3478, %v3474
          %v3855 = vpack.c.b16 %v3479, %v3475
          %v3856 = vpack.c.b16 %v3484, %v3480
          %v3857 = vpack.c.b16 %v3485, %v3481
          %v3858 = vpack.c.b16 %v3486, %v3482
          %v3859 = vpack.c.b16 %v3487, %v3483
          %v3860 = vpack.c.b16 %v3492, %v3488
          %v3861 = vpack.c.b16 %v3493, %v3489
          %v3862 = vpack.c.b16 %v3494, %v3490
          %v3863 = vpack.c.b16 %v3495, %v3491
          %v3864 = vpack.c.b16 %v3500, %v3496
          %v3865 = vpack.c.b16 %v3501, %v3497
          %v3866 = vpack.c.b16 %v3502, %v3498
          %v3867 = vpack.c.b16 %v3503, %v3499
          %v3868 = vpack.c.b16 %v3508, %v3504
          %v3869 = vpack.c.b16 %v3509, %v3505
          %v3870 = vpack.c.b16 %v3510, %v3506
          %v3871 = vpack.c.b16 %v3511, %v3507
          %v3872 = vpack.c.b16 %v3516, %v3512
          %v3873 = vpack.c.b16 %v3517, %v3513
          %v3874 = vpack.c.b16 %v3518, %v3514
          %v3875 = vpack.c.b16 %v3519, %v3515
          %v3876 = vpack.c.b16 %v3524, %v3520
          %v3877 = vpack.c.b16 %v3525, %v3521
          %v3878 = vpack.c.b16 %v3526, %v3522
          %v3879 = vpack.c.b16 %v3527, %v3523
          %v3880 = vpack.c.b16 %v3532, %v3528
          %v3881 = vpack.c.b16 %v3533, %v3529
          %v3882 = vpack.c.b16 %v3534, %v3530
          %v3883 = vpack.c.b16 %v3535, %v3531
          %v3884 = vpack.c.b16 %v3540, %v3536
          %v3885 = vpack.c.b16 %v3541, %v3537
          %v3886 = vpack.c.b16 %v3542, %v3538
          %v3887 = vpack.c.b16 %v3543, %v3539
          %v3888 = vpack.c.b16 %v3548, %v3544
          %v3889 = vpack.c.b16 %v3549, %v3545
          %v3890 = vpack.c.b16 %v3550, %v3546
          %v3891 = vpack.c.b16 %v3551, %v3547
          %v3892 = vpack.c.b16 %v3556, %v3552
          %v3893 = vpack.c.b16 %v3557, %v3553
          %v3894 = vpack.c.b16 %v3558, %v3554
          %v3895 = vpack.c.b16 %v3559, %v3555
          %v3896 = vpack.c.b16 %v3564, %v3560
          %v3897 = vpack.c.b16 %v3565, %v3561
          %v3898 = vpack.c.b16 %v3566, %v3562
          %v3899 = vpack.c.b16 %v3567, %v3563
          %v3900 = vpack.c.b16 %v3572, %v3568
          %v3901 = vpack.c.b16 %v3573, %v3569
          %v3902 = vpack.c.b16 %v3574, %v3570
          %v3903 = vpack.c.b16 %v3575, %v3571
          %v3904 = vpack.c.b16 %v3580, %v3576
          %v3905 = vpack.c.b16 %v3581, %v3577
          %v3906 = vpack.c.b16 %v3582, %v3578
          %v3907 = vpack.c.b16 %v3583, %v3579
          %v3908 = vpack.c.b16 %v3588, %v3584
          %v3909 = vpack.c.b16 %v3589, %v3585
          %v3910 = vpack.c.b16 %v3590, %v3586
          %v3911 = vpack.c.b16 %v3591, %v3587
          %v3912 = vpack.c.b16 %v3596, %v3592
          %v3913 = vpack.c.b16 %v3597, %v3593
          %v3914 = vpack.c.b16 %v3598, %v3594
          %v3915 = vpack.c.b16 %v3599, %v3595
          %v3916 = vpack.c.b16 %v3604, %v3600
          %v3917 = vpack.c.b16 %v3605, %v3601
          %v3918 = vpack.c.b16 %v3606, %v3602
          %v3919 = vpack.c.b16 %v3607, %v3603
          %v3920 = vpack.c.b16 %v3612, %v3608
          %v3921 = vpack.c.b16 %v3613, %v3609
          %v3922 = vpack.c.b16 %v3614, %v3610
          %v3923 = vpack.c.b16 %v3615, %v3611
          %v3924 = vpack.c.b16 %v3620, %v3616
          %v3925 = vpack.c.b16 %v3621, %v3617
          %v3926 = vpack.c.b16 %v3622, %v3618
          %v3927 = vpack.c.b16 %v3623, %v3619
          %v3928 = vpack.c.b16 %v3628, %v3624
          %v3929 = vpack.c.b16 %v3629, %v3625
          %v3930 = vpack.c.b16 %v3630, %v3626
          %v3931 = vpack.c.b16 %v3631, %v3627
          %v3932 = vpack.c.b16 %v3636, %v3632
          %v3933 = vpack.c.b16 %v3637, %v3633
          %v3934 = vpack.c.b16 %v3638, %v3634
          %v3935 = vpack.c.b16 %v3639, %v3635
          %v3936 = vpack.c.b16 %v3644, %v3640
          %v3937 = vpack.c.b16 %v3645, %v3641
          %v3938 = vpack.c.b16 %v3646, %v3642
          %v3939 = vpack.c.b16 %v3647, %v3643
          %v3940 = vpack.c.b16 %v3652, %v3648
          %v3941 = vpack.c.b16 %v3653, %v3649
          %v3942 = vpack.c.b16 %v3654, %v3650
          %v3943 = vpack.c.b16 %v3655, %v3651
          %v3944 = vpack.c.b16 %v3660, %v3656
          %v3945 = vpack.c.b16 %v3661, %v3657
          %v3946 = vpack.c.b16 %v3662, %v3658
          %v3947 = vpack.c.b16 %v3663, %v3659
          %v3948 = vpack.c.b16 %v3668, %v3664
          %v3949 = vpack.c.b16 %v3669, %v3665
          %v3950 = vpack.c.b16 %v3670, %v3666
          %v3951 = vpack.c.b16 %v3671, %v3667
          %v3952 = vpack.c.b16 %v3676, %v3672
          %v3953 = vpack.c.b16 %v3677, %v3673
          %v3954 = vpack.c.b16 %v3678, %v3674
          %v3955 = vpack.c.b16 %v3679, %v3675
          %v3956 = vpack.c.b16 %v3684, %v3680
          %v3957 = vpack.c.b16 %v3685, %v3681
          %v3958 = vpack.c.b16 %v3686, %v3682
          %v3959 = vpack.c.b16 %v3687, %v3683
          %v3960 = vpack.c.b16 %v3692, %v3688
          %v3961 = vpack.c.b16 %v3693, %v3689
          %v3962 = vpack.c.b16 %v3694, %v3690
          %v3963 = vpack.c.b16 %v3695, %v3691
          %v3964 = vpack.c.b16 %v3700, %v3696
          %v3965 = vpack.c.b16 %v3701, %v3697
          %v3966 = vpack.c.b16 %v3702, %v3698
          %v3967 = vpack.c.b16 %v3703, %v3699
          %v3968 = vpack.c.b16 %v3708, %v3704
          %v3969 = vpack.c.b16 %v3709, %v3705
          %v3970 = vpack.c.b16 %v3710, %v3706
          %v3971 = vpack.c.b16 %v3711, %v3707
          %v3972 = vpack.c.b16 %v3716, %v3712
          %v3973 = vpack.c.b16 %v3717, %v3713
          %v3974 = vpack.c.b16 %v3718, %v3714
          %v3975 = vpack.c.b16 %v3719, %v3715
          %4232 = vmatpush.bf16.msra.mxu0 %v3748
          %4233 = vmatpush.bf16.msra.mxu0 %v3744
          %4234 = vmatpush.bf16.msra.mxu0 %v3740
          %4235 = vmatpush.bf16.msra.mxu0 %v3736
          %4236 = vmatpush.bf16.msra.mxu0 %v3732
          %4237 = vmatpush.bf16.msra.mxu0 %v3728
          %4238 = vmatpush.bf16.msra.mxu0 %v3724
          %4239 = vmatpush.bf16.msra.mxu0 %v3720
          %4240 = vmatmul.bf16.gmra.mxu0 %v2678
          %v4241 = vpop.f32.mrf.mxu0
          %v4242 = vadd.f32 %v2944, %v4241
          %v4243 = vpop.f32.mrf.mxu0
          %4244 = vdwg.mxu0
          %4245 = vmatpush.bf16.msra.mxu0 %v3780
          %4246 = vmatpush.bf16.msra.mxu0 %v3776
          %4247 = vmatpush.bf16.msra.mxu0 %v3772
          %4248 = vmatpush.bf16.msra.mxu0 %v3768
          %4249 = vmatpush.bf16.msra.mxu0 %v3764
          %4250 = vmatpush.bf16.msra.mxu0 %v3760
          %4251 = vmatpush.bf16.msra.mxu0 %v3756
          %4252 = vmatpush.bf16.msra.mxu0 %v3752
          %4253 = vmatmul.bf16.gmra.mxu0 %v2679
          %v4254 = vpop.f32.mrf.mxu0
          %v4255 = vadd.f32 %v4242, %v4254
          %v4256 = vpop.f32.mrf.mxu0
          %4257 = vdwg.mxu0
          %4258 = vmatpush.bf16.msra.mxu0 %v3812
          %4259 = vmatpush.bf16.msra.mxu0 %v3808
          %4260 = vmatpush.bf16.msra.mxu0 %v3804
          %4261 = vmatpush.bf16.msra.mxu0 %v3800
          %4262 = vmatpush.bf16.msra.mxu0 %v3796
          %4263 = vmatpush.bf16.msra.mxu0 %v3792
          %4264 = vmatpush.bf16.msra.mxu0 %v3788
          %4265 = vmatpush.bf16.msra.mxu0 %v3784
          %4266 = vmatmul.bf16.gmra.mxu0 %v2680
          %v4267 = vpop.f32.mrf.mxu0
          %v4268 = vadd.f32 %v4255, %v4267
          %v4269 = vpop.f32.mrf.mxu0
          %4270 = vdwg.mxu0
          %4271 = vmatpush.bf16.msra.mxu0 %v3844
          %4272 = vmatpush.bf16.msra.mxu0 %v3840
          %4273 = vmatpush.bf16.msra.mxu0 %v3836
          %4274 = vmatpush.bf16.msra.mxu0 %v3832
          %4275 = vmatpush.bf16.msra.mxu0 %v3828
          %4276 = vmatpush.bf16.msra.mxu0 %v3824
          %4277 = vmatpush.bf16.msra.mxu0 %v3820
          %4278 = vmatpush.bf16.msra.mxu0 %v3816
          %4279 = vmatmul.bf16.gmra.mxu0 %v2681
          %v4280 = vpop.f32.mrf.mxu0
          %v4281 = vadd.f32 %v4268, %v4280
          %v4282 = vpop.f32.mrf.mxu0
          %4283 = vdwg.mxu0
          %4284 = vmatpush.bf16.msra.mxu0 %v3876
          %4285 = vmatpush.bf16.msra.mxu0 %v3872
          %4286 = vmatpush.bf16.msra.mxu0 %v3868
          %4287 = vmatpush.bf16.msra.mxu0 %v3864
          %4288 = vmatpush.bf16.msra.mxu0 %v3860
          %4289 = vmatpush.bf16.msra.mxu0 %v3856
          %4290 = vmatpush.bf16.msra.mxu0 %v3852
          %4291 = vmatpush.bf16.msra.mxu0 %v3848
          %4292 = vmatmul.bf16.gmra.mxu0 %v2682
          %v4293 = vpop.f32.mrf.mxu0
          %v4294 = vadd.f32 %v4281, %v4293
          %v4295 = vpop.f32.mrf.mxu0
          %4296 = vdwg.mxu0
          %4297 = vmatpush.bf16.msra.mxu0 %v3908
          %4298 = vmatpush.bf16.msra.mxu0 %v3904
          %4299 = vmatpush.bf16.msra.mxu0 %v3900
          %4300 = vmatpush.bf16.msra.mxu0 %v3896
          %4301 = vmatpush.bf16.msra.mxu0 %v3892
          %4302 = vmatpush.bf16.msra.mxu0 %v3888
          %4303 = vmatpush.bf16.msra.mxu0 %v3884
          %4304 = vmatpush.bf16.msra.mxu0 %v3880
          %4305 = vmatmul.bf16.gmra.mxu0 %v2683
          %v4306 = vpop.f32.mrf.mxu0
          %v4307 = vadd.f32 %v4294, %v4306
          %v4308 = vpop.f32.mrf.mxu0
          %4309 = vdwg.mxu0
          %4310 = vmatpush.bf16.msra.mxu0 %v3940
          %4311 = vmatpush.bf16.msra.mxu0 %v3936
          %4312 = vmatpush.bf16.msra.mxu0 %v3932
          %4313 = vmatpush.bf16.msra.mxu0 %v3928
          %4314 = vmatpush.bf16.msra.mxu0 %v3924
          %4315 = vmatpush.bf16.msra.mxu0 %v3920
          %4316 = vmatpush.bf16.msra.mxu0 %v3916
          %4317 = vmatpush.bf16.msra.mxu0 %v3912
          %4318 = vmatmul.bf16.gmra.mxu0 %v2684
          %v4319 = vpop.f32.mrf.mxu0
          %v4320 = vadd.f32 %v4307, %v4319
          %v4321 = vpop.f32.mrf.mxu0
          %4322 = vdwg.mxu0
          %4323 = vmatpush.bf16.msra.mxu0 %v3972
          %4324 = vmatpush.bf16.msra.mxu0 %v3968
          %4325 = vmatpush.bf16.msra.mxu0 %v3964
          %4326 = vmatpush.bf16.msra.mxu0 %v3960
          %4327 = vmatpush.bf16.msra.mxu0 %v3956
          %4328 = vmatpush.bf16.msra.mxu0 %v3952
          %4329 = vmatpush.bf16.msra.mxu0 %v3948
          %4330 = vmatpush.bf16.msra.mxu0 %v3944
          %4331 = vmatmul.bf16.gmra.mxu0 %v2685
          %v4332 = vpop.f32.mrf.mxu0
          %v4333 = vadd.f32 %v4320, %v4332
          %v4334 = vpop.f32.mrf.mxu0
          %4335 = vdwg.mxu0
          %4336 = vmatpush.bf16.msra.mxu0 %v3749
          %4337 = vmatpush.bf16.msra.mxu0 %v3745
          %4338 = vmatpush.bf16.msra.mxu0 %v3741
          %4339 = vmatpush.bf16.msra.mxu0 %v3737
          %4340 = vmatpush.bf16.msra.mxu0 %v3733
          %4341 = vmatpush.bf16.msra.mxu0 %v3729
          %4342 = vmatpush.bf16.msra.mxu0 %v3725
          %4343 = vmatpush.bf16.msra.mxu0 %v3721
          %4344 = vmatmul.bf16.gmra.mxu0 %v2678
          %v4345 = vpop.f32.mrf.mxu0
          %v4346 = vadd.f32 %v2945, %v4345
          %v4347 = vpop.f32.mrf.mxu0
          %4348 = vdwg.mxu0
          %4349 = vmatpush.bf16.msra.mxu0 %v3781
          %4350 = vmatpush.bf16.msra.mxu0 %v3777
          %4351 = vmatpush.bf16.msra.mxu0 %v3773
          %4352 = vmatpush.bf16.msra.mxu0 %v3769
          %4353 = vmatpush.bf16.msra.mxu0 %v3765
          %4354 = vmatpush.bf16.msra.mxu0 %v3761
          %4355 = vmatpush.bf16.msra.mxu0 %v3757
          %4356 = vmatpush.bf16.msra.mxu0 %v3753
          %4357 = vmatmul.bf16.gmra.mxu0 %v2679
          %v4358 = vpop.f32.mrf.mxu0
          %v4359 = vadd.f32 %v4346, %v4358
          %v4360 = vpop.f32.mrf.mxu0
          %4361 = vdwg.mxu0
          %4362 = vmatpush.bf16.msra.mxu0 %v3813
          %4363 = vmatpush.bf16.msra.mxu0 %v3809
          %4364 = vmatpush.bf16.msra.mxu0 %v3805
          %4365 = vmatpush.bf16.msra.mxu0 %v3801
          %4366 = vmatpush.bf16.msra.mxu0 %v3797
          %4367 = vmatpush.bf16.msra.mxu0 %v3793
          %4368 = vmatpush.bf16.msra.mxu0 %v3789
          %4369 = vmatpush.bf16.msra.mxu0 %v3785
          %4370 = vmatmul.bf16.gmra.mxu0 %v2680
          %v4371 = vpop.f32.mrf.mxu0
          %v4372 = vadd.f32 %v4359, %v4371
          %v4373 = vpop.f32.mrf.mxu0
          %4374 = vdwg.mxu0
          %4375 = vmatpush.bf16.msra.mxu0 %v3845
          %4376 = vmatpush.bf16.msra.mxu0 %v3841
          %4377 = vmatpush.bf16.msra.mxu0 %v3837
          %4378 = vmatpush.bf16.msra.mxu0 %v3833
          %4379 = vmatpush.bf16.msra.mxu0 %v3829
          %4380 = vmatpush.bf16.msra.mxu0 %v3825
          %4381 = vmatpush.bf16.msra.mxu0 %v3821
          %4382 = vmatpush.bf16.msra.mxu0 %v3817
          %4383 = vmatmul.bf16.gmra.mxu0 %v2681
          %v4384 = vpop.f32.mrf.mxu0
          %v4385 = vadd.f32 %v4372, %v4384
          %v4386 = vpop.f32.mrf.mxu0
          %4387 = vdwg.mxu0
          %4388 = vmatpush.bf16.msra.mxu0 %v3877
          %4389 = vmatpush.bf16.msra.mxu0 %v3873
          %4390 = vmatpush.bf16.msra.mxu0 %v3869
          %4391 = vmatpush.bf16.msra.mxu0 %v3865
          %4392 = vmatpush.bf16.msra.mxu0 %v3861
          %4393 = vmatpush.bf16.msra.mxu0 %v3857
          %4394 = vmatpush.bf16.msra.mxu0 %v3853
          %4395 = vmatpush.bf16.msra.mxu0 %v3849
          %4396 = vmatmul.bf16.gmra.mxu0 %v2682
          %v4397 = vpop.f32.mrf.mxu0
          %v4398 = vadd.f32 %v4385, %v4397
          %v4399 = vpop.f32.mrf.mxu0
          %4400 = vdwg.mxu0
          %4401 = vmatpush.bf16.msra.mxu0 %v3909
          %4402 = vmatpush.bf16.msra.mxu0 %v3905
          %4403 = vmatpush.bf16.msra.mxu0 %v3901
          %4404 = vmatpush.bf16.msra.mxu0 %v3897
          %4405 = vmatpush.bf16.msra.mxu0 %v3893
          %4406 = vmatpush.bf16.msra.mxu0 %v3889
          %4407 = vmatpush.bf16.msra.mxu0 %v3885
          %4408 = vmatpush.bf16.msra.mxu0 %v3881
          %4409 = vmatmul.bf16.gmra.mxu0 %v2683
          %v4410 = vpop.f32.mrf.mxu0
          %v4411 = vadd.f32 %v4398, %v4410
          %v4412 = vpop.f32.mrf.mxu0
          %4413 = vdwg.mxu0
          %4414 = vmatpush.bf16.msra.mxu0 %v3941
          %4415 = vmatpush.bf16.msra.mxu0 %v3937
          %4416 = vmatpush.bf16.msra.mxu0 %v3933
          %4417 = vmatpush.bf16.msra.mxu0 %v3929
          %4418 = vmatpush.bf16.msra.mxu0 %v3925
          %4419 = vmatpush.bf16.msra.mxu0 %v3921
          %4420 = vmatpush.bf16.msra.mxu0 %v3917
          %4421 = vmatpush.bf16.msra.mxu0 %v3913
          %4422 = vmatmul.bf16.gmra.mxu0 %v2684
          %v4423 = vpop.f32.mrf.mxu0
          %v4424 = vadd.f32 %v4411, %v4423
          %v4425 = vpop.f32.mrf.mxu0
          %4426 = vdwg.mxu0
          %4427 = vmatpush.bf16.msra.mxu0 %v3973
          %4428 = vmatpush.bf16.msra.mxu0 %v3969
          %4429 = vmatpush.bf16.msra.mxu0 %v3965
          %4430 = vmatpush.bf16.msra.mxu0 %v3961
          %4431 = vmatpush.bf16.msra.mxu0 %v3957
          %4432 = vmatpush.bf16.msra.mxu0 %v3953
          %4433 = vmatpush.bf16.msra.mxu0 %v3949
          %4434 = vmatpush.bf16.msra.mxu0 %v3945
          %4435 = vmatmul.bf16.gmra.mxu0 %v2685
          %v4436 = vpop.f32.mrf.mxu0
          %v4437 = vadd.f32 %v4424, %v4436
          %v4438 = vpop.f32.mrf.mxu0
          %4439 = vdwg.mxu0
          %4440 = vmatpush.bf16.msra.mxu0 %v3750
          %4441 = vmatpush.bf16.msra.mxu0 %v3746
          %4442 = vmatpush.bf16.msra.mxu0 %v3742
          %4443 = vmatpush.bf16.msra.mxu0 %v3738
          %4444 = vmatpush.bf16.msra.mxu0 %v3734
          %4445 = vmatpush.bf16.msra.mxu0 %v3730
          %4446 = vmatpush.bf16.msra.mxu0 %v3726
          %4447 = vmatpush.bf16.msra.mxu0 %v3722
          %4448 = vmatmul.bf16.gmra.mxu0 %v2678
          %v4449 = vpop.f32.mrf.mxu0
          %v4450 = vadd.f32 %v2946, %v4449
          %v4451 = vpop.f32.mrf.mxu0
          %4452 = vdwg.mxu0
          %4453 = vmatpush.bf16.msra.mxu0 %v3782
          %4454 = vmatpush.bf16.msra.mxu0 %v3778
          %4455 = vmatpush.bf16.msra.mxu0 %v3774
          %4456 = vmatpush.bf16.msra.mxu0 %v3770
          %4457 = vmatpush.bf16.msra.mxu0 %v3766
          %4458 = vmatpush.bf16.msra.mxu0 %v3762
          %4459 = vmatpush.bf16.msra.mxu0 %v3758
          %4460 = vmatpush.bf16.msra.mxu0 %v3754
          %4461 = vmatmul.bf16.gmra.mxu0 %v2679
          %v4462 = vpop.f32.mrf.mxu0
          %v4463 = vadd.f32 %v4450, %v4462
          %v4464 = vpop.f32.mrf.mxu0
          %4465 = vdwg.mxu0
          %4466 = vmatpush.bf16.msra.mxu0 %v3814
          %4467 = vmatpush.bf16.msra.mxu0 %v3810
          %4468 = vmatpush.bf16.msra.mxu0 %v3806
          %4469 = vmatpush.bf16.msra.mxu0 %v3802
          %4470 = vmatpush.bf16.msra.mxu0 %v3798
          %4471 = vmatpush.bf16.msra.mxu0 %v3794
          %4472 = vmatpush.bf16.msra.mxu0 %v3790
          %4473 = vmatpush.bf16.msra.mxu0 %v3786
          %4474 = vmatmul.bf16.gmra.mxu0 %v2680
          %v4475 = vpop.f32.mrf.mxu0
          %v4476 = vadd.f32 %v4463, %v4475
          %v4477 = vpop.f32.mrf.mxu0
          %4478 = vdwg.mxu0
          %4479 = vmatpush.bf16.msra.mxu0 %v3846
          %4480 = vmatpush.bf16.msra.mxu0 %v3842
          %4481 = vmatpush.bf16.msra.mxu0 %v3838
          %4482 = vmatpush.bf16.msra.mxu0 %v3834
          %4483 = vmatpush.bf16.msra.mxu0 %v3830
          %4484 = vmatpush.bf16.msra.mxu0 %v3826
          %4485 = vmatpush.bf16.msra.mxu0 %v3822
          %4486 = vmatpush.bf16.msra.mxu0 %v3818
          %4487 = vmatmul.bf16.gmra.mxu0 %v2681
          %v4488 = vpop.f32.mrf.mxu0
          %v4489 = vadd.f32 %v4476, %v4488
          %v4490 = vpop.f32.mrf.mxu0
          %4491 = vdwg.mxu0
          %4492 = vmatpush.bf16.msra.mxu0 %v3878
          %4493 = vmatpush.bf16.msra.mxu0 %v3874
          %4494 = vmatpush.bf16.msra.mxu0 %v3870
          %4495 = vmatpush.bf16.msra.mxu0 %v3866
          %4496 = vmatpush.bf16.msra.mxu0 %v3862
          %4497 = vmatpush.bf16.msra.mxu0 %v3858
          %4498 = vmatpush.bf16.msra.mxu0 %v3854
          %4499 = vmatpush.bf16.msra.mxu0 %v3850
          %4500 = vmatmul.bf16.gmra.mxu0 %v2682
          %v4501 = vpop.f32.mrf.mxu0
          %v4502 = vadd.f32 %v4489, %v4501
          %v4503 = vpop.f32.mrf.mxu0
          %4504 = vdwg.mxu0
          %4505 = vmatpush.bf16.msra.mxu0 %v3910
          %4506 = vmatpush.bf16.msra.mxu0 %v3906
          %4507 = vmatpush.bf16.msra.mxu0 %v3902
          %4508 = vmatpush.bf16.msra.mxu0 %v3898
          %4509 = vmatpush.bf16.msra.mxu0 %v3894
          %4510 = vmatpush.bf16.msra.mxu0 %v3890
          %4511 = vmatpush.bf16.msra.mxu0 %v3886
          %4512 = vmatpush.bf16.msra.mxu0 %v3882
          %4513 = vmatmul.bf16.gmra.mxu0 %v2683
          %v4514 = vpop.f32.mrf.mxu0
          %v4515 = vadd.f32 %v4502, %v4514
          %v4516 = vpop.f32.mrf.mxu0
          %4517 = vdwg.mxu0
          %4518 = vmatpush.bf16.msra.mxu0 %v3942
          %4519 = vmatpush.bf16.msra.mxu0 %v3938
          %4520 = vmatpush.bf16.msra.mxu0 %v3934
          %4521 = vmatpush.bf16.msra.mxu0 %v3930
          %4522 = vmatpush.bf16.msra.mxu0 %v3926
          %4523 = vmatpush.bf16.msra.mxu0 %v3922
          %4524 = vmatpush.bf16.msra.mxu0 %v3918
          %4525 = vmatpush.bf16.msra.mxu0 %v3914
          %4526 = vmatmul.bf16.gmra.mxu0 %v2684
          %v4527 = vpop.f32.mrf.mxu0
          %v4528 = vadd.f32 %v4515, %v4527
          %v4529 = vpop.f32.mrf.mxu0
          %4530 = vdwg.mxu0
          %4531 = vmatpush.bf16.msra.mxu0 %v3974
          %4532 = vmatpush.bf16.msra.mxu0 %v3970
          %4533 = vmatpush.bf16.msra.mxu0 %v3966
          %4534 = vmatpush.bf16.msra.mxu0 %v3962
          %4535 = vmatpush.bf16.msra.mxu0 %v3958
          %4536 = vmatpush.bf16.msra.mxu0 %v3954
          %4537 = vmatpush.bf16.msra.mxu0 %v3950
          %4538 = vmatpush.bf16.msra.mxu0 %v3946
          %4539 = vmatmul.bf16.gmra.mxu0 %v2685
          %v4540 = vpop.f32.mrf.mxu0
          %v4541 = vadd.f32 %v4528, %v4540
          %v4542 = vpop.f32.mrf.mxu0
          %4543 = vdwg.mxu0
          %4544 = vmatpush.bf16.msra.mxu0 %v3751
          %4545 = vmatpush.bf16.msra.mxu0 %v3747
          %4546 = vmatpush.bf16.msra.mxu0 %v3743
          %4547 = vmatpush.bf16.msra.mxu0 %v3739
          %4548 = vmatpush.bf16.msra.mxu0 %v3735
          %4549 = vmatpush.bf16.msra.mxu0 %v3731
          %4550 = vmatpush.bf16.msra.mxu0 %v3727
          %4551 = vmatpush.bf16.msra.mxu0 %v3723
          %4552 = vmatmul.bf16.gmra.mxu0 %v2678
          %v4553 = vpop.f32.mrf.mxu0
          %v4554 = vadd.f32 %v2947, %v4553
          %v4555 = vpop.f32.mrf.mxu0
          %4556 = vdwg.mxu0
          %4557 = vmatpush.bf16.msra.mxu0 %v3783
          %4558 = vmatpush.bf16.msra.mxu0 %v3779
          %4559 = vmatpush.bf16.msra.mxu0 %v3775
          %4560 = vmatpush.bf16.msra.mxu0 %v3771
          %4561 = vmatpush.bf16.msra.mxu0 %v3767
          %4562 = vmatpush.bf16.msra.mxu0 %v3763
          %4563 = vmatpush.bf16.msra.mxu0 %v3759
          %4564 = vmatpush.bf16.msra.mxu0 %v3755
          %4565 = vmatmul.bf16.gmra.mxu0 %v2679
          %v4566 = vpop.f32.mrf.mxu0
          %v4567 = vadd.f32 %v4554, %v4566
          %v4568 = vpop.f32.mrf.mxu0
          %4569 = vdwg.mxu0
          %4570 = vmatpush.bf16.msra.mxu0 %v3815
          %4571 = vmatpush.bf16.msra.mxu0 %v3811
          %4572 = vmatpush.bf16.msra.mxu0 %v3807
          %4573 = vmatpush.bf16.msra.mxu0 %v3803
          %4574 = vmatpush.bf16.msra.mxu0 %v3799
          %4575 = vmatpush.bf16.msra.mxu0 %v3795
          %4576 = vmatpush.bf16.msra.mxu0 %v3791
          %4577 = vmatpush.bf16.msra.mxu0 %v3787
          %4578 = vmatmul.bf16.gmra.mxu0 %v2680
          %v4579 = vpop.f32.mrf.mxu0
          %v4580 = vadd.f32 %v4567, %v4579
          %v4581 = vpop.f32.mrf.mxu0
          %4582 = vdwg.mxu0
          %4583 = vmatpush.bf16.msra.mxu0 %v3847
          %4584 = vmatpush.bf16.msra.mxu0 %v3843
          %4585 = vmatpush.bf16.msra.mxu0 %v3839
          %4586 = vmatpush.bf16.msra.mxu0 %v3835
          %4587 = vmatpush.bf16.msra.mxu0 %v3831
          %4588 = vmatpush.bf16.msra.mxu0 %v3827
          %4589 = vmatpush.bf16.msra.mxu0 %v3823
          %4590 = vmatpush.bf16.msra.mxu0 %v3819
          %4591 = vmatmul.bf16.gmra.mxu0 %v2681
          %v4592 = vpop.f32.mrf.mxu0
          %v4593 = vadd.f32 %v4580, %v4592
          %v4594 = vpop.f32.mrf.mxu0
          %4595 = vdwg.mxu0
          %4596 = vmatpush.bf16.msra.mxu0 %v3879
          %4597 = vmatpush.bf16.msra.mxu0 %v3875
          %4598 = vmatpush.bf16.msra.mxu0 %v3871
          %4599 = vmatpush.bf16.msra.mxu0 %v3867
          %4600 = vmatpush.bf16.msra.mxu0 %v3863
          %4601 = vmatpush.bf16.msra.mxu0 %v3859
          %4602 = vmatpush.bf16.msra.mxu0 %v3855
          %4603 = vmatpush.bf16.msra.mxu0 %v3851
          %4604 = vmatmul.bf16.gmra.mxu0 %v2682
          %v4605 = vpop.f32.mrf.mxu0
          %v4606 = vadd.f32 %v4593, %v4605
          %v4607 = vpop.f32.mrf.mxu0
          %4608 = vdwg.mxu0
          %4609 = vmatpush.bf16.msra.mxu0 %v3911
          %4610 = vmatpush.bf16.msra.mxu0 %v3907
          %4611 = vmatpush.bf16.msra.mxu0 %v3903
          %4612 = vmatpush.bf16.msra.mxu0 %v3899
          %4613 = vmatpush.bf16.msra.mxu0 %v3895
          %4614 = vmatpush.bf16.msra.mxu0 %v3891
          %4615 = vmatpush.bf16.msra.mxu0 %v3887
          %4616 = vmatpush.bf16.msra.mxu0 %v3883
          %4617 = vmatmul.bf16.gmra.mxu0 %v2683
          %v4618 = vpop.f32.mrf.mxu0
          %v4619 = vadd.f32 %v4606, %v4618
          %v4620 = vpop.f32.mrf.mxu0
          %4621 = vdwg.mxu0
          %4622 = vmatpush.bf16.msra.mxu0 %v3943
          %4623 = vmatpush.bf16.msra.mxu0 %v3939
          %4624 = vmatpush.bf16.msra.mxu0 %v3935
          %4625 = vmatpush.bf16.msra.mxu0 %v3931
          %4626 = vmatpush.bf16.msra.mxu0 %v3927
          %4627 = vmatpush.bf16.msra.mxu0 %v3923
          %4628 = vmatpush.bf16.msra.mxu0 %v3919
          %4629 = vmatpush.bf16.msra.mxu0 %v3915
          %4630 = vmatmul.bf16.gmra.mxu0 %v2684
          %v4631 = vpop.f32.mrf.mxu0
          %v4632 = vadd.f32 %v4619, %v4631
          %v4633 = vpop.f32.mrf.mxu0
          %4634 = vdwg.mxu0
          %4635 = vmatpush.bf16.msra.mxu0 %v3975
          %4636 = vmatpush.bf16.msra.mxu0 %v3971
          %4637 = vmatpush.bf16.msra.mxu0 %v3967
          %4638 = vmatpush.bf16.msra.mxu0 %v3963
          %4639 = vmatpush.bf16.msra.mxu0 %v3959
          %4640 = vmatpush.bf16.msra.mxu0 %v3955
          %4641 = vmatpush.bf16.msra.mxu0 %v3951
          %4642 = vmatpush.bf16.msra.mxu0 %v3947
          %4643 = vmatmul.bf16.gmra.mxu0 %v2685
          %v4644 = vpop.f32.mrf.mxu0
          %v4645 = vadd.f32 %v4632, %v4644
          %v4646 = vpop.f32.mrf.mxu0
          %4647 = vdwg.mxu0
          %v4648 = vtanh.pop %v4333
          %v4649 = vtanh.pop %v4437
          %v4650 = vtanh.pop %v4541
          %v4651 = vtanh.pop %v4645
          %v4652 = vld [vmem:[#allocation16] sm:$0xf]
          %v4653 = vld [vmem:[#allocation3] sm:$0x1]
          %4655 = vset.pattern.permute.xlu0 0
          %4656 = vperm.xlu0 %4655, %v4653
          %v4657 = vpop.permute.xlu0 %4656
          %v4659 = vperm.slane %v4657, 0
          %v4661 = vperm.slane %v4652, 0
          %v4662 = vperm.slane %v4652, 1
          %v4663 = vperm.slane %v4652, 2
          %v4664 = vperm.slane %v4652, 3
          %4669 = vmatpush.xpose.msra.mxu0 0.0
          %4670 = vmatpush.xpose.msra.mxu0 0.0
          %4671 = vmatpush.xpose.msra.mxu0 0.0
          %4672 = vmatpush.xpose.msra.mxu0 0.0
          %4673 = vmatpush.xpose.msra.mxu0 0.0
          %4674 = vmatpush.xpose.msra.mxu0 0.0
          %4675 = vmatpush.xpose.msra.mxu0 0.0
          %4676 = vmatpush.xpose.msra.mxu0 0.0
          %4677 = vmatpush.xpose.msra.mxu0 0.0
          %4678 = vmatpush.xpose.msra.mxu0 0.0
          %4679 = vmatpush.xpose.msra.mxu0 0.0
          %4680 = vmatpush.xpose.msra.mxu0 0.0
          %4681 = vmatpush.xpose.msra.mxu0 0.0
          %4682 = vmatpush.xpose.msra.mxu0 0.0
          %4683 = vmatpush.xpose.msra.mxu0 0.0
          %4684 = vmatpush.xpose.msra.mxu0 %v4648
          %4685 = vmatmul.f32.gmra.mxu0 %v4661
          %v4686 = vpop.f32.mrf.mxu0
          %v4687 = vadd.f32 %v4659, %v4686
          %4688 = vdwg.mxu0
          %4689 = vmatpush.xpose.msra.mxu0 0.0
          %4690 = vmatpush.xpose.msra.mxu0 0.0
          %4691 = vmatpush.xpose.msra.mxu0 0.0
          %4692 = vmatpush.xpose.msra.mxu0 0.0
          %4693 = vmatpush.xpose.msra.mxu0 0.0
          %4694 = vmatpush.xpose.msra.mxu0 0.0
          %4695 = vmatpush.xpose.msra.mxu0 0.0
          %4696 = vmatpush.xpose.msra.mxu0 0.0
          %4697 = vmatpush.xpose.msra.mxu0 0.0
          %4698 = vmatpush.xpose.msra.mxu0 0.0
          %4699 = vmatpush.xpose.msra.mxu0 0.0
          %4700 = vmatpush.xpose.msra.mxu0 0.0
          %4701 = vmatpush.xpose.msra.mxu0 0.0
          %4702 = vmatpush.xpose.msra.mxu0 0.0
          %4703 = vmatpush.xpose.msra.mxu0 0.0
          %4704 = vmatpush.xpose.msra.mxu0 %v4649
          %4705 = vmatmul.f32.gmra.mxu0 %v4662
          %v4706 = vpop.f32.mrf.mxu0
          %v4707 = vadd.f32 %v4687, %v4706
          %4708 = vdwg.mxu0
          %4709 = vmatpush.xpose.msra.mxu0 0.0
          %4710 = vmatpush.xpose.msra.mxu0 0.0
          %4711 = vmatpush.xpose.msra.mxu0 0.0
          %4712 = vmatpush.xpose.msra.mxu0 0.0
          %4713 = vmatpush.xpose.msra.mxu0 0.0
          %4714 = vmatpush.xpose.msra.mxu0 0.0
          %4715 = vmatpush.xpose.msra.mxu0 0.0
          %4716 = vmatpush.xpose.msra.mxu0 0.0
          %4717 = vmatpush.xpose.msra.mxu0 0.0
          %4718 = vmatpush.xpose.msra.mxu0 0.0
          %4719 = vmatpush.xpose.msra.mxu0 0.0
          %4720 = vmatpush.xpose.msra.mxu0 0.0
          %4721 = vmatpush.xpose.msra.mxu0 0.0
          %4722 = vmatpush.xpose.msra.mxu0 0.0
          %4723 = vmatpush.xpose.msra.mxu0 0.0
          %4724 = vmatpush.xpose.msra.mxu0 %v4650
          %4725 = vmatmul.f32.gmra.mxu0 %v4663
          %v4726 = vpop.f32.mrf.mxu0
          %v4727 = vadd.f32 %v4707, %v4726
          %4728 = vdwg.mxu0
          %4729 = vmatpush.xpose.msra.mxu0 0.0
          %4730 = vmatpush.xpose.msra.mxu0 0.0
          %4731 = vmatpush.xpose.msra.mxu0 0.0
          %4732 = vmatpush.xpose.msra.mxu0 0.0
          %4733 = vmatpush.xpose.msra.mxu0 0.0
          %4734 = vmatpush.xpose.msra.mxu0 0.0
          %4735 = vmatpush.xpose.msra.mxu0 0.0
          %4736 = vmatpush.xpose.msra.mxu0 0.0
          %4737 = vmatpush.xpose.msra.mxu0 0.0
          %4738 = vmatpush.xpose.msra.mxu0 0.0
          %4739 = vmatpush.xpose.msra.mxu0 0.0
          %4740 = vmatpush.xpose.msra.mxu0 0.0
          %4741 = vmatpush.xpose.msra.mxu0 0.0
          %4742 = vmatpush.xpose.msra.mxu0 0.0
          %4743 = vmatpush.xpose.msra.mxu0 0.0
          %4744 = vmatpush.xpose.msra.mxu0 %v4651
          %4745 = vmatmul.f32.gmra.mxu0 %v4664
          %v4746 = vpop.f32.mrf.mxu0
          %v4747 = vadd.f32 %v4727, %v4746
          %4748 = vdwg.mxu0
          %vm4749 = vcmask 57344
          %v4750 = vsel %vm4749, %v4747, -inf
          %4751 = vmax.xlane.f32.xlu0 %v4750
          %v4752 = vpop.xlane.xlu0 %4751
          %v4753 = vsub.f32 %v4747, %v4752
          %v4754 = vmul.f32 %v4753, 1.442695
          %v4755 = vpow.pop %v4754
          %v4756 = vsel %vm4749, %v4755, 0.0
          %4757 = vadd.xlane.f32.xlu0 %v4756
          %v4758 = vpop.xlane.xlu0 %4757
          %v4759 = vrcp.pop %v4758
          %v4760 = vmul.f32 %v4758, %v4759
          %v4761 = vsub.f32 1.0, %v4760
          %v4762 = vmul.f32 %v4759, %v4761
          %v4763 = vadd.f32 %v4759, %v4762
          %vm4764 = vweird.f32 %v4758
          %vm4765 = vweird.f32 %v4759
          %vm4766 = vmor %vm4764, %vm4765
          %v4767 = vsel %vm4766, %v4759, %v4763
          %v4768 = vand.u32 2147483647, %v4758
          %vm4769 = vcmp.eq.f32.partialorder %v4768, 8.507059e+37
          %v4770 = vand.u32 %v4758, 2147483648
          %v4771 = vor.u32 1.1754944e-38, %v4770
          %v4772 = vsel %vm4769, %v4771, %v4767
          %v4773 = vmul.f32 %v4755, %v4772
          %vm4774 = vcmask 64512
          %v4776 = vsel %vm4774, %v4773, 0
          %4778 = vmatpush.msra.mxu0 0.0
          %4779 = vmatpush.msra.mxu0 0.0
          %4780 = vmatpush.msra.mxu0 0.0
          %4781 = vmatpush.msra.mxu0 0.0
          %4782 = vmatpush.msra.mxu0 0.0
          %4783 = vmatpush.msra.mxu0 0.0
          %4784 = vmatpush.msra.mxu0 0.0
          %4785 = vmatpush.msra.mxu0 0.0
          %4786 = vmatpush.msra.mxu0 0.0
          %4787 = vmatpush.msra.mxu0 0.0
          %4788 = vmatpush.msra.mxu0 0.0
          %4789 = vmatpush.msra.mxu0 0.0
          %4790 = vmatpush.msra.mxu0 0.0
          %4791 = vmatpush.msra.mxu0 0.0
          %4792 = vmatpush.msra.mxu0 0.0
          %4793 = vmatpush.msra.mxu0 %v2670
          %4794 = vmatmul.f32.gmra.mxu0 %v4776
          %v4795 = vpop.f32.mrf.mxu0
          %v4796 = vadd.f32 0.0, %v4795
          %4797 = vdwg.mxu0
          %4798 = vmatpush.msra.mxu0 0.0
          %4799 = vmatpush.msra.mxu0 0.0
          %4800 = vmatpush.msra.mxu0 0.0
          %4801 = vmatpush.msra.mxu0 0.0
          %4802 = vmatpush.msra.mxu0 0.0
          %4803 = vmatpush.msra.mxu0 0.0
          %4804 = vmatpush.msra.mxu0 0.0
          %4805 = vmatpush.msra.mxu0 0.0
          %4806 = vmatpush.msra.mxu0 0.0
          %4807 = vmatpush.msra.mxu0 0.0
          %4808 = vmatpush.msra.mxu0 0.0
          %4809 = vmatpush.msra.mxu0 0.0
          %4810 = vmatpush.msra.mxu0 0.0
          %4811 = vmatpush.msra.mxu0 0.0
          %4812 = vmatpush.msra.mxu0 0.0
          %4813 = vmatpush.msra.mxu0 %v2671
          %4814 = vmatmul.f32.gmra.mxu0 %v4776
          %v4815 = vpop.f32.mrf.mxu0
          %v4816 = vadd.f32 0.0, %v4815
          %4817 = vdwg.mxu0
          %4818 = vmatpush.msra.mxu0 0.0
          %4819 = vmatpush.msra.mxu0 0.0
          %4820 = vmatpush.msra.mxu0 0.0
          %4821 = vmatpush.msra.mxu0 0.0
          %4822 = vmatpush.msra.mxu0 0.0
          %4823 = vmatpush.msra.mxu0 0.0
          %4824 = vmatpush.msra.mxu0 0.0
          %4825 = vmatpush.msra.mxu0 0.0
          %4826 = vmatpush.msra.mxu0 0.0
          %4827 = vmatpush.msra.mxu0 0.0
          %4828 = vmatpush.msra.mxu0 0.0
          %4829 = vmatpush.msra.mxu0 0.0
          %4830 = vmatpush.msra.mxu0 0.0
          %4831 = vmatpush.msra.mxu0 0.0
          %4832 = vmatpush.msra.mxu0 0.0
          %4833 = vmatpush.msra.mxu0 %v2672
          %4834 = vmatmul.f32.gmra.mxu0 %v4776
          %v4835 = vpop.f32.mrf.mxu0
          %v4836 = vadd.f32 0.0, %v4835
          %4837 = vdwg.mxu0
          %4838 = vmatpush.msra.mxu0 0.0
          %4839 = vmatpush.msra.mxu0 0.0
          %4840 = vmatpush.msra.mxu0 0.0
          %4841 = vmatpush.msra.mxu0 0.0
          %4842 = vmatpush.msra.mxu0 0.0
          %4843 = vmatpush.msra.mxu0 0.0
          %4844 = vmatpush.msra.mxu0 0.0
          %4845 = vmatpush.msra.mxu0 0.0
          %4846 = vmatpush.msra.mxu0 0.0
          %4847 = vmatpush.msra.mxu0 0.0
          %4848 = vmatpush.msra.mxu0 0.0
          %4849 = vmatpush.msra.mxu0 0.0
          %4850 = vmatpush.msra.mxu0 0.0
          %4851 = vmatpush.msra.mxu0 0.0
          %4852 = vmatpush.msra.mxu0 0.0
          %4853 = vmatpush.msra.mxu0 %v2673
          %4854 = vmatmul.f32.gmra.mxu0 %v4776
          %v4855 = vpop.f32.mrf.mxu0
          %v4856 = vadd.f32 0.0, %v4855
          %4857 = vdwg.mxu0
          %4858 = vmatpush.msra.mxu0 0.0
          %4859 = vmatpush.msra.mxu0 0.0
          %4860 = vmatpush.msra.mxu0 0.0
          %4861 = vmatpush.msra.mxu0 0.0
          %4862 = vmatpush.msra.mxu0 0.0
          %4863 = vmatpush.msra.mxu0 0.0
          %4864 = vmatpush.msra.mxu0 0.0
          %4865 = vmatpush.msra.mxu0 0.0
          %4866 = vmatpush.msra.mxu0 0.0
          %4867 = vmatpush.msra.mxu0 0.0
          %4868 = vmatpush.msra.mxu0 0.0
          %4869 = vmatpush.msra.mxu0 0.0
          %4870 = vmatpush.msra.mxu0 0.0
          %4871 = vmatpush.msra.mxu0 0.0
          %4872 = vmatpush.msra.mxu0 0.0
          %4873 = vmatpush.msra.mxu0 %v2674
          %4874 = vmatmul.f32.gmra.mxu0 %v4776
          %v4875 = vpop.f32.mrf.mxu0
          %v4876 = vadd.f32 0.0, %v4875
          %4877 = vdwg.mxu0
          %4878 = vmatpush.msra.mxu0 0.0
          %4879 = vmatpush.msra.mxu0 0.0
          %4880 = vmatpush.msra.mxu0 0.0
          %4881 = vmatpush.msra.mxu0 0.0
          %4882 = vmatpush.msra.mxu0 0.0
          %4883 = vmatpush.msra.mxu0 0.0
          %4884 = vmatpush.msra.mxu0 0.0
          %4885 = vmatpush.msra.mxu0 0.0
          %4886 = vmatpush.msra.mxu0 0.0
          %4887 = vmatpush.msra.mxu0 0.0
          %4888 = vmatpush.msra.mxu0 0.0
          %4889 = vmatpush.msra.mxu0 0.0
          %4890 = vmatpush.msra.mxu0 0.0
          %4891 = vmatpush.msra.mxu0 0.0
          %4892 = vmatpush.msra.mxu0 0.0
          %4893 = vmatpush.msra.mxu0 %v2675
          %4894 = vmatmul.f32.gmra.mxu0 %v4776
          %v4895 = vpop.f32.mrf.mxu0
          %v4896 = vadd.f32 0.0, %v4895
          %4897 = vdwg.mxu0
          %4898 = vmatpush.msra.mxu0 0.0
          %4899 = vmatpush.msra.mxu0 0.0
          %4900 = vmatpush.msra.mxu0 0.0
          %4901 = vmatpush.msra.mxu0 0.0
          %4902 = vmatpush.msra.mxu0 0.0
          %4903 = vmatpush.msra.mxu0 0.0
          %4904 = vmatpush.msra.mxu0 0.0
          %4905 = vmatpush.msra.mxu0 0.0
          %4906 = vmatpush.msra.mxu0 0.0
          %4907 = vmatpush.msra.mxu0 0.0
          %4908 = vmatpush.msra.mxu0 0.0
          %4909 = vmatpush.msra.mxu0 0.0
          %4910 = vmatpush.msra.mxu0 0.0
          %4911 = vmatpush.msra.mxu0 0.0
          %4912 = vmatpush.msra.mxu0 0.0
          %4913 = vmatpush.msra.mxu0 %v2676
          %4914 = vmatmul.f32.gmra.mxu0 %v4776
          %v4915 = vpop.f32.mrf.mxu0
          %v4916 = vadd.f32 0.0, %v4915
          %4917 = vdwg.mxu0
          %4918 = vmatpush.msra.mxu0 0.0
          %4919 = vmatpush.msra.mxu0 0.0
          %4920 = vmatpush.msra.mxu0 0.0
          %4921 = vmatpush.msra.mxu0 0.0
          %4922 = vmatpush.msra.mxu0 0.0
          %4923 = vmatpush.msra.mxu0 0.0
          %4924 = vmatpush.msra.mxu0 0.0
          %4925 = vmatpush.msra.mxu0 0.0
          %4926 = vmatpush.msra.mxu0 0.0
          %4927 = vmatpush.msra.mxu0 0.0
          %4928 = vmatpush.msra.mxu0 0.0
          %4929 = vmatpush.msra.mxu0 0.0
          %4930 = vmatpush.msra.mxu0 0.0
          %4931 = vmatpush.msra.mxu0 0.0
          %4932 = vmatpush.msra.mxu0 0.0
          %4933 = vmatpush.msra.mxu0 %v2677
          %4934 = vmatmul.f32.gmra.mxu0 %v4776
          %v4935 = vpop.f32.mrf.mxu0
          %v4936 = vadd.f32 0.0, %v4935
          %4937 = vdwg.mxu0
          %v4938 = vld [vmem:[%s9] sm:$0xff]
          %v4939 = vld [vmem:[%s9 + $0x8] sm:$0xff]
          %v4940 = vld [vmem:[%s9 + $0x10] sm:$0xff]
          %v4941 = vld [vmem:[%s9 + $0x18] sm:$0xff]
          %v4942 = vld [vmem:[%s9 + $0x20] sm:$0xff]
          %v4943 = vld [vmem:[%s9 + $0x28] sm:$0xff]
          %v4944 = vld [vmem:[%s9 + $0x30] sm:$0xff]
          %v4945 = vld [vmem:[%s9 + $0x38] sm:$0xff]
          %v4946 = vld [vmem:[%s9 + $0x40] sm:$0xff]
          %v4947 = vld [vmem:[%s9 + $0x48] sm:$0xff]
          %v4948 = vld [vmem:[%s9 + $0x50] sm:$0xff]
          %v4949 = vld [vmem:[%s9 + $0x58] sm:$0xff]
          %v4950 = vld [vmem:[%s9 + $0x60] sm:$0xff]
          %v4951 = vld [vmem:[%s9 + $0x68] sm:$0xff]
          %v4952 = vld [vmem:[%s9 + $0x70] sm:$0xff]
          %v4953 = vld [vmem:[%s9 + $0x78] sm:$0xff]
          %v4954 = vld [vmem:[%s9 + $0x80] sm:$0xff]
          %v4955 = vld [vmem:[%s9 + $0x88] sm:$0xff]
          %v4956 = vld [vmem:[%s9 + $0x90] sm:$0xff]
          %v4957 = vld [vmem:[%s9 + $0x98] sm:$0xff]
          %v4958 = vld [vmem:[%s9 + $0xa0] sm:$0xff]
          %v4959 = vld [vmem:[%s9 + $0xa8] sm:$0xff]
          %v4960 = vld [vmem:[%s9 + $0xb0] sm:$0xff]
          %v4961 = vld [vmem:[%s9 + $0xb8] sm:$0xff]
          %v4962 = vld [vmem:[%s9 + $0xc0] sm:$0xff]
          %v4963 = vld [vmem:[%s9 + $0xc8] sm:$0xff]
          %v4964 = vld [vmem:[%s9 + $0xd0] sm:$0xff]
          %v4965 = vld [vmem:[%s9 + $0xd8] sm:$0xff]
          %v4966 = vld [vmem:[%s9 + $0xe0] sm:$0xff]
          %v4967 = vld [vmem:[%s9 + $0xe8] sm:$0xff]
          %v4968 = vld [vmem:[%s9 + $0xf0] sm:$0xff]
          %v4969 = vld [vmem:[%s9 + $0xf8] sm:$0xff]
          %v4970 = vld [vmem:[%s9 + $0x100] sm:$0xff]
          %v4971 = vld [vmem:[%s9 + $0x108] sm:$0xff]
          %v4972 = vld [vmem:[%s9 + $0x110] sm:$0xff]
          %v4973 = vld [vmem:[%s9 + $0x118] sm:$0xff]
          %v4974 = vld [vmem:[%s9 + $0x120] sm:$0xff]
          %v4975 = vld [vmem:[%s9 + $0x128] sm:$0xff]
          %v4976 = vld [vmem:[%s9 + $0x130] sm:$0xff]
          %v4977 = vld [vmem:[%s9 + $0x138] sm:$0xff]
          %v4978 = vld [vmem:[%s9 + $0x140] sm:$0xff]
          %v4979 = vld [vmem:[%s9 + $0x148] sm:$0xff]
          %v4980 = vld [vmem:[%s9 + $0x150] sm:$0xff]
          %v4981 = vld [vmem:[%s9 + $0x158] sm:$0xff]
          %v4982 = vld [vmem:[%s9 + $0x160] sm:$0xff]
          %v4983 = vld [vmem:[%s9 + $0x168] sm:$0xff]
          %v4984 = vld [vmem:[%s9 + $0x170] sm:$0xff]
          %v4985 = vld [vmem:[%s9 + $0x178] sm:$0xff]
          %v4986 = vld [vmem:[%s9 + $0x180] sm:$0xff]
          %v4987 = vld [vmem:[%s9 + $0x188] sm:$0xff]
          %v4988 = vld [vmem:[%s9 + $0x190] sm:$0xff]
          %v4989 = vld [vmem:[%s9 + $0x198] sm:$0xff]
          %v4990 = vld [vmem:[%s9 + $0x1a0] sm:$0xff]
          %v4991 = vld [vmem:[%s9 + $0x1a8] sm:$0xff]
          %v4992 = vld [vmem:[%s9 + $0x1b0] sm:$0xff]
          %v4993 = vld [vmem:[%s9 + $0x1b8] sm:$0xff]
          %v4994 = vld [vmem:[%s9 + $0x1c0] sm:$0xff]
          %v4995 = vld [vmem:[%s9 + $0x1c8] sm:$0xff]
          %v4996 = vld [vmem:[%s9 + $0x1d0] sm:$0xff]
          %v4997 = vld [vmem:[%s9 + $0x1d8] sm:$0xff]
          %v4998 = vld [vmem:[%s9 + $0x1e0] sm:$0xff]
          %v4999 = vld [vmem:[%s9 + $0x1e8] sm:$0xff]
          %v5000 = vld [vmem:[%s9 + $0x1f0] sm:$0xff]
          %v5001 = vld [vmem:[%s9 + $0x1f8] sm:$0xff]
          %v5002 = vld [vmem:[%s9 + $0x200] sm:$0xff]
          %v5003 = vld [vmem:[%s9 + $0x208] sm:$0xff]
          %v5004 = vld [vmem:[%s9 + $0x210] sm:$0xff]
          %v5005 = vld [vmem:[%s9 + $0x218] sm:$0xff]
          %v5006 = vld [vmem:[%s9 + $0x220] sm:$0xff]
          %v5007 = vld [vmem:[%s9 + $0x228] sm:$0xff]
          %v5008 = vld [vmem:[%s9 + $0x230] sm:$0xff]
          %v5009 = vld [vmem:[%s9 + $0x238] sm:$0xff]
          %v5010 = vld [vmem:[%s9 + $0x240] sm:$0xff]
          %v5011 = vld [vmem:[%s9 + $0x248] sm:$0xff]
          %v5012 = vld [vmem:[%s9 + $0x250] sm:$0xff]
          %v5013 = vld [vmem:[%s9 + $0x258] sm:$0xff]
          %v5014 = vld [vmem:[%s9 + $0x260] sm:$0xff]
          %v5015 = vld [vmem:[%s9 + $0x268] sm:$0xff]
          %v5016 = vld [vmem:[%s9 + $0x270] sm:$0xff]
          %v5017 = vld [vmem:[%s9 + $0x278] sm:$0xff]
          %v5018 = vld [vmem:[%s9 + $0x280] sm:$0xff]
          %v5019 = vld [vmem:[%s9 + $0x288] sm:$0xff]
          %v5020 = vld [vmem:[%s9 + $0x290] sm:$0xff]
          %v5021 = vld [vmem:[%s9 + $0x298] sm:$0xff]
          %v5022 = vld [vmem:[%s9 + $0x2a0] sm:$0xff]
          %v5023 = vld [vmem:[%s9 + $0x2a8] sm:$0xff]
          %v5024 = vld [vmem:[%s9 + $0x2b0] sm:$0xff]
          %v5025 = vld [vmem:[%s9 + $0x2b8] sm:$0xff]
          %v5026 = vld [vmem:[%s9 + $0x2c0] sm:$0xff]
          %v5027 = vld [vmem:[%s9 + $0x2c8] sm:$0xff]
          %v5028 = vld [vmem:[%s9 + $0x2d0] sm:$0xff]
          %v5029 = vld [vmem:[%s9 + $0x2d8] sm:$0xff]
          %v5030 = vld [vmem:[%s9 + $0x2e0] sm:$0xff]
          %v5031 = vld [vmem:[%s9 + $0x2e8] sm:$0xff]
          %v5032 = vld [vmem:[%s9 + $0x2f0] sm:$0xff]
          %v5033 = vld [vmem:[%s9 + $0x2f8] sm:$0xff]
          %v5034 = vld [vmem:[%s9 + $0x300] sm:$0xff]
          %v5035 = vld [vmem:[%s9 + $0x308] sm:$0xff]
          %v5036 = vld [vmem:[%s9 + $0x310] sm:$0xff]
          %v5037 = vld [vmem:[%s9 + $0x318] sm:$0xff]
          %v5038 = vld [vmem:[%s9 + $0x320] sm:$0xff]
          %v5039 = vld [vmem:[%s9 + $0x328] sm:$0xff]
          %v5040 = vld [vmem:[%s9 + $0x330] sm:$0xff]
          %v5041 = vld [vmem:[%s9 + $0x338] sm:$0xff]
          %v5042 = vld [vmem:[%s9 + $0x340] sm:$0xff]
          %v5043 = vld [vmem:[%s9 + $0x348] sm:$0xff]
          %v5044 = vld [vmem:[%s9 + $0x350] sm:$0xff]
          %v5045 = vld [vmem:[%s9 + $0x358] sm:$0xff]
          %v5046 = vld [vmem:[%s9 + $0x360] sm:$0xff]
          %v5047 = vld [vmem:[%s9 + $0x368] sm:$0xff]
          %v5048 = vld [vmem:[%s9 + $0x370] sm:$0xff]
          %v5049 = vld [vmem:[%s9 + $0x378] sm:$0xff]
          %v5050 = vld [vmem:[%s9 + $0x380] sm:$0xff]
          %v5051 = vld [vmem:[%s9 + $0x388] sm:$0xff]
          %v5052 = vld [vmem:[%s9 + $0x390] sm:$0xff]
          %v5053 = vld [vmem:[%s9 + $0x398] sm:$0xff]
          %v5054 = vld [vmem:[%s9 + $0x3a0] sm:$0xff]
          %v5055 = vld [vmem:[%s9 + $0x3a8] sm:$0xff]
          %v5056 = vld [vmem:[%s9 + $0x3b0] sm:$0xff]
          %v5057 = vld [vmem:[%s9 + $0x3b8] sm:$0xff]
          %v5058 = vld [vmem:[%s9 + $0x3c0] sm:$0xff]
          %v5059 = vld [vmem:[%s9 + $0x3c8] sm:$0xff]
          %v5060 = vld [vmem:[%s9 + $0x3d0] sm:$0xff]
          %v5061 = vld [vmem:[%s9 + $0x3d8] sm:$0xff]
          %v5062 = vld [vmem:[%s9 + $0x3e0] sm:$0xff]
          %v5063 = vld [vmem:[%s9 + $0x3e8] sm:$0xff]
          %v5064 = vld [vmem:[%s9 + $0x3f0] sm:$0xff]
          %v5065 = vld [vmem:[%s9 + $0x3f8] sm:$0xff]
          %v5066 = vld [vmem:[#allocation18] sm:$0x1]
          %5067 = vmatpush.msra.mxu0 %v4953
          %5068 = vmatpush.msra.mxu0 %v4952
          %5069 = vmatpush.msra.mxu0 %v4951
          %5070 = vmatpush.msra.mxu0 %v4950
          %5071 = vmatpush.msra.mxu0 %v4949
          %5072 = vmatpush.msra.mxu0 %v4948
          %5073 = vmatpush.msra.mxu0 %v4947
          %5074 = vmatpush.msra.mxu0 %v4946
          %5075 = vmatpush.msra.mxu0 %v4945
          %5076 = vmatpush.msra.mxu0 %v4944
          %5077 = vmatpush.msra.mxu0 %v4943
          %5078 = vmatpush.msra.mxu0 %v4942
          %5079 = vmatpush.msra.mxu0 %v4941
          %5080 = vmatpush.msra.mxu0 %v4940
          %5081 = vmatpush.msra.mxu0 %v4939
          %5082 = vmatpush.msra.mxu0 %v4938
          %5083 = vmatmul.f32.gmra.mxu0 %v4796
          %v5084 = vpop.f32.mrf.mxu0
          %v5085 = vadd.f32 %v5066, %v5084
          %5086 = vdwg.mxu0
          %5087 = vmatpush.msra.mxu0 %v4969
          %5088 = vmatpush.msra.mxu0 %v4968
          %5089 = vmatpush.msra.mxu0 %v4967
          %5090 = vmatpush.msra.mxu0 %v4966
          %5091 = vmatpush.msra.mxu0 %v4965
          %5092 = vmatpush.msra.mxu0 %v4964
          %5093 = vmatpush.msra.mxu0 %v4963
          %5094 = vmatpush.msra.mxu0 %v4962
          %5095 = vmatpush.msra.mxu0 %v4961
          %5096 = vmatpush.msra.mxu0 %v4960
          %5097 = vmatpush.msra.mxu0 %v4959
          %5098 = vmatpush.msra.mxu0 %v4958
          %5099 = vmatpush.msra.mxu0 %v4957
          %5100 = vmatpush.msra.mxu0 %v4956
          %5101 = vmatpush.msra.mxu0 %v4955
          %5102 = vmatpush.msra.mxu0 %v4954
          %5103 = vmatmul.f32.gmra.mxu0 %v4816
          %v5104 = vpop.f32.mrf.mxu0
          %v5105 = vadd.f32 %v5085, %v5104
          %5106 = vdwg.mxu0
          %5107 = vmatpush.msra.mxu0 %v4985
          %5108 = vmatpush.msra.mxu0 %v4984
          %5109 = vmatpush.msra.mxu0 %v4983
          %5110 = vmatpush.msra.mxu0 %v4982
          %5111 = vmatpush.msra.mxu0 %v4981
          %5112 = vmatpush.msra.mxu0 %v4980
          %5113 = vmatpush.msra.mxu0 %v4979
          %5114 = vmatpush.msra.mxu0 %v4978
          %5115 = vmatpush.msra.mxu0 %v4977
          %5116 = vmatpush.msra.mxu0 %v4976
          %5117 = vmatpush.msra.mxu0 %v4975
          %5118 = vmatpush.msra.mxu0 %v4974
          %5119 = vmatpush.msra.mxu0 %v4973
          %5120 = vmatpush.msra.mxu0 %v4972
          %5121 = vmatpush.msra.mxu0 %v4971
          %5122 = vmatpush.msra.mxu0 %v4970
          %5123 = vmatmul.f32.gmra.mxu0 %v4836
          %v5124 = vpop.f32.mrf.mxu0
          %v5125 = vadd.f32 %v5105, %v5124
          %5126 = vdwg.mxu0
          %5127 = vmatpush.msra.mxu0 %v5001
          %5128 = vmatpush.msra.mxu0 %v5000
          %5129 = vmatpush.msra.mxu0 %v4999
          %5130 = vmatpush.msra.mxu0 %v4998
          %5131 = vmatpush.msra.mxu0 %v4997
          %5132 = vmatpush.msra.mxu0 %v4996
          %5133 = vmatpush.msra.mxu0 %v4995
          %5134 = vmatpush.msra.mxu0 %v4994
          %5135 = vmatpush.msra.mxu0 %v4993
          %5136 = vmatpush.msra.mxu0 %v4992
          %5137 = vmatpush.msra.mxu0 %v4991
          %5138 = vmatpush.msra.mxu0 %v4990
          %5139 = vmatpush.msra.mxu0 %v4989
          %5140 = vmatpush.msra.mxu0 %v4988
          %5141 = vmatpush.msra.mxu0 %v4987
          %5142 = vmatpush.msra.mxu0 %v4986
          %5143 = vmatmul.f32.gmra.mxu0 %v4856
          %v5144 = vpop.f32.mrf.mxu0
          %v5145 = vadd.f32 %v5125, %v5144
          %5146 = vdwg.mxu0
          %5147 = vmatpush.msra.mxu0 %v5017
          %5148 = vmatpush.msra.mxu0 %v5016
          %5149 = vmatpush.msra.mxu0 %v5015
          %5150 = vmatpush.msra.mxu0 %v5014
          %5151 = vmatpush.msra.mxu0 %v5013
          %5152 = vmatpush.msra.mxu0 %v5012
          %5153 = vmatpush.msra.mxu0 %v5011
          %5154 = vmatpush.msra.mxu0 %v5010
          %5155 = vmatpush.msra.mxu0 %v5009
          %5156 = vmatpush.msra.mxu0 %v5008
          %5157 = vmatpush.msra.mxu0 %v5007
          %5158 = vmatpush.msra.mxu0 %v5006
          %5159 = vmatpush.msra.mxu0 %v5005
          %5160 = vmatpush.msra.mxu0 %v5004
          %5161 = vmatpush.msra.mxu0 %v5003
          %5162 = vmatpush.msra.mxu0 %v5002
          %5163 = vmatmul.f32.gmra.mxu0 %v4876
          %v5164 = vpop.f32.mrf.mxu0
          %v5165 = vadd.f32 %v5145, %v5164
          %5166 = vdwg.mxu0
          %5167 = vmatpush.msra.mxu0 %v5033
          %5168 = vmatpush.msra.mxu0 %v5032
          %5169 = vmatpush.msra.mxu0 %v5031
          %5170 = vmatpush.msra.mxu0 %v5030
          %5171 = vmatpush.msra.mxu0 %v5029
          %5172 = vmatpush.msra.mxu0 %v5028
          %5173 = vmatpush.msra.mxu0 %v5027
          %5174 = vmatpush.msra.mxu0 %v5026
          %5175 = vmatpush.msra.mxu0 %v5025
          %5176 = vmatpush.msra.mxu0 %v5024
          %5177 = vmatpush.msra.mxu0 %v5023
          %5178 = vmatpush.msra.mxu0 %v5022
          %5179 = vmatpush.msra.mxu0 %v5021
          %5180 = vmatpush.msra.mxu0 %v5020
          %5181 = vmatpush.msra.mxu0 %v5019
          %5182 = vmatpush.msra.mxu0 %v5018
          %5183 = vmatmul.f32.gmra.mxu0 %v4896
          %v5184 = vpop.f32.mrf.mxu0
          %v5185 = vadd.f32 %v5165, %v5184
          %5186 = vdwg.mxu0
          %5187 = vmatpush.msra.mxu0 %v5049
          %5188 = vmatpush.msra.mxu0 %v5048
          %5189 = vmatpush.msra.mxu0 %v5047
          %5190 = vmatpush.msra.mxu0 %v5046
          %5191 = vmatpush.msra.mxu0 %v5045
          %5192 = vmatpush.msra.mxu0 %v5044
          %5193 = vmatpush.msra.mxu0 %v5043
          %5194 = vmatpush.msra.mxu0 %v5042
          %5195 = vmatpush.msra.mxu0 %v5041
          %5196 = vmatpush.msra.mxu0 %v5040
          %5197 = vmatpush.msra.mxu0 %v5039
          %5198 = vmatpush.msra.mxu0 %v5038
          %5199 = vmatpush.msra.mxu0 %v5037
          %5200 = vmatpush.msra.mxu0 %v5036
          %5201 = vmatpush.msra.mxu0 %v5035
          %5202 = vmatpush.msra.mxu0 %v5034
          %5203 = vmatmul.f32.gmra.mxu0 %v4916
          %v5204 = vpop.f32.mrf.mxu0
          %v5205 = vadd.f32 %v5185, %v5204
          %5206 = vdwg.mxu0
          %5207 = vmatpush.msra.mxu0 %v5065
          %5208 = vmatpush.msra.mxu0 %v5064
          %5209 = vmatpush.msra.mxu0 %v5063
          %5210 = vmatpush.msra.mxu0 %v5062
          %5211 = vmatpush.msra.mxu0 %v5061
          %5212 = vmatpush.msra.mxu0 %v5060
          %5213 = vmatpush.msra.mxu0 %v5059
          %5214 = vmatpush.msra.mxu0 %v5058
          %5215 = vmatpush.msra.mxu0 %v5057
          %5216 = vmatpush.msra.mxu0 %v5056
          %5217 = vmatpush.msra.mxu0 %v5055
          %5218 = vmatpush.msra.mxu0 %v5054
          %5219 = vmatpush.msra.mxu0 %v5053
          %5220 = vmatpush.msra.mxu0 %v5052
          %5221 = vmatpush.msra.mxu0 %v5051
          %5222 = vmatpush.msra.mxu0 %v5050
          %5223 = vmatmul.f32.gmra.mxu0 %v4936
          %v5224 = vpop.f32.mrf.mxu0
          %v5225 = vadd.f32 %v5205, %v5224
          %5226 = vdwg.mxu0
          %vm5227 = vcmask 73728
          %5228 = vst.msk [vmem:[#allocation19] sm:$0x1] %vm5227, %v5225
          %5229 = vst.msk [vmem:[#allocation20] sm:$0x1] %vm4749, %v4773
          %5230 = vst.msk [vmem:[#allocation22] sm:$0x1] %vm4749, %v4747
        $region108: #{tpu_custom_call.1} parent=63 // pred_fallthru
          _
        // Predicated region
        $region109: #{tpu_custom_call.1} parent=63 // pred_check
          %p5231 = pneg %p297
        $region110: #{tpu_custom_call.1} parent=63 // pred_check_branch
          %5233 = sbr.rel (%p5231) target = $region112
        $region111: #{tpu_custom_call.1} parent=63 // pred_region
          %5235 = vsyncadd [#allocation6], 0
          %s5237 = sshll.u32 [#allocation19], 4
          %s5238 = int_to_ptr.vmem [resolvable:$true] %s5237
          %s5239 = sshll.u32 %s11, 4
          %s5240 = int_to_ptr.hbm [resolvable:$true] %s5239
          %5242 = dma.vmem_to_hbm [thread:$0]  %s5238, 16, %s5240, [#allocation6]
        $region112: #{tpu_custom_call.1} parent=63 // pred_fallthru
          _
        // Predicated region
        $region113: #{tpu_custom_call.1} parent=63 // pred_check
          %p5243 = pneg %p318
        $region114: #{tpu_custom_call.1} parent=63 // pred_check_branch
          %5245 = sbr.rel (%p5243) target = $region116
        $region115: #{tpu_custom_call.1} parent=63 // pred_region
          %5247 = vsyncadd [#allocation21], 0
          %s5249 = sshll.u32 [#allocation20], 4
          %s5250 = int_to_ptr.vmem [resolvable:$true] %s5249
          %s5251 = sshll.u32 %s12, 4
          %s5252 = int_to_ptr.hbm [resolvable:$true] %s5251
          %5254 = dma.vmem_to_hbm [thread:$0]  %s5250, 16, %s5252, [#allocation21]
        $region116: #{tpu_custom_call.1} parent=63 // pred_fallthru
          _
        // Predicated region
        $region117: #{tpu_custom_call.1} parent=63 // pred_check
          %p5255 = pneg %p339
        $region118: #{tpu_custom_call.1} parent=63 // pred_check_branch
          %5257 = sbr.rel (%p5255) target = $region120
        $region119: #{tpu_custom_call.1} parent=63 // pred_region
          %5259 = vsyncadd [#allocation21], 0
          %s5261 = sshll.u32 [#allocation22], 4
          %s5262 = int_to_ptr.vmem [resolvable:$true] %s5261
          %s5263 = sshll.u32 %s13, 4
          %s5264 = int_to_ptr.hbm [resolvable:$true] %s5263
          %5266 = dma.vmem_to_hbm [thread:$0]  %s5262, 16, %s5264, [#allocation21]
        $region120: #{tpu_custom_call.1} parent=63 // pred_fallthru
          _
        // Predicated region
        $region121: #{tpu_custom_call.1} parent=63 // pred_check
          %p5267 = pneg %p297
        $region122: #{tpu_custom_call.1} parent=63 // pred_check_branch
          %5269 = sbr.rel (%p5267) target = $region124
        $region123: #{tpu_custom_call.1} parent=63 // pred_region
          %5271 = dma.done [#allocation6], 16
        $region124: #{tpu_custom_call.1} parent=63 // pred_fallthru
          _
        // Predicated region
        $region125: #{tpu_custom_call.1} parent=63 // pred_check
          %p5272 = pneg %p318
        $region126: #{tpu_custom_call.1} parent=63 // pred_check_branch
          %5274 = sbr.rel (%p5272) target = $region128
        $region127: #{tpu_custom_call.1} parent=63 // pred_region
          %5276 = dma.done [#allocation21], 16
        $region128: #{tpu_custom_call.1} parent=63 // pred_fallthru
          _
        // Predicated region
        $region129: #{tpu_custom_call.1} parent=63 // pred_check
          %p5277 = pneg %p339
        $region130: #{tpu_custom_call.1} parent=63 // pred_check_branch
          %5279 = sbr.rel (%p5277) target = $region132
        $region131: #{tpu_custom_call.1} parent=63 // pred_region
          %5281 = dma.done [#allocation21], 16
        $region132: #{tpu_custom_call.1} parent=63 // pred_fallthru
          _
      $region64: #{tpu_custom_call.1} parent=5 // pred_fallthru
        _
      %p5282 = scmp.le.s32.totalorder 2, %s33
      // Predicated region
      $region133: #{tpu_custom_call.1} parent=5 // pred_check
        %p5283 = pneg %p5282
      $region134: #{tpu_custom_call.1} parent=5 // pred_check_branch
        %5285 = sbr.rel (%p5283) target = $region136
      $region135: #{tpu_custom_call.1} parent=5 // pred_region
        %s5286 = ssub.s32 %s33, 2
      $region136: #{tpu_custom_call.1} parent=5 // pred_fallthru
        _
    $region6: #{tpu_custom_call.1} parent=1 // loop_footer
      %s37 = sadd.s32 1, %s33
    $region7: #{tpu_custom_call.1} parent=1 // loop_footer_branch
      %32 = sbr.rel target = $region3
    $region8: #{tpu_custom_call.1} parent=1 // loop_exit
      _
    %5287 = vsyncpa [#allocation5], 1
    %s5288 = scalar_lea.sflag [#allocation5], 1
    %5289 = vsyncpa %s5288, 1
    %5290 = vsyncpa [#allocation8], 1
    %s5291 = scalar_lea.sflag [#allocation8], 1
    %5292 = vsyncpa %s5291, 1
    %5293 = vsyncpa [#allocation11], 1
    %s5294 = scalar_lea.sflag [#allocation11], 1
    %5295 = vsyncpa %s5294, 1
    %5296 = vsyncpa [#allocation14], 1
    %5297 = vsyncpa [#allocation17], 1
    %5298 = vsyncpa [#allocation6], 1
    %s5299 = scalar_lea.sflag [#allocation6], 1
    %5300 = vsyncpa %s5299, 1
    %5301 = vsyncpa [#allocation21], 1

</llo_original>
